<compile_context>
chip_gen: v5e
topology: v5e:2x2
jax: 0.10.0
libtpu: 0.0.40
codegen_flags: <defaults>
</compile_context>

<pallas_src>
import functools

import jax
import jax.numpy as jnp
from jax import lax
from jax.experimental import pallas as pl
from jax.experimental.pallas import tpu as pltpu


def _lstm_kernel(x_ref,                      # (Bt, T, Din)   input chunk
                 wxg_ref, whg_ref, bg_ref,   # (Din,4Dh) (Dh,4Dh) (1,4Dh)
                 wxy_ref, why_ref, by_ref,   # (Din,Dp)  (Dh,Dp)  (1,Dp)
                 out_ref,                    # (Bt, T, Dp)    output chunk
                 h_ref, c_ref,               # (Bt, Dh)       carried state
                 xg_ref, hseq_ref):          # (Bt,T,4Dh) (Bt,T,Dh) scratch
    B, T, Din = x_ref.shape
    Dh = h_ref.shape[1]
    Dp = out_ref.shape[2]
    mxu_dtype = whg_ref.dtype

    # Reset carried hidden/cell state at the start of every sequence
    # (time axis = grid axis 1, iterates innermost).
    @pl.when(pl.program_id(1) == 0)
    def _():
        h_ref[...] = jnp.zeros_like(h_ref)
        c_ref[...] = jnp.zeros_like(c_ref)

    # ---- Prologue: one wide MXU matmul for the input-path gate projection,
    # parked in VMEM scratch so the recurrence only loads one slab per step.
    xs = x_ref[...].reshape(B * T, Din)
    xg_ref[...] = (
        jnp.dot(xs, wxg_ref[...], preferred_element_type=jnp.float32)
        + bg_ref[...]
    ).reshape(B, T, 4 * Dh)

    # Loop-invariant hidden-path gate weight (single VMEM-resident copy).
    whg = whg_ref[...]

    def gate_step(xg_t, H, C):
        # Fused gate layout is [F | I | O | G].
        g = xg_t + jnp.dot(H.astype(mxu_dtype), whg,
                           preferred_element_type=jnp.float32)
        sig = jax.nn.sigmoid(g[:, :3 * Dh])          # F, I, O in one slab
        F_g = sig[:, :Dh]
        I_g = sig[:, Dh:2 * Dh]
        O_g = sig[:, 2 * Dh:]
        G_g = jnp.tanh(g[:, 3 * Dh:])
        C = C * F_g + I_g * G_g
        H = jnp.tanh(C) * O_g
        return H, C

    H = h_ref[...]
    C = c_ref[...]

    # ---- Serial recurrence: only H @ W_hh + gate math on the critical
    # path; every H_t goes straight to VMEM scratch (bounded live ranges).
    if T <= 16:
        for t in range(T):                           # full unroll, static idx
            H, C = gate_step(xg_ref[:, t, :], H, C)
            hseq_ref[:, t, :] = H
    else:
        def body(t, carry):
            H_c, C_c = carry
            xg_t = xg_ref[:, pl.ds(t, 1), :].reshape(B, 4 * Dh)
            H_c, C_c = gate_step(xg_t, H_c, C_c)
            hseq_ref[:, pl.ds(t, 1), :] = H_c[:, None, :]
            return H_c, C_c
        H, C = lax.fori_loop(0, T, body, (H, C), unroll=8)

    # Carry state to the next time chunk.
    h_ref[...] = H
    c_ref[...] = C

    # ---- Epilogue: one wide head matmul over all T steps + vectorized
    # log_softmax, then a single lane-dense slab store.
    xs = x_ref[...].reshape(B * T, Din)
    hs = hseq_ref[...].reshape(B * T, Dh).astype(mxu_dtype)
    logits = (jnp.dot(xs, wxy_ref[...], preferred_element_type=jnp.float32)
              + jnp.dot(hs, why_ref[...], preferred_element_type=jnp.float32)
              + by_ref[...])
    z = logits - jnp.max(logits, axis=-1, keepdims=True)
    logp = z - jnp.log(jnp.sum(jnp.exp(z), axis=-1, keepdims=True))
    out_ref[...] = logp.reshape(B, T, Dp).astype(out_ref.dtype)


def _round_up(x, m):
    return -(-x // m) * m


def _vmem_bytes(b_tile, t, Din, Dh, Dp, mxu_isz):
    """Rough per-chunk VMEM working-set estimate (bytes)."""
    x_blk = 2 * b_tile * t * Din * mxu_isz        # double-buffered input
    out_blk = 2 * b_tile * t * Dp * 4             # double-buffered output
    xg = b_tile * t * 4 * Dh * 4                  # gate-projection scratch
    hseq = b_tile * t * Dh * 4                    # per-step hidden scratch
    hc = 2 * b_tile * Dh * 4
    w = (Din * 4 * Dh + Dh * 4 * Dh + Din * Dp + Dh * Dp) * mxu_isz \
        + (4 * Dh + Dp) * 4
    return x_blk + out_blk + xg + hseq + hc + w


def _choose_tiles(B_pad, S, Din, Dh, Dp, mxu_isz,
                  budget=24 * 1024 * 1024):
    """Largest (batch_tile, time_chunk) whose working set fits the budget
    (sized for v7x's 64 MiB VMEM; v5e/v6e have extra headroom)."""
    s_cap = max(8, _round_up(S, 8))
    base = (512, 256, 128, 64, 32, 16, 8)
    t_cands = sorted({t for t in base if t <= s_cap} | {min(s_cap, 512)},
                     reverse=True)
    b_cands = [c for c in (256, 128, 64, 32, 16, 8) if B_pad % c == 0] or [8]
    for b_tile in b_cands:
        for t in t_cands:
            if _vmem_bytes(b_tile, t, Din, Dh, Dp, mxu_isz) <= budget:
                return b_tile, t
    return 8, 8


@functools.partial(jax.jit, static_argnames=("use_bf16",))
def lstm_forward(x_bsd, params, use_bf16=True):
    """x_bsd: (B, S, Din) float32.  Returns (B, S, Dout) log-probabilities."""
    B, S, Din = x_bsd.shape
    Dh = params["wf"].shape[1]
    Dout = params["wy"].shape[1]

    w_dtype = jnp.bfloat16 if use_bf16 else jnp.float32
    mxu_isz = 2 if use_bf16 else 4
    Dp = _round_up(Dout, 128)                 # lane-dense output slab

    # Fused gate projection (columns ordered F|I|O|G), split into input- and
    # hidden-path halves.  MXU operands in bf16; biases stay f32.
    wxg = jnp.concatenate([params["wf"][:Din], params["wi"][:Din],
                           params["wo"][:Din], params["wc"][:Din]],
                          axis=1).astype(w_dtype)
    whg = jnp.concatenate([params["wf"][Din:], params["wi"][Din:],
                           params["wo"][Din:], params["wc"][Din:]],
                          axis=1).astype(w_dtype)
    bg = jnp.concatenate([params["bf"], params["bi"],
                          params["bo"], params["bc"]], axis=1)

    # Output head padded to 128 lanes: zero weight columns and a -1e30 bias
    # on the pad lanes keep the log_softmax denominator unchanged.
    wxy = jnp.pad(params["wy"][:Din], ((0, 0), (0, Dp - Dout))).astype(w_dtype)
    why = jnp.pad(params["wy"][Din:], ((0, 0), (0, Dp - Dout))).astype(w_dtype)
    by = jnp.pad(params["by"], ((0, 0), (0, Dp - Dout)),
                 constant_values=-1e30)

    # Pad batch to the f32 sublane and time to the chosen chunk; pad rows /
    # steps compute harmless finite values and are sliced off afterwards.
    B_pad = max(8, _round_up(B, 8))
    b_tile, t_chunk = _choose_tiles(B_pad, S, Din, Dh, Dp, mxu_isz)
    S_pad = _round_up(S, t_chunk)
    x_p = jnp.pad(x_bsd, ((0, B_pad - B), (0, S_pad - S), (0, 0)))
    x_p = x_p.astype(w_dtype)

    grid = (B_pad // b_tile, S_pad // t_chunk)

    est = _vmem_bytes(b_tile, t_chunk, Din, Dh, Dp, mxu_isz)
    vmem_limit = None if est <= 12 * 1024 * 1024 else 48 * 1024 * 1024

    # Loop-invariant weights/biases: untiled, fully VMEM-resident, single
    # copy (no per-step double-buffering).
    weight_spec = pl.BlockSpec(memory_space=pltpu.MemorySpace.VMEM)

    out_padded = pl.pallas_call(
        _lstm_kernel,
        out_shape=jax.ShapeDtypeStruct((B_pad, S_pad, Dp), jnp.float32),
        grid_spec=pltpu.PrefetchScalarGridSpec(
            num_scalar_prefetch=0,
            grid=grid,
            in_specs=[
                pl.BlockSpec((b_tile, t_chunk, Din), lambda b, i: (b, i, 0)),
                weight_spec, weight_spec, weight_spec,   # wxg, whg, bg
                weight_spec, weight_spec, weight_spec,   # wxy, why, by
            ],
            out_specs=pl.BlockSpec((b_tile, t_chunk, Dp),
                                   lambda b, i: (b, i, 0)),
            scratch_shapes=[
                pltpu.VMEM((b_tile, Dh), jnp.float32),               # H carry
                pltpu.VMEM((b_tile, Dh), jnp.float32),               # C carry
                pltpu.VMEM((b_tile, t_chunk, 4 * Dh), jnp.float32),  # xg
                pltpu.VMEM((b_tile, t_chunk, Dh), jnp.float32),      # H_t seq
            ],
        ),
        compiler_params=pltpu.CompilerParams(
            dimension_semantics=("parallel", "arbitrary"),
            vmem_limit_bytes=vmem_limit),
    )(x_p, wxg, whg, bg, wxy, why, by)

    return out_padded[:B, :S, :Dout]


def init_params(key, dim_input, dim_hidden, dim_output):
    """nn.Linear-shaped params; weights stored transposed as (in, out)."""
    din_h = dim_input + dim_hidden
    ks = jax.random.split(key, 10)
    bound = 1.0 / jnp.sqrt(din_h)

    def lin(kw, kb, in_f, out_f):
        w = jax.random.uniform(kw, (in_f, out_f), jnp.float32, -bound, bound)
        b = jax.random.uniform(kb, (1, out_f), jnp.float32, -bound, bound)
        return w, b

    wf, bf = lin(ks[0], ks[1], din_h, dim_hidden)
    wi, bi = lin(ks[2], ks[3], din_h, dim_hidden)
    wc, bc = lin(ks[4], ks[5], din_h, dim_hidden)
    wo, bo = lin(ks[6], ks[7], din_h, dim_hidden)
    wy, by = lin(ks[8], ks[9], din_h, dim_output)
    return dict(wf=wf, bf=bf, wi=wi, bi=bi, wc=wc, bc=bc,
                wo=wo, bo=bo, wy=wy, by=by)


def lstm_forward_ref(x_bsd, params):
    """Pure-JAX reference mirroring the PyTorch module (for validation)."""
    B, S, Din = x_bsd.shape
    Dh = params["wf"].shape[1]
    H = jnp.zeros((B, Dh), jnp.float32)
    C = jnp.zeros((B, Dh), jnp.float32)
    outs = []
    for t in range(S):
        x_t = x_bsd[:, t, :]
        comb = jnp.concatenate([x_t, H], axis=1)
        F = jax.nn.sigmoid(comb @ params["wf"] + params["bf"])
        I = jax.nn.sigmoid(comb @ params["wi"] + params["bi"])
        G = jnp.tanh(comb @ params["wc"] + params["bc"])
        O = jax.nn.sigmoid(comb @ params["wo"] + params["bo"])
        C = C * F + I * G
        H = jnp.tanh(C) * O
        comb2 = jnp.concatenate([x_t, H], axis=1)
        logits = comb2 @ params["wy"] + params["by"]
        outs.append(jax.nn.log_softmax(logits, axis=1))
    return jnp.stack(outs, axis=1)


if __name__ == "__main__":
    # Small shapes consistent with the module: (batch, seq, dim_input).
    batch, seq = 2, 8
    dim_input, dim_hidden, dim_output = 16, 32, 16

    key = jax.random.PRNGKey(0)
    k_x, k_p = jax.random.split(key)
    x = jax.random.normal(k_x, (batch, seq, dim_input), jnp.float32)
    params = init_params(k_p, dim_input, dim_hidden, dim_output)

    ref = lstm_forward_ref(x, params)

    # Exact-dtype path (f32 MXU operands): tight check against the reference.
    out_f32 = jax.block_until_ready(lstm_forward(x, params, use_bf16=False))
    assert out_f32.shape == (batch, seq, dim_output)
    assert jnp.allclose(out_f32, ref, atol=1e-4, rtol=1e-4), "f32 mismatch"

    # Default fast path (bf16 MXU operands, f32 accumulation / gate math).
    out = jax.block_until_ready(lstm_forward(x, params))
    assert out.shape == (batch, seq, dim_output)
    assert jnp.allclose(out, ref, atol=5e-2, rtol=5e-2), "bf16 mismatch"

    print("KERNEL_OK")
</pallas_src>

<mosaic_0001>
module attributes {stable_mosaic.version = 11 : i64} {
  func.func @_lstm_kernel(%arg0: i32, %arg1: i32, %arg2: memref<8x8x16xf32, #tpu.memory_space<vmem>>, %arg3: memref<16x128xf32, #tpu.memory_space<vmem>>, %arg4: memref<32x128xf32, #tpu.memory_space<vmem>>, %arg5: memref<1x128xf32, #tpu.memory_space<vmem>>, %arg6: memref<16x128xf32, #tpu.memory_space<vmem>>, %arg7: memref<32x128xf32, #tpu.memory_space<vmem>>, %arg8: memref<1x128xf32, #tpu.memory_space<vmem>>, %arg9: memref<8x8x128xf32, #tpu.memory_space<vmem>>, %arg10: memref<8x32xf32, #tpu.memory_space<vmem>>, %arg11: memref<8x32xf32, #tpu.memory_space<vmem>>, %arg12: memref<8x8x128xf32, #tpu.memory_space<vmem>>, %arg13: memref<8x8x32xf32, #tpu.memory_space<vmem>>) attributes {dimension_semantics = [#tpu.dimension_semantics<parallel>, #tpu.dimension_semantics<arbitrary>], iteration_bounds = array<i64: 1, 1>, scalar_prefetch = 0 : i64, scratch_operands = 4 : i64, tpu.core_type = #tpu.core_type<tc>, window_params = [{transform_indices = @transform_0, window_bounds = array<i64: 8, 8, 16>}, {pipeline_mode = #tpu.pipeline_mode<synchronous>, transform_indices = @transform_1, window_bounds = array<i64: 16, 128>}, {pipeline_mode = #tpu.pipeline_mode<synchronous>, transform_indices = @transform_2, window_bounds = array<i64: 32, 128>}, {pipeline_mode = #tpu.pipeline_mode<synchronous>, transform_indices = @transform_3, window_bounds = array<i64: 1, 128>}, {pipeline_mode = #tpu.pipeline_mode<synchronous>, transform_indices = @transform_4, window_bounds = array<i64: 16, 128>}, {pipeline_mode = #tpu.pipeline_mode<synchronous>, transform_indices = @transform_5, window_bounds = array<i64: 32, 128>}, {pipeline_mode = #tpu.pipeline_mode<synchronous>, transform_indices = @transform_6, window_bounds = array<i64: 1, 128>}, {transform_indices = @transform_7, window_bounds = array<i64: 8, 8, 128>}]} {
    %c0_i32 = arith.constant 0 : i32
    %0 = arith.cmpi eq, %arg1, %c0_i32 : i32
    %1 = arith.extui %0 : i1 to i32
    %c0_i32_0 = arith.constant 0 : i32
    %2 = arith.cmpi ne, %1, %c0_i32_0 : i32
    scf.if %2 {
      %cst_96 = arith.constant 0.000000e+00 : f32
      %225 = vector.broadcast %cst_96 : f32 to vector<8x32xf32>
      %c0_97 = arith.constant 0 : index
      %c0_98 = arith.constant 0 : index
      %226 = vector.load %arg10[%c0_97, %c0_98] : memref<8x32xf32, #tpu.memory_space<vmem>>, vector<8x32xf32>
      tpu.vector_store %arg10[%c0_97, %c0_98], %225 {strides = array<i32>} : memref<8x32xf32, #tpu.memory_space<vmem>>, vector<8x32xf32>,
      %cst_99 = arith.constant 0.000000e+00 : f32
      %227 = vector.broadcast %cst_99 : f32 to vector<8x32xf32>
      %c0_100 = arith.constant 0 : index
      %c0_101 = arith.constant 0 : index
      %228 = vector.load %arg11[%c0_100, %c0_101] : memref<8x32xf32, #tpu.memory_space<vmem>>, vector<8x32xf32>
      tpu.vector_store %arg11[%c0_100, %c0_101], %227 {strides = array<i32>} : memref<8x32xf32, #tpu.memory_space<vmem>>, vector<8x32xf32>,
    } else {
    }
    %c0 = arith.constant 0 : index
    %c0_1 = arith.constant 0 : index
    %c0_2 = arith.constant 0 : index
    %3 = vector.load %arg2[%c0, %c0_1, %c0_2] : memref<8x8x16xf32, #tpu.memory_space<vmem>>, vector<8x8x16xf32>
    %4 = vector.shape_cast %3 : vector<8x8x16xf32> to vector<64x16xf32>
    %c0_3 = arith.constant 0 : index
    %c0_4 = arith.constant 0 : index
    %5 = vector.load %arg3[%c0_3, %c0_4] : memref<16x128xf32, #tpu.memory_space<vmem>>, vector<16x128xf32>
    %cst = arith.constant dense<0.000000e+00> : vector<64x128xf32>
    %6 = tpu.matmul %4, %5, %cst {dimension_numbers = #tpu.dot_dimension_numbers<[1], [0], [0], [1], [0, 0, 1, 1], [], []>} : vector<64x16xf32>, vector<16x128xf32>, vector<64x128xf32> -> vector<64x128xf32>
    %c0_5 = arith.constant 0 : index
    %c0_6 = arith.constant 0 : index
    %7 = vector.load %arg5[%c0_5, %c0_6] : memref<1x128xf32, #tpu.memory_space<vmem>>, vector<1x128xf32>
    %8 = vector.broadcast %7 : vector<1x128xf32> to vector<64x128xf32>
    %9 = arith.addf %6, %8 : vector<64x128xf32>
    %10 = vector.shape_cast %9 : vector<64x128xf32> to vector<8x8x128xf32>
    %c0_7 = arith.constant 0 : index
    %c0_8 = arith.constant 0 : index
    %c0_9 = arith.constant 0 : index
    %11 = vector.load %arg12[%c0_7, %c0_8, %c0_9] : memref<8x8x128xf32, #tpu.memory_space<vmem>>, vector<8x8x128xf32>
    tpu.vector_store %arg12[%c0_7, %c0_8, %c0_9], %10 {strides = array<i32>} : memref<8x8x128xf32, #tpu.memory_space<vmem>>, vector<8x8x128xf32>,
    %c0_10 = arith.constant 0 : index
    %c0_11 = arith.constant 0 : index
    %12 = vector.load %arg4[%c0_10, %c0_11] : memref<32x128xf32, #tpu.memory_space<vmem>>, vector<32x128xf32>
    %c0_12 = arith.constant 0 : index
    %c0_13 = arith.constant 0 : index
    %13 = vector.load %arg10[%c0_12, %c0_13] : memref<8x32xf32, #tpu.memory_space<vmem>>, vector<8x32xf32>
    %c0_14 = arith.constant 0 : index
    %c0_15 = arith.constant 0 : index
    %14 = vector.load %arg11[%c0_14, %c0_15] : memref<8x32xf32, #tpu.memory_space<vmem>>, vector<8x32xf32>
    %c0_16 = arith.constant 0 : index
    %c0_17 = arith.constant 0 : index
    %c0_18 = arith.constant 0 : index
    %15 = vector.load %arg12[%c0_16, %c0_17, %c0_18] : memref<8x8x128xf32, #tpu.memory_space<vmem>>, vector<8x1x128xf32>
    %16 = vector.shape_cast %15 : vector<8x1x128xf32> to vector<8x128xf32>
    %cst_19 = arith.constant dense<0.000000e+00> : vector<8x128xf32>
    %17 = tpu.matmul %13, %12, %cst_19 {dimension_numbers = #tpu.dot_dimension_numbers<[1], [0], [0], [1], [0, 0, 1, 1], [], []>} : vector<8x32xf32>, vector<32x128xf32>, vector<8x128xf32> -> vector<8x128xf32>
    %18 = arith.addf %16, %17 : vector<8x128xf32>
    %19 = vector.extract_strided_slice %18 {offsets = [0, 0], sizes = [8, 96], strides = [1, 1]} : vector<8x128xf32> to vector<8x96xf32>
    %20 = arith.negf %19 : vector<8x96xf32>
    %21 = math.exp %20 : vector<8x96xf32>
    %cst_20 = arith.constant 1.000000e+00 : f32
    %22 = vector.broadcast %cst_20 : f32 to vector<8x96xf32>
    %23 = arith.addf %22, %21 : vector<8x96xf32>
    %24 = arith.divf %22, %23 : vector<8x96xf32>
    %25 = vector.extract_strided_slice %24 {offsets = [0, 0], sizes = [8, 32], strides = [1, 1]} : vector<8x96xf32> to vector<8x32xf32>
    %26 = vector.extract_strided_slice %24 {offsets = [0, 32], sizes = [8, 32], strides = [1, 1]} : vector<8x96xf32> to vector<8x32xf32>
    %27 = vector.extract_strided_slice %24 {offsets = [0, 64], sizes = [8, 32], strides = [1, 1]} : vector<8x96xf32> to vector<8x32xf32>
    %28 = vector.extract_strided_slice %18 {offsets = [0, 96], sizes = [8, 32], strides = [1, 1]} : vector<8x128xf32> to vector<8x32xf32>
    %29 = math.tanh %28 : vector<8x32xf32>
    %30 = arith.mulf %14, %25 : vector<8x32xf32>
    %31 = arith.mulf %26, %29 : vector<8x32xf32>
    %32 = arith.addf %30, %31 : vector<8x32xf32>
    %33 = math.tanh %32 : vector<8x32xf32>
    %34 = arith.mulf %33, %27 : vector<8x32xf32>
    %c0_21 = arith.constant 0 : index
    %c0_22 = arith.constant 0 : index
    %c0_23 = arith.constant 0 : index
    %35 = vector.load %arg13[%c0_21, %c0_22, %c0_23] : memref<8x8x32xf32, #tpu.memory_space<vmem>>, vector<8x1x32xf32>
    %36 = vector.shape_cast %35 : vector<8x1x32xf32> to vector<8x32xf32>
    %37 = vector.shape_cast %34 : vector<8x32xf32> to vector<8x1x32xf32>
    tpu.vector_store %arg13[%c0_21, %c0_22, %c0_23], %37 {strides = array<i32>} : memref<8x8x32xf32, #tpu.memory_space<vmem>>, vector<8x1x32xf32>,
    %c0_24 = arith.constant 0 : index
    %c1 = arith.constant 1 : index
    %c0_25 = arith.constant 0 : index
    %38 = vector.load %arg12[%c0_24, %c1, %c0_25] : memref<8x8x128xf32, #tpu.memory_space<vmem>>, vector<8x1x128xf32>
    %39 = vector.shape_cast %38 : vector<8x1x128xf32> to vector<8x128xf32>
    %cst_26 = arith.constant dense<0.000000e+00> : vector<8x128xf32>
    %40 = tpu.matmul %34, %12, %cst_26 {dimension_numbers = #tpu.dot_dimension_numbers<[1], [0], [0], [1], [0, 0, 1, 1], [], []>} : vector<8x32xf32>, vector<32x128xf32>, vector<8x128xf32> -> vector<8x128xf32>
    %41 = arith.addf %39, %40 : vector<8x128xf32>
    %42 = vector.extract_strided_slice %41 {offsets = [0, 0], sizes = [8, 96], strides = [1, 1]} : vector<8x128xf32> to vector<8x96xf32>
    %43 = arith.negf %42 : vector<8x96xf32>
    %44 = math.exp %43 : vector<8x96xf32>
    %cst_27 = arith.constant 1.000000e+00 : f32
    %45 = vector.broadcast %cst_27 : f32 to vector<8x96xf32>
    %46 = arith.addf %45, %44 : vector<8x96xf32>
    %47 = arith.divf %45, %46 : vector<8x96xf32>
    %48 = vector.extract_strided_slice %47 {offsets = [0, 0], sizes = [8, 32], strides = [1, 1]} : vector<8x96xf32> to vector<8x32xf32>
    %49 = vector.extract_strided_slice %47 {offsets = [0, 32], sizes = [8, 32], strides = [1, 1]} : vector<8x96xf32> to vector<8x32xf32>
    %50 = vector.extract_strided_slice %47 {offsets = [0, 64], sizes = [8, 32], strides = [1, 1]} : vector<8x96xf32> to vector<8x32xf32>
    %51 = vector.extract_strided_slice %41 {offsets = [0, 96], sizes = [8, 32], strides = [1, 1]} : vector<8x128xf32> to vector<8x32xf32>
    %52 = math.tanh %51 : vector<8x32xf32>
    %53 = arith.mulf %32, %48 : vector<8x32xf32>
    %54 = arith.mulf %49, %52 : vector<8x32xf32>
    %55 = arith.addf %53, %54 : vector<8x32xf32>
    %56 = math.tanh %55 : vector<8x32xf32>
    %57 = arith.mulf %56, %50 : vector<8x32xf32>
    %c0_28 = arith.constant 0 : index
    %c1_29 = arith.constant 1 : index
    %c0_30 = arith.constant 0 : index
    %58 = vector.load %arg13[%c0_28, %c1_29, %c0_30] : memref<8x8x32xf32, #tpu.memory_space<vmem>>, vector<8x1x32xf32>
    %59 = vector.shape_cast %58 : vector<8x1x32xf32> to vector<8x32xf32>
    %60 = vector.shape_cast %57 : vector<8x32xf32> to vector<8x1x32xf32>
    tpu.vector_store %arg13[%c0_28, %c1_29, %c0_30], %60 {strides = array<i32>} : memref<8x8x32xf32, #tpu.memory_space<vmem>>, vector<8x1x32xf32>,
    %c0_31 = arith.constant 0 : index
    %c2 = arith.constant 2 : index
    %c0_32 = arith.constant 0 : index
    %61 = vector.load %arg12[%c0_31, %c2, %c0_32] : memref<8x8x128xf32, #tpu.memory_space<vmem>>, vector<8x1x128xf32>
    %62 = vector.shape_cast %61 : vector<8x1x128xf32> to vector<8x128xf32>
    %cst_33 = arith.constant dense<0.000000e+00> : vector<8x128xf32>
    %63 = tpu.matmul %57, %12, %cst_33 {dimension_numbers = #tpu.dot_dimension_numbers<[1], [0], [0], [1], [0, 0, 1, 1], [], []>} : vector<8x32xf32>, vector<32x128xf32>, vector<8x128xf32> -> vector<8x128xf32>
    %64 = arith.addf %62, %63 : vector<8x128xf32>
    %65 = vector.extract_strided_slice %64 {offsets = [0, 0], sizes = [8, 96], strides = [1, 1]} : vector<8x128xf32> to vector<8x96xf32>
    %66 = arith.negf %65 : vector<8x96xf32>
    %67 = math.exp %66 : vector<8x96xf32>
    %cst_34 = arith.constant 1.000000e+00 : f32
    %68 = vector.broadcast %cst_34 : f32 to vector<8x96xf32>
    %69 = arith.addf %68, %67 : vector<8x96xf32>
    %70 = arith.divf %68, %69 : vector<8x96xf32>
    %71 = vector.extract_strided_slice %70 {offsets = [0, 0], sizes = [8, 32], strides = [1, 1]} : vector<8x96xf32> to vector<8x32xf32>
    %72 = vector.extract_strided_slice %70 {offsets = [0, 32], sizes = [8, 32], strides = [1, 1]} : vector<8x96xf32> to vector<8x32xf32>
    %73 = vector.extract_strided_slice %70 {offsets = [0, 64], sizes = [8, 32], strides = [1, 1]} : vector<8x96xf32> to vector<8x32xf32>
    %74 = vector.extract_strided_slice %64 {offsets = [0, 96], sizes = [8, 32], strides = [1, 1]} : vector<8x128xf32> to vector<8x32xf32>
    %75 = math.tanh %74 : vector<8x32xf32>
    %76 = arith.mulf %55, %71 : vector<8x32xf32>
    %77 = arith.mulf %72, %75 : vector<8x32xf32>
    %78 = arith.addf %76, %77 : vector<8x32xf32>
    %79 = math.tanh %78 : vector<8x32xf32>
    %80 = arith.mulf %79, %73 : vector<8x32xf32>
    %c0_35 = arith.constant 0 : index
    %c2_36 = arith.constant 2 : index
    %c0_37 = arith.constant 0 : index
    %81 = vector.load %arg13[%c0_35, %c2_36, %c0_37] : memref<8x8x32xf32, #tpu.memory_space<vmem>>, vector<8x1x32xf32>
    %82 = vector.shape_cast %81 : vector<8x1x32xf32> to vector<8x32xf32>
    %83 = vector.shape_cast %80 : vector<8x32xf32> to vector<8x1x32xf32>
    tpu.vector_store %arg13[%c0_35, %c2_36, %c0_37], %83 {strides = array<i32>} : memref<8x8x32xf32, #tpu.memory_space<vmem>>, vector<8x1x32xf32>,
    %c0_38 = arith.constant 0 : index
    %c3 = arith.constant 3 : index
    %c0_39 = arith.constant 0 : index
    %84 = vector.load %arg12[%c0_38, %c3, %c0_39] : memref<8x8x128xf32, #tpu.memory_space<vmem>>, vector<8x1x128xf32>
    %85 = vector.shape_cast %84 : vector<8x1x128xf32> to vector<8x128xf32>
    %cst_40 = arith.constant dense<0.000000e+00> : vector<8x128xf32>
    %86 = tpu.matmul %80, %12, %cst_40 {dimension_numbers = #tpu.dot_dimension_numbers<[1], [0], [0], [1], [0, 0, 1, 1], [], []>} : vector<8x32xf32>, vector<32x128xf32>, vector<8x128xf32> -> vector<8x128xf32>
    %87 = arith.addf %85, %86 : vector<8x128xf32>
    %88 = vector.extract_strided_slice %87 {offsets = [0, 0], sizes = [8, 96], strides = [1, 1]} : vector<8x128xf32> to vector<8x96xf32>
    %89 = arith.negf %88 : vector<8x96xf32>
    %90 = math.exp %89 : vector<8x96xf32>
    %cst_41 = arith.constant 1.000000e+00 : f32
    %91 = vector.broadcast %cst_41 : f32 to vector<8x96xf32>
    %92 = arith.addf %91, %90 : vector<8x96xf32>
    %93 = arith.divf %91, %92 : vector<8x96xf32>
    %94 = vector.extract_strided_slice %93 {offsets = [0, 0], sizes = [8, 32], strides = [1, 1]} : vector<8x96xf32> to vector<8x32xf32>
    %95 = vector.extract_strided_slice %93 {offsets = [0, 32], sizes = [8, 32], strides = [1, 1]} : vector<8x96xf32> to vector<8x32xf32>
    %96 = vector.extract_strided_slice %93 {offsets = [0, 64], sizes = [8, 32], strides = [1, 1]} : vector<8x96xf32> to vector<8x32xf32>
    %97 = vector.extract_strided_slice %87 {offsets = [0, 96], sizes = [8, 32], strides = [1, 1]} : vector<8x128xf32> to vector<8x32xf32>
    %98 = math.tanh %97 : vector<8x32xf32>
    %99 = arith.mulf %78, %94 : vector<8x32xf32>
    %100 = arith.mulf %95, %98 : vector<8x32xf32>
    %101 = arith.addf %99, %100 : vector<8x32xf32>
    %102 = math.tanh %101 : vector<8x32xf32>
    %103 = arith.mulf %102, %96 : vector<8x32xf32>
    %c0_42 = arith.constant 0 : index
    %c3_43 = arith.constant 3 : index
    %c0_44 = arith.constant 0 : index
    %104 = vector.load %arg13[%c0_42, %c3_43, %c0_44] : memref<8x8x32xf32, #tpu.memory_space<vmem>>, vector<8x1x32xf32>
    %105 = vector.shape_cast %104 : vector<8x1x32xf32> to vector<8x32xf32>
    %106 = vector.shape_cast %103 : vector<8x32xf32> to vector<8x1x32xf32>
    tpu.vector_store %arg13[%c0_42, %c3_43, %c0_44], %106 {strides = array<i32>} : memref<8x8x32xf32, #tpu.memory_space<vmem>>, vector<8x1x32xf32>,
    %c0_45 = arith.constant 0 : index
    %c4 = arith.constant 4 : index
    %c0_46 = arith.constant 0 : index
    %107 = vector.load %arg12[%c0_45, %c4, %c0_46] : memref<8x8x128xf32, #tpu.memory_space<vmem>>, vector<8x1x128xf32>
    %108 = vector.shape_cast %107 : vector<8x1x128xf32> to vector<8x128xf32>
    %cst_47 = arith.constant dense<0.000000e+00> : vector<8x128xf32>
    %109 = tpu.matmul %103, %12, %cst_47 {dimension_numbers = #tpu.dot_dimension_numbers<[1], [0], [0], [1], [0, 0, 1, 1], [], []>} : vector<8x32xf32>, vector<32x128xf32>, vector<8x128xf32> -> vector<8x128xf32>
    %110 = arith.addf %108, %109 : vector<8x128xf32>
    %111 = vector.extract_strided_slice %110 {offsets = [0, 0], sizes = [8, 96], strides = [1, 1]} : vector<8x128xf32> to vector<8x96xf32>
    %112 = arith.negf %111 : vector<8x96xf32>
    %113 = math.exp %112 : vector<8x96xf32>
    %cst_48 = arith.constant 1.000000e+00 : f32
    %114 = vector.broadcast %cst_48 : f32 to vector<8x96xf32>
    %115 = arith.addf %114, %113 : vector<8x96xf32>
    %116 = arith.divf %114, %115 : vector<8x96xf32>
    %117 = vector.extract_strided_slice %116 {offsets = [0, 0], sizes = [8, 32], strides = [1, 1]} : vector<8x96xf32> to vector<8x32xf32>
    %118 = vector.extract_strided_slice %116 {offsets = [0, 32], sizes = [8, 32], strides = [1, 1]} : vector<8x96xf32> to vector<8x32xf32>
    %119 = vector.extract_strided_slice %116 {offsets = [0, 64], sizes = [8, 32], strides = [1, 1]} : vector<8x96xf32> to vector<8x32xf32>
    %120 = vector.extract_strided_slice %110 {offsets = [0, 96], sizes = [8, 32], strides = [1, 1]} : vector<8x128xf32> to vector<8x32xf32>
    %121 = math.tanh %120 : vector<8x32xf32>
    %122 = arith.mulf %101, %117 : vector<8x32xf32>
    %123 = arith.mulf %118, %121 : vector<8x32xf32>
    %124 = arith.addf %122, %123 : vector<8x32xf32>
    %125 = math.tanh %124 : vector<8x32xf32>
    %126 = arith.mulf %125, %119 : vector<8x32xf32>
    %c0_49 = arith.constant 0 : index
    %c4_50 = arith.constant 4 : index
    %c0_51 = arith.constant 0 : index
    %127 = vector.load %arg13[%c0_49, %c4_50, %c0_51] : memref<8x8x32xf32, #tpu.memory_space<vmem>>, vector<8x1x32xf32>
    %128 = vector.shape_cast %127 : vector<8x1x32xf32> to vector<8x32xf32>
    %129 = vector.shape_cast %126 : vector<8x32xf32> to vector<8x1x32xf32>
    tpu.vector_store %arg13[%c0_49, %c4_50, %c0_51], %129 {strides = array<i32>} : memref<8x8x32xf32, #tpu.memory_space<vmem>>, vector<8x1x32xf32>,
    %c0_52 = arith.constant 0 : index
    %c5 = arith.constant 5 : index
    %c0_53 = arith.constant 0 : index
    %130 = vector.load %arg12[%c0_52, %c5, %c0_53] : memref<8x8x128xf32, #tpu.memory_space<vmem>>, vector<8x1x128xf32>
    %131 = vector.shape_cast %130 : vector<8x1x128xf32> to vector<8x128xf32>
    %cst_54 = arith.constant dense<0.000000e+00> : vector<8x128xf32>
    %132 = tpu.matmul %126, %12, %cst_54 {dimension_numbers = #tpu.dot_dimension_numbers<[1], [0], [0], [1], [0, 0, 1, 1], [], []>} : vector<8x32xf32>, vector<32x128xf32>, vector<8x128xf32> -> vector<8x128xf32>
    %133 = arith.addf %131, %132 : vector<8x128xf32>
    %134 = vector.extract_strided_slice %133 {offsets = [0, 0], sizes = [8, 96], strides = [1, 1]} : vector<8x128xf32> to vector<8x96xf32>
    %135 = arith.negf %134 : vector<8x96xf32>
    %136 = math.exp %135 : vector<8x96xf32>
    %cst_55 = arith.constant 1.000000e+00 : f32
    %137 = vector.broadcast %cst_55 : f32 to vector<8x96xf32>
    %138 = arith.addf %137, %136 : vector<8x96xf32>
    %139 = arith.divf %137, %138 : vector<8x96xf32>
    %140 = vector.extract_strided_slice %139 {offsets = [0, 0], sizes = [8, 32], strides = [1, 1]} : vector<8x96xf32> to vector<8x32xf32>
    %141 = vector.extract_strided_slice %139 {offsets = [0, 32], sizes = [8, 32], strides = [1, 1]} : vector<8x96xf32> to vector<8x32xf32>
    %142 = vector.extract_strided_slice %139 {offsets = [0, 64], sizes = [8, 32], strides = [1, 1]} : vector<8x96xf32> to vector<8x32xf32>
    %143 = vector.extract_strided_slice %133 {offsets = [0, 96], sizes = [8, 32], strides = [1, 1]} : vector<8x128xf32> to vector<8x32xf32>
    %144 = math.tanh %143 : vector<8x32xf32>
    %145 = arith.mulf %124, %140 : vector<8x32xf32>
    %146 = arith.mulf %141, %144 : vector<8x32xf32>
    %147 = arith.addf %145, %146 : vector<8x32xf32>
    %148 = math.tanh %147 : vector<8x32xf32>
    %149 = arith.mulf %148, %142 : vector<8x32xf32>
    %c0_56 = arith.constant 0 : index
    %c5_57 = arith.constant 5 : index
    %c0_58 = arith.constant 0 : index
    %150 = vector.load %arg13[%c0_56, %c5_57, %c0_58] : memref<8x8x32xf32, #tpu.memory_space<vmem>>, vector<8x1x32xf32>
    %151 = vector.shape_cast %150 : vector<8x1x32xf32> to vector<8x32xf32>
    %152 = vector.shape_cast %149 : vector<8x32xf32> to vector<8x1x32xf32>
    tpu.vector_store %arg13[%c0_56, %c5_57, %c0_58], %152 {strides = array<i32>} : memref<8x8x32xf32, #tpu.memory_space<vmem>>, vector<8x1x32xf32>,
    %c0_59 = arith.constant 0 : index
    %c6 = arith.constant 6 : index
    %c0_60 = arith.constant 0 : index
    %153 = vector.load %arg12[%c0_59, %c6, %c0_60] : memref<8x8x128xf32, #tpu.memory_space<vmem>>, vector<8x1x128xf32>
    %154 = vector.shape_cast %153 : vector<8x1x128xf32> to vector<8x128xf32>
    %cst_61 = arith.constant dense<0.000000e+00> : vector<8x128xf32>
    %155 = tpu.matmul %149, %12, %cst_61 {dimension_numbers = #tpu.dot_dimension_numbers<[1], [0], [0], [1], [0, 0, 1, 1], [], []>} : vector<8x32xf32>, vector<32x128xf32>, vector<8x128xf32> -> vector<8x128xf32>
    %156 = arith.addf %154, %155 : vector<8x128xf32>
    %157 = vector.extract_strided_slice %156 {offsets = [0, 0], sizes = [8, 96], strides = [1, 1]} : vector<8x128xf32> to vector<8x96xf32>
    %158 = arith.negf %157 : vector<8x96xf32>
    %159 = math.exp %158 : vector<8x96xf32>
    %cst_62 = arith.constant 1.000000e+00 : f32
    %160 = vector.broadcast %cst_62 : f32 to vector<8x96xf32>
    %161 = arith.addf %160, %159 : vector<8x96xf32>
    %162 = arith.divf %160, %161 : vector<8x96xf32>
    %163 = vector.extract_strided_slice %162 {offsets = [0, 0], sizes = [8, 32], strides = [1, 1]} : vector<8x96xf32> to vector<8x32xf32>
    %164 = vector.extract_strided_slice %162 {offsets = [0, 32], sizes = [8, 32], strides = [1, 1]} : vector<8x96xf32> to vector<8x32xf32>
    %165 = vector.extract_strided_slice %162 {offsets = [0, 64], sizes = [8, 32], strides = [1, 1]} : vector<8x96xf32> to vector<8x32xf32>
    %166 = vector.extract_strided_slice %156 {offsets = [0, 96], sizes = [8, 32], strides = [1, 1]} : vector<8x128xf32> to vector<8x32xf32>
    %167 = math.tanh %166 : vector<8x32xf32>
    %168 = arith.mulf %147, %163 : vector<8x32xf32>
    %169 = arith.mulf %164, %167 : vector<8x32xf32>
    %170 = arith.addf %168, %169 : vector<8x32xf32>
    %171 = math.tanh %170 : vector<8x32xf32>
    %172 = arith.mulf %171, %165 : vector<8x32xf32>
    %c0_63 = arith.constant 0 : index
    %c6_64 = arith.constant 6 : index
    %c0_65 = arith.constant 0 : index
    %173 = vector.load %arg13[%c0_63, %c6_64, %c0_65] : memref<8x8x32xf32, #tpu.memory_space<vmem>>, vector<8x1x32xf32>
    %174 = vector.shape_cast %173 : vector<8x1x32xf32> to vector<8x32xf32>
    %175 = vector.shape_cast %172 : vector<8x32xf32> to vector<8x1x32xf32>
    tpu.vector_store %arg13[%c0_63, %c6_64, %c0_65], %175 {strides = array<i32>} : memref<8x8x32xf32, #tpu.memory_space<vmem>>, vector<8x1x32xf32>,
    %c0_66 = arith.constant 0 : index
    %c7 = arith.constant 7 : index
    %c0_67 = arith.constant 0 : index
    %176 = vector.load %arg12[%c0_66, %c7, %c0_67] : memref<8x8x128xf32, #tpu.memory_space<vmem>>, vector<8x1x128xf32>
    %177 = vector.shape_cast %176 : vector<8x1x128xf32> to vector<8x128xf32>
    %cst_68 = arith.constant dense<0.000000e+00> : vector<8x128xf32>
    %178 = tpu.matmul %172, %12, %cst_68 {dimension_numbers = #tpu.dot_dimension_numbers<[1], [0], [0], [1], [0, 0, 1, 1], [], []>} : vector<8x32xf32>, vector<32x128xf32>, vector<8x128xf32> -> vector<8x128xf32>
    %179 = arith.addf %177, %178 : vector<8x128xf32>
    %180 = vector.extract_strided_slice %179 {offsets = [0, 0], sizes = [8, 96], strides = [1, 1]} : vector<8x128xf32> to vector<8x96xf32>
    %181 = arith.negf %180 : vector<8x96xf32>
    %182 = math.exp %181 : vector<8x96xf32>
    %cst_69 = arith.constant 1.000000e+00 : f32
    %183 = vector.broadcast %cst_69 : f32 to vector<8x96xf32>
    %184 = arith.addf %183, %182 : vector<8x96xf32>
    %185 = arith.divf %183, %184 : vector<8x96xf32>
    %186 = vector.extract_strided_slice %185 {offsets = [0, 0], sizes = [8, 32], strides = [1, 1]} : vector<8x96xf32> to vector<8x32xf32>
    %187 = vector.extract_strided_slice %185 {offsets = [0, 32], sizes = [8, 32], strides = [1, 1]} : vector<8x96xf32> to vector<8x32xf32>
    %188 = vector.extract_strided_slice %185 {offsets = [0, 64], sizes = [8, 32], strides = [1, 1]} : vector<8x96xf32> to vector<8x32xf32>
    %189 = vector.extract_strided_slice %179 {offsets = [0, 96], sizes = [8, 32], strides = [1, 1]} : vector<8x128xf32> to vector<8x32xf32>
    %190 = math.tanh %189 : vector<8x32xf32>
    %191 = arith.mulf %170, %186 : vector<8x32xf32>
    %192 = arith.mulf %187, %190 : vector<8x32xf32>
    %193 = arith.addf %191, %192 : vector<8x32xf32>
    %194 = math.tanh %193 : vector<8x32xf32>
    %195 = arith.mulf %194, %188 : vector<8x32xf32>
    %c0_70 = arith.constant 0 : index
    %c7_71 = arith.constant 7 : index
    %c0_72 = arith.constant 0 : index
    %196 = vector.load %arg13[%c0_70, %c7_71, %c0_72] : memref<8x8x32xf32, #tpu.memory_space<vmem>>, vector<8x1x32xf32>
    %197 = vector.shape_cast %196 : vector<8x1x32xf32> to vector<8x32xf32>
    %198 = vector.shape_cast %195 : vector<8x32xf32> to vector<8x1x32xf32>
    tpu.vector_store %arg13[%c0_70, %c7_71, %c0_72], %198 {strides = array<i32>} : memref<8x8x32xf32, #tpu.memory_space<vmem>>, vector<8x1x32xf32>,
    %c0_73 = arith.constant 0 : index
    %c0_74 = arith.constant 0 : index
    %199 = vector.load %arg10[%c0_73, %c0_74] : memref<8x32xf32, #tpu.memory_space<vmem>>, vector<8x32xf32>
    tpu.vector_store %arg10[%c0_73, %c0_74], %195 {strides = array<i32>} : memref<8x32xf32, #tpu.memory_space<vmem>>, vector<8x32xf32>,
    %c0_75 = arith.constant 0 : index
    %c0_76 = arith.constant 0 : index
    %200 = vector.load %arg11[%c0_75, %c0_76] : memref<8x32xf32, #tpu.memory_space<vmem>>, vector<8x32xf32>
    tpu.vector_store %arg11[%c0_75, %c0_76], %193 {strides = array<i32>} : memref<8x32xf32, #tpu.memory_space<vmem>>, vector<8x32xf32>,
    %c0_77 = arith.constant 0 : index
    %c0_78 = arith.constant 0 : index
    %c0_79 = arith.constant 0 : index
    %201 = vector.load %arg2[%c0_77, %c0_78, %c0_79] : memref<8x8x16xf32, #tpu.memory_space<vmem>>, vector<8x8x16xf32>
    %202 = vector.shape_cast %201 : vector<8x8x16xf32> to vector<64x16xf32>
    %c0_80 = arith.constant 0 : index
    %c0_81 = arith.constant 0 : index
    %c0_82 = arith.constant 0 : index
    %203 = vector.load %arg13[%c0_80, %c0_81, %c0_82] : memref<8x8x32xf32, #tpu.memory_space<vmem>>, vector<8x8x32xf32>
    %204 = vector.shape_cast %203 : vector<8x8x32xf32> to vector<64x32xf32>
    %c0_83 = arith.constant 0 : index
    %c0_84 = arith.constant 0 : index
    %205 = vector.load %arg6[%c0_83, %c0_84] : memref<16x128xf32, #tpu.memory_space<vmem>>, vector<16x128xf32>
    %cst_85 = arith.constant dense<0.000000e+00> : vector<64x128xf32>
    %206 = tpu.matmul %202, %205, %cst_85 {dimension_numbers = #tpu.dot_dimension_numbers<[1], [0], [0], [1], [0, 0, 1, 1], [], []>} : vector<64x16xf32>, vector<16x128xf32>, vector<64x128xf32> -> vector<64x128xf32>
    %c0_86 = arith.constant 0 : index
    %c0_87 = arith.constant 0 : index
    %207 = vector.load %arg7[%c0_86, %c0_87] : memref<32x128xf32, #tpu.memory_space<vmem>>, vector<32x128xf32>
    %cst_88 = arith.constant dense<0.000000e+00> : vector<64x128xf32>
    %208 = tpu.matmul %204, %207, %cst_88 {dimension_numbers = #tpu.dot_dimension_numbers<[1], [0], [0], [1], [0, 0, 1, 1], [], []>} : vector<64x32xf32>, vector<32x128xf32>, vector<64x128xf32> -> vector<64x128xf32>
    %209 = arith.addf %206, %208 : vector<64x128xf32>
    %c0_89 = arith.constant 0 : index
    %c0_90 = arith.constant 0 : index
    %210 = vector.load %arg8[%c0_89, %c0_90] : memref<1x128xf32, #tpu.memory_space<vmem>>, vector<1x128xf32>
    %211 = vector.broadcast %210 : vector<1x128xf32> to vector<64x128xf32>
    %212 = arith.addf %209, %211 : vector<64x128xf32>
    %cst_91 = arith.constant dense<0xFF800000> : vector<64xf32>
    %213 = vector.multi_reduction <maximumf>, %212, %cst_91 [1] : vector<64x128xf32> to vector<64xf32>
    %214 = vector.shape_cast %213 : vector<64xf32> to vector<64x1xf32>
    %215 = vector.broadcast %214 : vector<64x1xf32> to vector<64x128xf32>
    %216 = arith.subf %212, %215 : vector<64x128xf32>
    %217 = math.exp %216 : vector<64x128xf32>
    %cst_92 = arith.constant dense<0.000000e+00> : vector<64xf32>
    %218 = vector.multi_reduction <add>, %217, %cst_92 [1] : vector<64x128xf32> to vector<64xf32>
    %219 = vector.shape_cast %218 : vector<64xf32> to vector<64x1xf32>
    %220 = math.log %219 : vector<64x1xf32>
    %221 = vector.broadcast %220 : vector<64x1xf32> to vector<64x128xf32>
    %222 = arith.subf %216, %221 : vector<64x128xf32>
    %223 = vector.shape_cast %222 : vector<64x128xf32> to vector<8x8x128xf32>
    %c0_93 = arith.constant 0 : index
    %c0_94 = arith.constant 0 : index
    %c0_95 = arith.constant 0 : index
    %224 = vector.load %arg9[%c0_93, %c0_94, %c0_95] : memref<8x8x128xf32, #tpu.memory_space<vmem>>, vector<8x8x128xf32>
    tpu.vector_store %arg9[%c0_93, %c0_94, %c0_95], %223 {strides = array<i32>} : memref<8x8x128xf32, #tpu.memory_space<vmem>>, vector<8x8x128xf32>,
    return
  }
  func.func @transform_0(%arg0: i32, %arg1: i32) -> (i32, i32, i32) {
    %c0_i32 = arith.constant 0 : i32
    %c0_i32_0 = arith.constant 0 : i32
    return %arg0, %arg1, %c0_i32 : i32, i32, i32
  }
  func.func @transform_1(%arg0: i32, %arg1: i32) -> (i32, i32) {
    %c0_i32 = arith.constant 0 : i32
    %c0_i32_0 = arith.constant 0 : i32
    %c0_i32_1 = arith.constant 0 : i32
    return %c0_i32, %c0_i32_0 : i32, i32
  }
  func.func @transform_2(%arg0: i32, %arg1: i32) -> (i32, i32) {
    %c0_i32 = arith.constant 0 : i32
    %c0_i32_0 = arith.constant 0 : i32
    %c0_i32_1 = arith.constant 0 : i32
    return %c0_i32, %c0_i32_0 : i32, i32
  }
  func.func @transform_3(%arg0: i32, %arg1: i32) -> (i32, i32) {
    %c0_i32 = arith.constant 0 : i32
    %c0_i32_0 = arith.constant 0 : i32
    %c0_i32_1 = arith.constant 0 : i32
    return %c0_i32, %c0_i32_0 : i32, i32
  }
  func.func @transform_4(%arg0: i32, %arg1: i32) -> (i32, i32) {
    %c0_i32 = arith.constant 0 : i32
    %c0_i32_0 = arith.constant 0 : i32
    %c0_i32_1 = arith.constant 0 : i32
    return %c0_i32, %c0_i32_0 : i32, i32
  }
  func.func @transform_5(%arg0: i32, %arg1: i32) -> (i32, i32) {
    %c0_i32 = arith.constant 0 : i32
    %c0_i32_0 = arith.constant 0 : i32
    %c0_i32_1 = arith.constant 0 : i32
    return %c0_i32, %c0_i32_0 : i32, i32
  }
  func.func @transform_6(%arg0: i32, %arg1: i32) -> (i32, i32) {
    %c0_i32 = arith.constant 0 : i32
    %c0_i32_0 = arith.constant 0 : i32
    %c0_i32_1 = arith.constant 0 : i32
    return %c0_i32, %c0_i32_0 : i32, i32
  }
  func.func @transform_7(%arg0: i32, %arg1: i32) -> (i32, i32, i32) {
    %c0_i32 = arith.constant 0 : i32
    %c0_i32_0 = arith.constant 0 : i32
    return %arg0, %arg1, %c0_i32 : i32, i32, i32
  }
}

</mosaic_0001>

<llo_original>
// kernel: lstm_forward.1
$region0: #{lstm_forward.1}
  #allocation0 [shape = 'u32[]', space=smem, size = 0x4, offset = 0x4, fixed_abs, tag = 'smem constant byte address 0x4 - core index']
  #allocation1 [shape = 'u32[72,128]{1,0:T(1,128)}', space=vmem, size = 0x9000, scoped, tag = 'internal scratch']
  #allocation2 [shape = 'f32[8,32]{1,0:T(8,128)}', space=vmem, size = 0x1000, scoped, tag = 'scratch operand']
  #allocation3 [shape = 'f32[8,32]{1,0:T(8,128)}', space=vmem, size = 0x1000, scoped, tag = 'scratch operand']
  #allocation4 [shape = 'f32[8,8,128]{2,1,0:T(8,128)}', space=vmem, size = 0x8000, scoped, tag = 'scratch operand']
  #allocation5 [shape = 'f32[8,8,32]{2,1,0:T(8,128)}', space=vmem, size = 0x8000, scoped, tag = 'scratch operand']
  %s0 = inlined_call_operand.vmem [shape: f32[8,8,16], index: 0, kind: input, shape index: {}]
  %s1 = inlined_call_operand.vmem [shape: f32[16,128], index: 1, kind: input, shape index: {}]
  %s2 = inlined_call_operand.vmem [shape: f32[32,128], index: 2, kind: input, shape index: {}]
  %s3 = inlined_call_operand.vmem [shape: f32[1,128], index: 3, kind: input, shape index: {}]
  %s4 = inlined_call_operand.vmem [shape: f32[16,128], index: 4, kind: input, shape index: {}]
  %s5 = inlined_call_operand.vmem [shape: f32[32,128], index: 5, kind: input, shape index: {}]
  %s6 = inlined_call_operand.vmem [shape: f32[1,128], index: 6, kind: input, shape index: {}]
  %s7 = inlined_call_operand.vmem [shape: f32[8,8,128], index: 7, kind: output, shape index: {}]
  %s8 = sld [smem:[#allocation0]]
  $region42: #{lstm_forward.1} parent=0
    _
  %s10 = ssub.s32 1, %s8
  %s11 = scalar_select 0, %s10, %s8
  // Predicated region
  $region2: #{lstm_forward.1} parent=0 // pred_check
    _
  $region3: #{lstm_forward.1} parent=0 // pred_check_branch
    %13 = sbr.rel (0) target = $region5
  $region4: #{lstm_forward.1} parent=0 // pred_region
    _
  $region5: #{lstm_forward.1} parent=0 // pred_fallthru
    _
  // Predicated region
  $region6: #{lstm_forward.1} parent=0 // pred_check
    _
  $region7: #{lstm_forward.1} parent=0 // pred_check_branch
    %15 = sbr.rel (0) target = $region9
  $region8: #{lstm_forward.1} parent=0 // pred_region
    _
  $region9: #{lstm_forward.1} parent=0 // pred_fallthru
    _
  // Predicated region
  $region10: #{lstm_forward.1} parent=0 // pred_check
    _
  $region11: #{lstm_forward.1} parent=0 // pred_check_branch
    %17 = sbr.rel (0) target = $region13
  $region12: #{lstm_forward.1} parent=0 // pred_region
    _
  $region13: #{lstm_forward.1} parent=0 // pred_fallthru
    _
  // Predicated region
  $region14: #{lstm_forward.1} parent=0 // pred_check
    _
  $region15: #{lstm_forward.1} parent=0 // pred_check_branch
    %19 = sbr.rel (0) target = $region17
  $region16: #{lstm_forward.1} parent=0 // pred_region
    _
  $region17: #{lstm_forward.1} parent=0 // pred_fallthru
    _
  // Predicated region
  $region18: #{lstm_forward.1} parent=0 // pred_check
    _
  $region19: #{lstm_forward.1} parent=0 // pred_check_branch
    %21 = sbr.rel (0) target = $region21
  $region20: #{lstm_forward.1} parent=0 // pred_region
    _
  $region21: #{lstm_forward.1} parent=0 // pred_fallthru
    _
  // Predicated region
  $region22: #{lstm_forward.1} parent=0 // pred_check
    _
  $region23: #{lstm_forward.1} parent=0 // pred_check_branch
    %23 = sbr.rel (0) target = $region25
  $region24: #{lstm_forward.1} parent=0 // pred_region
    _
  $region25: #{lstm_forward.1} parent=0 // pred_fallthru
    _
  // Predicated region
  $region26: #{lstm_forward.1} parent=0 // pred_check
    _
  $region27: #{lstm_forward.1} parent=0 // pred_check_branch
    %25 = sbr.rel (0) target = $region29
  $region28: #{lstm_forward.1} parent=0 // pred_region
    _
  $region29: #{lstm_forward.1} parent=0 // pred_fallthru
    _
  %p26 = scmp.eq.s32.totalorder 0, 0
  // Predicated region
  $region30: #{lstm_forward.1} parent=0 // pred_check
    %p27 = pneg %p26
  $region31: #{lstm_forward.1} parent=0 // pred_check_branch
    %29 = sbr.rel (%p27) target = $region33
  $region32: #{lstm_forward.1} parent=0 // pred_region
    %vm30 = vcmask 261120
    %31 = vst.msk [vmem:[#allocation2] sm:$0xff] %vm30, 0.0
    %32 = vst.msk [vmem:[#allocation3] sm:$0xff] %vm30, 0.0
  $region33: #{lstm_forward.1} parent=0 // pred_fallthru
    _
  %v33 = vld [vmem:[%s0] sm:$0xff]
  %v34 = vld [vmem:[%s0 + $0x8] sm:$0xff]
  %v35 = vld [vmem:[%s0 + $0x10] sm:$0xff]
  %v36 = vld [vmem:[%s0 + $0x18] sm:$0xff]
  %v37 = vld [vmem:[%s0 + $0x20] sm:$0xff]
  %v38 = vld [vmem:[%s0 + $0x28] sm:$0xff]
  %v39 = vld [vmem:[%s0 + $0x30] sm:$0xff]
  %v40 = vld [vmem:[%s0 + $0x38] sm:$0xff]
  %v41 = vld [vmem:[%s1] sm:$0xff]
  %v42 = vld [vmem:[%s1 + $0x8] sm:$0xff]
  %v43 = vld [vmem:[%s3] sm:$0x1]
  %v45 = vperm.slane %v43, 0
  %vm47 = vcmask 130048
  %v49 = vsel %vm47, %v33, 0
  %v52 = vsel %vm47, %v34, 0
  %v55 = vsel %vm47, %v35, 0
  %v58 = vsel %vm47, %v36, 0
  %v61 = vsel %vm47, %v37, 0
  %v64 = vsel %vm47, %v38, 0
  %v67 = vsel %vm47, %v39, 0
  %v70 = vsel %vm47, %v40, 0
  %72 = vmatpush.msra.mxu0 0.0
  %73 = vmatpush.msra.mxu0 0.0
  %74 = vmatpush.msra.mxu0 0.0
  %75 = vmatpush.msra.mxu0 0.0
  %76 = vmatpush.msra.mxu0 0.0
  %77 = vmatpush.msra.mxu0 0.0
  %78 = vmatpush.msra.mxu0 0.0
  %79 = vmatpush.msra.mxu0 0.0
  %80 = vmatpush.msra.mxu0 0.0
  %81 = vmatpush.msra.mxu0 0.0
  %82 = vmatpush.msra.mxu0 0.0
  %83 = vmatpush.msra.mxu0 0.0
  %84 = vmatpush.msra.mxu0 0.0
  %85 = vmatpush.msra.mxu0 0.0
  %86 = vmatpush.msra.mxu0 %v42
  %87 = vmatpush.msra.mxu0 %v41
  %88 = vmatmul.f32.gmra.mxu0 %v49
  %v89 = vpop.f32.mrf.mxu0
  %v90 = vadd.f32 %v45, %v89
  %91 = vmatmul.f32.gmra.mxu0 %v52
  %v92 = vpop.f32.mrf.mxu0
  %v93 = vadd.f32 %v45, %v92
  %94 = vmatmul.f32.gmra.mxu0 %v55
  %v95 = vpop.f32.mrf.mxu0
  %v96 = vadd.f32 %v45, %v95
  %97 = vmatmul.f32.gmra.mxu0 %v58
  %v98 = vpop.f32.mrf.mxu0
  %v99 = vadd.f32 %v45, %v98
  %100 = vmatmul.f32.gmra.mxu0 %v61
  %v101 = vpop.f32.mrf.mxu0
  %v102 = vadd.f32 %v45, %v101
  %103 = vmatmul.f32.gmra.mxu0 %v64
  %v104 = vpop.f32.mrf.mxu0
  %v105 = vadd.f32 %v45, %v104
  %106 = vmatmul.f32.gmra.mxu0 %v67
  %v107 = vpop.f32.mrf.mxu0
  %v108 = vadd.f32 %v45, %v107
  %109 = vmatmul.f32.gmra.mxu0 %v70
  %v110 = vpop.f32.mrf.mxu0
  %v111 = vadd.f32 %v45, %v110
  %112 = vdwg.mxu0
  %113 = vst [vmem:[#allocation4] sm:$0xff] %v90
  %114 = vst [vmem:[#allocation4 + $0x8] sm:$0xff] %v93
  %115 = vst [vmem:[#allocation4 + $0x10] sm:$0xff] %v96
  %116 = vst [vmem:[#allocation4 + $0x18] sm:$0xff] %v99
  %117 = vst [vmem:[#allocation4 + $0x20] sm:$0xff] %v102
  %118 = vst [vmem:[#allocation4 + $0x28] sm:$0xff] %v105
  %119 = vst [vmem:[#allocation4 + $0x30] sm:$0xff] %v108
  %120 = vst [vmem:[#allocation4 + $0x38] sm:$0xff] %v111
  %v121 = vld [vmem:[%s2] sm:$0xff]
  %v122 = vld [vmem:[%s2 + $0x8] sm:$0xff]
  %v123 = vld [vmem:[%s2 + $0x10] sm:$0xff]
  %v124 = vld [vmem:[%s2 + $0x18] sm:$0xff]
  %v125 = vld [vmem:[#allocation2] sm:$0xff]
  %v126 = vld [vmem:[#allocation3] sm:$0xff]
  %v127 = vld [vmem:[#allocation4] sm:$0x1]
  %v128 = vld [vmem:[#allocation4 + $0x8] sm:$0x1]
  %v129 = vld [vmem:[#allocation4 + $0x10] sm:$0x1]
  %v130 = vld [vmem:[#allocation4 + $0x18] sm:$0x1]
  %v131 = vld [vmem:[#allocation4 + $0x20] sm:$0x1]
  %v132 = vld [vmem:[#allocation4 + $0x28] sm:$0x1]
  %v133 = vld [vmem:[#allocation4 + $0x30] sm:$0x1]
  %v134 = vld [vmem:[#allocation4 + $0x38] sm:$0x1]
  %vm135 = vcmask 261120
  %v137 = vsel %vm135, %v125, 0
  %139 = vmatpush.msra.mxu0 0.0
  %140 = vmatpush.msra.mxu0 0.0
  %141 = vmatpush.msra.mxu0 0.0
  %142 = vmatpush.msra.mxu0 0.0
  %143 = vmatpush.msra.mxu0 0.0
  %144 = vmatpush.msra.mxu0 0.0
  %145 = vmatpush.msra.mxu0 0.0
  %146 = vmatpush.msra.mxu0 0.0
  %147 = vmatpush.msra.mxu0 0.0
  %148 = vmatpush.msra.mxu0 0.0
  %149 = vmatpush.msra.mxu0 0.0
  %150 = vmatpush.msra.mxu0 0.0
  %151 = vmatpush.msra.mxu0 %v124
  %152 = vmatpush.msra.mxu0 %v123
  %153 = vmatpush.msra.mxu0 %v122
  %154 = vmatpush.msra.mxu0 %v121
  %155 = vmatmul.f32.gmra.mxu0 %v137
  %v156 = vpop.f32.mrf.mxu0
  %v157 = vadd.f32 0.0, %v156
  %158 = vdwg.mxu0
  %v160 = vrot.slane %v157, 1
  %v161 = vrot.slane %v157, 2
  %v162 = vrot.slane %v157, 3
  %v163 = vrot.slane %v157, 4
  %v164 = vrot.slane %v157, 5
  %v165 = vrot.slane %v157, 6
  %v166 = vrot.slane %v157, 7
  %v175 = vadd.f32 %v127, %v157
  %v176 = vadd.f32 %v128, %v160
  %v177 = vadd.f32 %v129, %v161
  %v178 = vadd.f32 %v130, %v162
  %v179 = vadd.f32 %v131, %v163
  %v180 = vadd.f32 %v132, %v164
  %v181 = vadd.f32 %v133, %v165
  %v182 = vadd.f32 %v134, %v166
  %v183 = vxor.u32 %v175, 2147483648
  %v184 = vxor.u32 %v176, 2147483648
  %v185 = vxor.u32 %v177, 2147483648
  %v186 = vxor.u32 %v178, 2147483648
  %v187 = vxor.u32 %v179, 2147483648
  %v188 = vxor.u32 %v180, 2147483648
  %v189 = vxor.u32 %v181, 2147483648
  %v190 = vxor.u32 %v182, 2147483648
  %v191 = vmul.f32 %v183, 1.442695
  %v192 = vpow.pop %v191
  %v193 = vmul.f32 %v184, 1.442695
  %v194 = vpow.pop %v193
  %v195 = vmul.f32 %v185, 1.442695
  %v196 = vpow.pop %v195
  %v197 = vmul.f32 %v186, 1.442695
  %v198 = vpow.pop %v197
  %v199 = vmul.f32 %v187, 1.442695
  %v200 = vpow.pop %v199
  %v201 = vmul.f32 %v188, 1.442695
  %v202 = vpow.pop %v201
  %v203 = vmul.f32 %v189, 1.442695
  %v204 = vpow.pop %v203
  %v205 = vmul.f32 %v190, 1.442695
  %v206 = vpow.pop %v205
  %v207 = vadd.f32 %v192, 1.0
  %v208 = vadd.f32 %v194, 1.0
  %v209 = vadd.f32 %v196, 1.0
  %v210 = vadd.f32 %v198, 1.0
  %v211 = vadd.f32 %v200, 1.0
  %v212 = vadd.f32 %v202, 1.0
  %v213 = vadd.f32 %v204, 1.0
  %v214 = vadd.f32 %v206, 1.0
  %v215 = vrcp.pop %v207
  %v216 = vmul.f32 %v207, %v215
  %v217 = vsub.f32 1.0, %v216
  %v218 = vmul.f32 %v215, %v217
  %v219 = vadd.f32 %v215, %v218
  %vm220 = vweird.f32 %v207
  %vm221 = vweird.f32 %v215
  %vm222 = vmor %vm220, %vm221
  %v223 = vsel %vm222, %v215, %v219
  %v224 = vand.u32 2147483647, %v207
  %vm225 = vcmp.eq.f32.partialorder %v224, 8.507059e+37
  %v226 = vand.u32 %v207, 2147483648
  %v227 = vor.u32 1.1754944e-38, %v226
  %v228 = vsel %vm225, %v227, %v223
  %v229 = vmul.f32 1.0, %v228
  %v230 = vrcp.pop %v208
  %v231 = vmul.f32 %v208, %v230
  %v232 = vsub.f32 1.0, %v231
  %v233 = vmul.f32 %v230, %v232
  %v234 = vadd.f32 %v230, %v233
  %vm235 = vweird.f32 %v208
  %vm236 = vweird.f32 %v230
  %vm237 = vmor %vm235, %vm236
  %v238 = vsel %vm237, %v230, %v234
  %v239 = vand.u32 2147483647, %v208
  %vm240 = vcmp.eq.f32.partialorder %v239, 8.507059e+37
  %v241 = vand.u32 %v208, 2147483648
  %v242 = vor.u32 1.1754944e-38, %v241
  %v243 = vsel %vm240, %v242, %v238
  %v244 = vmul.f32 1.0, %v243
  %v245 = vrcp.pop %v209
  %v246 = vmul.f32 %v209, %v245
  %v247 = vsub.f32 1.0, %v246
  %v248 = vmul.f32 %v245, %v247
  %v249 = vadd.f32 %v245, %v248
  %vm250 = vweird.f32 %v209
  %vm251 = vweird.f32 %v245
  %vm252 = vmor %vm250, %vm251
  %v253 = vsel %vm252, %v245, %v249
  %v254 = vand.u32 2147483647, %v209
  %vm255 = vcmp.eq.f32.partialorder %v254, 8.507059e+37
  %v256 = vand.u32 %v209, 2147483648
  %v257 = vor.u32 1.1754944e-38, %v256
  %v258 = vsel %vm255, %v257, %v253
  %v259 = vmul.f32 1.0, %v258
  %v260 = vrcp.pop %v210
  %v261 = vmul.f32 %v210, %v260
  %v262 = vsub.f32 1.0, %v261
  %v263 = vmul.f32 %v260, %v262
  %v264 = vadd.f32 %v260, %v263
  %vm265 = vweird.f32 %v210
  %vm266 = vweird.f32 %v260
  %vm267 = vmor %vm265, %vm266
  %v268 = vsel %vm267, %v260, %v264
  %v269 = vand.u32 2147483647, %v210
  %vm270 = vcmp.eq.f32.partialorder %v269, 8.507059e+37
  %v271 = vand.u32 %v210, 2147483648
  %v272 = vor.u32 1.1754944e-38, %v271
  %v273 = vsel %vm270, %v272, %v268
  %v274 = vmul.f32 1.0, %v273
  %v275 = vrcp.pop %v211
  %v276 = vmul.f32 %v211, %v275
  %v277 = vsub.f32 1.0, %v276
  %v278 = vmul.f32 %v275, %v277
  %v279 = vadd.f32 %v275, %v278
  %vm280 = vweird.f32 %v211
  %vm281 = vweird.f32 %v275
  %vm282 = vmor %vm280, %vm281
  %v283 = vsel %vm282, %v275, %v279
  %v284 = vand.u32 2147483647, %v211
  %vm285 = vcmp.eq.f32.partialorder %v284, 8.507059e+37
  %v286 = vand.u32 %v211, 2147483648
  %v287 = vor.u32 1.1754944e-38, %v286
  %v288 = vsel %vm285, %v287, %v283
  %v289 = vmul.f32 1.0, %v288
  %v290 = vrcp.pop %v212
  %v291 = vmul.f32 %v212, %v290
  %v292 = vsub.f32 1.0, %v291
  %v293 = vmul.f32 %v290, %v292
  %v294 = vadd.f32 %v290, %v293
  %vm295 = vweird.f32 %v212
  %vm296 = vweird.f32 %v290
  %vm297 = vmor %vm295, %vm296
  %v298 = vsel %vm297, %v290, %v294
  %v299 = vand.u32 2147483647, %v212
  %vm300 = vcmp.eq.f32.partialorder %v299, 8.507059e+37
  %v301 = vand.u32 %v212, 2147483648
  %v302 = vor.u32 1.1754944e-38, %v301
  %v303 = vsel %vm300, %v302, %v298
  %v304 = vmul.f32 1.0, %v303
  %v305 = vrcp.pop %v213
  %v306 = vmul.f32 %v213, %v305
  %v307 = vsub.f32 1.0, %v306
  %v308 = vmul.f32 %v305, %v307
  %v309 = vadd.f32 %v305, %v308
  %vm310 = vweird.f32 %v213
  %vm311 = vweird.f32 %v305
  %vm312 = vmor %vm310, %vm311
  %v313 = vsel %vm312, %v305, %v309
  %v314 = vand.u32 2147483647, %v213
  %vm315 = vcmp.eq.f32.partialorder %v314, 8.507059e+37
  %v316 = vand.u32 %v213, 2147483648
  %v317 = vor.u32 1.1754944e-38, %v316
  %v318 = vsel %vm315, %v317, %v313
  %v319 = vmul.f32 1.0, %v318
  %v320 = vrcp.pop %v214
  %v321 = vmul.f32 %v214, %v320
  %v322 = vsub.f32 1.0, %v321
  %v323 = vmul.f32 %v320, %v322
  %v324 = vadd.f32 %v320, %v323
  %vm325 = vweird.f32 %v214
  %vm326 = vweird.f32 %v320
  %vm327 = vmor %vm325, %vm326
  %v328 = vsel %vm327, %v320, %v324
  %v329 = vand.u32 2147483647, %v214
  %vm330 = vcmp.eq.f32.partialorder %v329, 8.507059e+37
  %v331 = vand.u32 %v214, 2147483648
  %v332 = vor.u32 1.1754944e-38, %v331
  %v333 = vsel %vm330, %v332, %v328
  %v334 = vmul.f32 1.0, %v333
  %v335 = vtanh.pop %v175
  %v336 = vtanh.pop %v176
  %v337 = vtanh.pop %v177
  %v338 = vtanh.pop %v178
  %v339 = vtanh.pop %v179
  %v340 = vtanh.pop %v180
  %v341 = vtanh.pop %v181
  %v342 = vtanh.pop %v182
  %v351 = vrot.slane %v244, 7
  %vm352 = vcmask 1041409
  %v353 = vsel %vm352, %v351, %v229
  %v354 = vrot.slane %v259, 6
  %vm355 = vcmask 1042434
  %v356 = vsel %vm355, %v354, %v353
  %v357 = vrot.slane %v274, 5
  %vm358 = vcmask 1043459
  %v359 = vsel %vm358, %v357, %v356
  %v360 = vrot.slane %v289, 4
  %vm361 = vcmask 1044484
  %v362 = vsel %vm361, %v360, %v359
  %v363 = vrot.slane %v304, 3
  %vm364 = vcmask 1045509
  %v365 = vsel %vm364, %v363, %v362
  %v366 = vrot.slane %v319, 2
  %vm367 = vcmask 1046534
  %v368 = vsel %vm367, %v366, %v365
  %v369 = vrot.slane %v334, 1
  %vm370 = vcmask 1047559
  %v371 = vsel %vm370, %v369, %v368
  %v373 = vmul.f32 %v126, %v371
  %382 = vrot.lane.b32.xlu0 %v335, 64
  %v383 = vpop.permute.xlu0 %382
  %384 = vrot.lane.b32.xlu0 %v336, 64
  %v385 = vpop.permute.xlu0 %384
  %386 = vrot.lane.b32.xlu0 %v337, 64
  %v387 = vpop.permute.xlu0 %386
  %388 = vrot.lane.b32.xlu0 %v338, 64
  %v389 = vpop.permute.xlu0 %388
  %390 = vrot.lane.b32.xlu0 %v339, 64
  %v391 = vpop.permute.xlu0 %390
  %392 = vrot.lane.b32.xlu0 %v340, 64
  %v393 = vpop.permute.xlu0 %392
  %394 = vrot.lane.b32.xlu0 %v341, 64
  %v395 = vpop.permute.xlu0 %394
  %396 = vrot.lane.b32.xlu0 %v342, 64
  %v397 = vpop.permute.xlu0 %396
  %v406 = vmul.f32 %v229, %v383
  %v407 = vmul.f32 %v244, %v385
  %v408 = vmul.f32 %v259, %v387
  %v409 = vmul.f32 %v274, %v389
  %v410 = vmul.f32 %v289, %v391
  %v411 = vmul.f32 %v304, %v393
  %v412 = vmul.f32 %v319, %v395
  %v413 = vmul.f32 %v334, %v397
  %v422 = vrot.slane %v407, 7
  %v423 = vsel %vm352, %v422, %v406
  %v424 = vrot.slane %v408, 6
  %v425 = vsel %vm355, %v424, %v423
  %v426 = vrot.slane %v409, 5
  %v427 = vsel %vm358, %v426, %v425
  %v428 = vrot.slane %v410, 4
  %v429 = vsel %vm361, %v428, %v427
  %v430 = vrot.slane %v411, 3
  %v431 = vsel %vm364, %v430, %v429
  %v432 = vrot.slane %v412, 2
  %v433 = vsel %vm367, %v432, %v431
  %v434 = vrot.slane %v413, 1
  %v435 = vsel %vm370, %v434, %v433
  %436 = vrot.lane.b32.xlu0 %v435, 96
  %v437 = vpop.permute.xlu0 %436
  %v439 = vadd.f32 %v373, %v437
  %v440 = vtanh.pop %v439
  %441 = vrot.lane.b32.xlu0 %v371, 64
  %v442 = vpop.permute.xlu0 %441
  %v444 = vmul.f32 %v440, %v442
  %v446 = vrot.slane %v444, 1
  %v447 = vrot.slane %v444, 2
  %v448 = vrot.slane %v444, 3
  %v449 = vrot.slane %v444, 4
  %v450 = vrot.slane %v444, 5
  %v451 = vrot.slane %v444, 6
  %v452 = vrot.slane %v444, 7
  %vm460 = vcmask 253952
  %461 = vst.msk [vmem:[#allocation5] sm:$0x1] %vm460, %v444
  %462 = vst.msk [vmem:[#allocation5 + $0x8] sm:$0x1] %vm460, %v446
  %463 = vst.msk [vmem:[#allocation5 + $0x10] sm:$0x1] %vm460, %v447
  %464 = vst.msk [vmem:[#allocation5 + $0x18] sm:$0x1] %vm460, %v448
  %465 = vst.msk [vmem:[#allocation5 + $0x20] sm:$0x1] %vm460, %v449
  %466 = vst.msk [vmem:[#allocation5 + $0x28] sm:$0x1] %vm460, %v450
  %467 = vst.msk [vmem:[#allocation5 + $0x30] sm:$0x1] %vm460, %v451
  %468 = vst.msk [vmem:[#allocation5 + $0x38] sm:$0x1] %vm460, %v452
  %v469 = vld [vmem:[#allocation4 + $0x1] sm:$0x1]
  %v470 = vld [vmem:[#allocation4 + $0x9] sm:$0x1]
  %v471 = vld [vmem:[#allocation4 + $0x11] sm:$0x1]
  %v472 = vld [vmem:[#allocation4 + $0x19] sm:$0x1]
  %v473 = vld [vmem:[#allocation4 + $0x21] sm:$0x1]
  %v474 = vld [vmem:[#allocation4 + $0x29] sm:$0x1]
  %v475 = vld [vmem:[#allocation4 + $0x31] sm:$0x1]
  %v476 = vld [vmem:[#allocation4 + $0x39] sm:$0x1]
  %v477 = vsel %vm135, %v444, 0
  %479 = vmatpush.msra.mxu0 0.0
  %480 = vmatpush.msra.mxu0 0.0
  %481 = vmatpush.msra.mxu0 0.0
  %482 = vmatpush.msra.mxu0 0.0
  %483 = vmatpush.msra.mxu0 0.0
  %484 = vmatpush.msra.mxu0 0.0
  %485 = vmatpush.msra.mxu0 0.0
  %486 = vmatpush.msra.mxu0 0.0
  %487 = vmatpush.msra.mxu0 0.0
  %488 = vmatpush.msra.mxu0 0.0
  %489 = vmatpush.msra.mxu0 0.0
  %490 = vmatpush.msra.mxu0 0.0
  %491 = vmatpush.msra.mxu0 %v124
  %492 = vmatpush.msra.mxu0 %v123
  %493 = vmatpush.msra.mxu0 %v122
  %494 = vmatpush.msra.mxu0 %v121
  %495 = vmatmul.f32.gmra.mxu0 %v477
  %v496 = vpop.f32.mrf.mxu0
  %v497 = vadd.f32 0.0, %v496
  %498 = vdwg.mxu0
  %v500 = vrot.slane %v497, 1
  %v501 = vrot.slane %v497, 2
  %v502 = vrot.slane %v497, 3
  %v503 = vrot.slane %v497, 4
  %v504 = vrot.slane %v497, 5
  %v505 = vrot.slane %v497, 6
  %v506 = vrot.slane %v497, 7
  %v515 = vadd.f32 %v469, %v497
  %v516 = vadd.f32 %v470, %v500
  %v517 = vadd.f32 %v471, %v501
  %v518 = vadd.f32 %v472, %v502
  %v519 = vadd.f32 %v473, %v503
  %v520 = vadd.f32 %v474, %v504
  %v521 = vadd.f32 %v475, %v505
  %v522 = vadd.f32 %v476, %v506
  %v523 = vxor.u32 %v515, 2147483648
  %v524 = vxor.u32 %v516, 2147483648
  %v525 = vxor.u32 %v517, 2147483648
  %v526 = vxor.u32 %v518, 2147483648
  %v527 = vxor.u32 %v519, 2147483648
  %v528 = vxor.u32 %v520, 2147483648
  %v529 = vxor.u32 %v521, 2147483648
  %v530 = vxor.u32 %v522, 2147483648
  %v531 = vmul.f32 %v523, 1.442695
  %v532 = vpow.pop %v531
  %v533 = vmul.f32 %v524, 1.442695
  %v534 = vpow.pop %v533
  %v535 = vmul.f32 %v525, 1.442695
  %v536 = vpow.pop %v535
  %v537 = vmul.f32 %v526, 1.442695
  %v538 = vpow.pop %v537
  %v539 = vmul.f32 %v527, 1.442695
  %v540 = vpow.pop %v539
  %v541 = vmul.f32 %v528, 1.442695
  %v542 = vpow.pop %v541
  %v543 = vmul.f32 %v529, 1.442695
  %v544 = vpow.pop %v543
  %v545 = vmul.f32 %v530, 1.442695
  %v546 = vpow.pop %v545
  %v547 = vadd.f32 %v532, 1.0
  %v548 = vadd.f32 %v534, 1.0
  %v549 = vadd.f32 %v536, 1.0
  %v550 = vadd.f32 %v538, 1.0
  %v551 = vadd.f32 %v540, 1.0
  %v552 = vadd.f32 %v542, 1.0
  %v553 = vadd.f32 %v544, 1.0
  %v554 = vadd.f32 %v546, 1.0
  %v555 = vrcp.pop %v547
  %v556 = vmul.f32 %v547, %v555
  %v557 = vsub.f32 1.0, %v556
  %v558 = vmul.f32 %v555, %v557
  %v559 = vadd.f32 %v555, %v558
  %vm560 = vweird.f32 %v547
  %vm561 = vweird.f32 %v555
  %vm562 = vmor %vm560, %vm561
  %v563 = vsel %vm562, %v555, %v559
  %v564 = vand.u32 2147483647, %v547
  %vm565 = vcmp.eq.f32.partialorder %v564, 8.507059e+37
  %v566 = vand.u32 %v547, 2147483648
  %v567 = vor.u32 1.1754944e-38, %v566
  %v568 = vsel %vm565, %v567, %v563
  %v569 = vmul.f32 1.0, %v568
  %v570 = vrcp.pop %v548
  %v571 = vmul.f32 %v548, %v570
  %v572 = vsub.f32 1.0, %v571
  %v573 = vmul.f32 %v570, %v572
  %v574 = vadd.f32 %v570, %v573
  %vm575 = vweird.f32 %v548
  %vm576 = vweird.f32 %v570
  %vm577 = vmor %vm575, %vm576
  %v578 = vsel %vm577, %v570, %v574
  %v579 = vand.u32 2147483647, %v548
  %vm580 = vcmp.eq.f32.partialorder %v579, 8.507059e+37
  %v581 = vand.u32 %v548, 2147483648
  %v582 = vor.u32 1.1754944e-38, %v581
  %v583 = vsel %vm580, %v582, %v578
  %v584 = vmul.f32 1.0, %v583
  %v585 = vrcp.pop %v549
  %v586 = vmul.f32 %v549, %v585
  %v587 = vsub.f32 1.0, %v586
  %v588 = vmul.f32 %v585, %v587
  %v589 = vadd.f32 %v585, %v588
  %vm590 = vweird.f32 %v549
  %vm591 = vweird.f32 %v585
  %vm592 = vmor %vm590, %vm591
  %v593 = vsel %vm592, %v585, %v589
  %v594 = vand.u32 2147483647, %v549
  %vm595 = vcmp.eq.f32.partialorder %v594, 8.507059e+37
  %v596 = vand.u32 %v549, 2147483648
  %v597 = vor.u32 1.1754944e-38, %v596
  %v598 = vsel %vm595, %v597, %v593
  %v599 = vmul.f32 1.0, %v598
  %v600 = vrcp.pop %v550
  %v601 = vmul.f32 %v550, %v600
  %v602 = vsub.f32 1.0, %v601
  %v603 = vmul.f32 %v600, %v602
  %v604 = vadd.f32 %v600, %v603
  %vm605 = vweird.f32 %v550
  %vm606 = vweird.f32 %v600
  %vm607 = vmor %vm605, %vm606
  %v608 = vsel %vm607, %v600, %v604
  %v609 = vand.u32 2147483647, %v550
  %vm610 = vcmp.eq.f32.partialorder %v609, 8.507059e+37
  %v611 = vand.u32 %v550, 2147483648
  %v612 = vor.u32 1.1754944e-38, %v611
  %v613 = vsel %vm610, %v612, %v608
  %v614 = vmul.f32 1.0, %v613
  %v615 = vrcp.pop %v551
  %v616 = vmul.f32 %v551, %v615
  %v617 = vsub.f32 1.0, %v616
  %v618 = vmul.f32 %v615, %v617
  %v619 = vadd.f32 %v615, %v618
  %vm620 = vweird.f32 %v551
  %vm621 = vweird.f32 %v615
  %vm622 = vmor %vm620, %vm621
  %v623 = vsel %vm622, %v615, %v619
  %v624 = vand.u32 2147483647, %v551
  %vm625 = vcmp.eq.f32.partialorder %v624, 8.507059e+37
  %v626 = vand.u32 %v551, 2147483648
  %v627 = vor.u32 1.1754944e-38, %v626
  %v628 = vsel %vm625, %v627, %v623
  %v629 = vmul.f32 1.0, %v628
  %v630 = vrcp.pop %v552
  %v631 = vmul.f32 %v552, %v630
  %v632 = vsub.f32 1.0, %v631
  %v633 = vmul.f32 %v630, %v632
  %v634 = vadd.f32 %v630, %v633
  %vm635 = vweird.f32 %v552
  %vm636 = vweird.f32 %v630
  %vm637 = vmor %vm635, %vm636
  %v638 = vsel %vm637, %v630, %v634
  %v639 = vand.u32 2147483647, %v552
  %vm640 = vcmp.eq.f32.partialorder %v639, 8.507059e+37
  %v641 = vand.u32 %v552, 2147483648
  %v642 = vor.u32 1.1754944e-38, %v641
  %v643 = vsel %vm640, %v642, %v638
  %v644 = vmul.f32 1.0, %v643
  %v645 = vrcp.pop %v553
  %v646 = vmul.f32 %v553, %v645
  %v647 = vsub.f32 1.0, %v646
  %v648 = vmul.f32 %v645, %v647
  %v649 = vadd.f32 %v645, %v648
  %vm650 = vweird.f32 %v553
  %vm651 = vweird.f32 %v645
  %vm652 = vmor %vm650, %vm651
  %v653 = vsel %vm652, %v645, %v649
  %v654 = vand.u32 2147483647, %v553
  %vm655 = vcmp.eq.f32.partialorder %v654, 8.507059e+37
  %v656 = vand.u32 %v553, 2147483648
  %v657 = vor.u32 1.1754944e-38, %v656
  %v658 = vsel %vm655, %v657, %v653
  %v659 = vmul.f32 1.0, %v658
  %v660 = vrcp.pop %v554
  %v661 = vmul.f32 %v554, %v660
  %v662 = vsub.f32 1.0, %v661
  %v663 = vmul.f32 %v660, %v662
  %v664 = vadd.f32 %v660, %v663
  %vm665 = vweird.f32 %v554
  %vm666 = vweird.f32 %v660
  %vm667 = vmor %vm665, %vm666
  %v668 = vsel %vm667, %v660, %v664
  %v669 = vand.u32 2147483647, %v554
  %vm670 = vcmp.eq.f32.partialorder %v669, 8.507059e+37
  %v671 = vand.u32 %v554, 2147483648
  %v672 = vor.u32 1.1754944e-38, %v671
  %v673 = vsel %vm670, %v672, %v668
  %v674 = vmul.f32 1.0, %v673
  %v675 = vtanh.pop %v515
  %v676 = vtanh.pop %v516
  %v677 = vtanh.pop %v517
  %v678 = vtanh.pop %v518
  %v679 = vtanh.pop %v519
  %v680 = vtanh.pop %v520
  %v681 = vtanh.pop %v521
  %v682 = vtanh.pop %v522
  %v691 = vrot.slane %v584, 7
  %v692 = vsel %vm352, %v691, %v569
  %v693 = vrot.slane %v599, 6
  %v694 = vsel %vm355, %v693, %v692
  %v695 = vrot.slane %v614, 5
  %v696 = vsel %vm358, %v695, %v694
  %v697 = vrot.slane %v629, 4
  %v698 = vsel %vm361, %v697, %v696
  %v699 = vrot.slane %v644, 3
  %v700 = vsel %vm364, %v699, %v698
  %v701 = vrot.slane %v659, 2
  %v702 = vsel %vm367, %v701, %v700
  %v703 = vrot.slane %v674, 1
  %v704 = vsel %vm370, %v703, %v702
  %v706 = vmul.f32 %v439, %v704
  %715 = vrot.lane.b32.xlu0 %v675, 64
  %v716 = vpop.permute.xlu0 %715
  %717 = vrot.lane.b32.xlu0 %v676, 64
  %v718 = vpop.permute.xlu0 %717
  %719 = vrot.lane.b32.xlu0 %v677, 64
  %v720 = vpop.permute.xlu0 %719
  %721 = vrot.lane.b32.xlu0 %v678, 64
  %v722 = vpop.permute.xlu0 %721
  %723 = vrot.lane.b32.xlu0 %v679, 64
  %v724 = vpop.permute.xlu0 %723
  %725 = vrot.lane.b32.xlu0 %v680, 64
  %v726 = vpop.permute.xlu0 %725
  %727 = vrot.lane.b32.xlu0 %v681, 64
  %v728 = vpop.permute.xlu0 %727
  %729 = vrot.lane.b32.xlu0 %v682, 64
  %v730 = vpop.permute.xlu0 %729
  %v739 = vmul.f32 %v569, %v716
  %v740 = vmul.f32 %v584, %v718
  %v741 = vmul.f32 %v599, %v720
  %v742 = vmul.f32 %v614, %v722
  %v743 = vmul.f32 %v629, %v724
  %v744 = vmul.f32 %v644, %v726
  %v745 = vmul.f32 %v659, %v728
  %v746 = vmul.f32 %v674, %v730
  %v755 = vrot.slane %v740, 7
  %v756 = vsel %vm352, %v755, %v739
  %v757 = vrot.slane %v741, 6
  %v758 = vsel %vm355, %v757, %v756
  %v759 = vrot.slane %v742, 5
  %v760 = vsel %vm358, %v759, %v758
  %v761 = vrot.slane %v743, 4
  %v762 = vsel %vm361, %v761, %v760
  %v763 = vrot.slane %v744, 3
  %v764 = vsel %vm364, %v763, %v762
  %v765 = vrot.slane %v745, 2
  %v766 = vsel %vm367, %v765, %v764
  %v767 = vrot.slane %v746, 1
  %v768 = vsel %vm370, %v767, %v766
  %769 = vrot.lane.b32.xlu0 %v768, 96
  %v770 = vpop.permute.xlu0 %769
  %v772 = vadd.f32 %v706, %v770
  %v773 = vtanh.pop %v772
  %774 = vrot.lane.b32.xlu0 %v704, 64
  %v775 = vpop.permute.xlu0 %774
  %v777 = vmul.f32 %v773, %v775
  %v779 = vrot.slane %v777, 1
  %v780 = vrot.slane %v777, 2
  %v781 = vrot.slane %v777, 3
  %v782 = vrot.slane %v777, 4
  %v783 = vrot.slane %v777, 5
  %v784 = vrot.slane %v777, 6
  %v785 = vrot.slane %v777, 7
  %793 = vst.msk [vmem:[#allocation5 + $0x1] sm:$0x1] %vm460, %v777
  %794 = vst.msk [vmem:[#allocation5 + $0x9] sm:$0x1] %vm460, %v779
  %795 = vst.msk [vmem:[#allocation5 + $0x11] sm:$0x1] %vm460, %v780
  %796 = vst.msk [vmem:[#allocation5 + $0x19] sm:$0x1] %vm460, %v781
  %797 = vst.msk [vmem:[#allocation5 + $0x21] sm:$0x1] %vm460, %v782
  %798 = vst.msk [vmem:[#allocation5 + $0x29] sm:$0x1] %vm460, %v783
  %799 = vst.msk [vmem:[#allocation5 + $0x31] sm:$0x1] %vm460, %v784
  %800 = vst.msk [vmem:[#allocation5 + $0x39] sm:$0x1] %vm460, %v785
  %v801 = vld [vmem:[#allocation4 + $0x2] sm:$0x1]
  %v802 = vld [vmem:[#allocation4 + $0xa] sm:$0x1]
  %v803 = vld [vmem:[#allocation4 + $0x12] sm:$0x1]
  %v804 = vld [vmem:[#allocation4 + $0x1a] sm:$0x1]
  %v805 = vld [vmem:[#allocation4 + $0x22] sm:$0x1]
  %v806 = vld [vmem:[#allocation4 + $0x2a] sm:$0x1]
  %v807 = vld [vmem:[#allocation4 + $0x32] sm:$0x1]
  %v808 = vld [vmem:[#allocation4 + $0x3a] sm:$0x1]
  %v809 = vsel %vm135, %v777, 0
  %811 = vmatpush.msra.mxu0 0.0
  %812 = vmatpush.msra.mxu0 0.0
  %813 = vmatpush.msra.mxu0 0.0
  %814 = vmatpush.msra.mxu0 0.0
  %815 = vmatpush.msra.mxu0 0.0
  %816 = vmatpush.msra.mxu0 0.0
  %817 = vmatpush.msra.mxu0 0.0
  %818 = vmatpush.msra.mxu0 0.0
  %819 = vmatpush.msra.mxu0 0.0
  %820 = vmatpush.msra.mxu0 0.0
  %821 = vmatpush.msra.mxu0 0.0
  %822 = vmatpush.msra.mxu0 0.0
  %823 = vmatpush.msra.mxu0 %v124
  %824 = vmatpush.msra.mxu0 %v123
  %825 = vmatpush.msra.mxu0 %v122
  %826 = vmatpush.msra.mxu0 %v121
  %827 = vmatmul.f32.gmra.mxu0 %v809
  %v828 = vpop.f32.mrf.mxu0
  %v829 = vadd.f32 0.0, %v828
  %830 = vdwg.mxu0
  %v832 = vrot.slane %v829, 1
  %v833 = vrot.slane %v829, 2
  %v834 = vrot.slane %v829, 3
  %v835 = vrot.slane %v829, 4
  %v836 = vrot.slane %v829, 5
  %v837 = vrot.slane %v829, 6
  %v838 = vrot.slane %v829, 7
  %v847 = vadd.f32 %v801, %v829
  %v848 = vadd.f32 %v802, %v832
  %v849 = vadd.f32 %v803, %v833
  %v850 = vadd.f32 %v804, %v834
  %v851 = vadd.f32 %v805, %v835
  %v852 = vadd.f32 %v806, %v836
  %v853 = vadd.f32 %v807, %v837
  %v854 = vadd.f32 %v808, %v838
  %v855 = vxor.u32 %v847, 2147483648
  %v856 = vxor.u32 %v848, 2147483648
  %v857 = vxor.u32 %v849, 2147483648
  %v858 = vxor.u32 %v850, 2147483648
  %v859 = vxor.u32 %v851, 2147483648
  %v860 = vxor.u32 %v852, 2147483648
  %v861 = vxor.u32 %v853, 2147483648
  %v862 = vxor.u32 %v854, 2147483648
  %v863 = vmul.f32 %v855, 1.442695
  %v864 = vpow.pop %v863
  %v865 = vmul.f32 %v856, 1.442695
  %v866 = vpow.pop %v865
  %v867 = vmul.f32 %v857, 1.442695
  %v868 = vpow.pop %v867
  %v869 = vmul.f32 %v858, 1.442695
  %v870 = vpow.pop %v869
  %v871 = vmul.f32 %v859, 1.442695
  %v872 = vpow.pop %v871
  %v873 = vmul.f32 %v860, 1.442695
  %v874 = vpow.pop %v873
  %v875 = vmul.f32 %v861, 1.442695
  %v876 = vpow.pop %v875
  %v877 = vmul.f32 %v862, 1.442695
  %v878 = vpow.pop %v877
  %v879 = vadd.f32 %v864, 1.0
  %v880 = vadd.f32 %v866, 1.0
  %v881 = vadd.f32 %v868, 1.0
  %v882 = vadd.f32 %v870, 1.0
  %v883 = vadd.f32 %v872, 1.0
  %v884 = vadd.f32 %v874, 1.0
  %v885 = vadd.f32 %v876, 1.0
  %v886 = vadd.f32 %v878, 1.0
  %v887 = vrcp.pop %v879
  %v888 = vmul.f32 %v879, %v887
  %v889 = vsub.f32 1.0, %v888
  %v890 = vmul.f32 %v887, %v889
  %v891 = vadd.f32 %v887, %v890
  %vm892 = vweird.f32 %v879
  %vm893 = vweird.f32 %v887
  %vm894 = vmor %vm892, %vm893
  %v895 = vsel %vm894, %v887, %v891
  %v896 = vand.u32 2147483647, %v879
  %vm897 = vcmp.eq.f32.partialorder %v896, 8.507059e+37
  %v898 = vand.u32 %v879, 2147483648
  %v899 = vor.u32 1.1754944e-38, %v898
  %v900 = vsel %vm897, %v899, %v895
  %v901 = vmul.f32 1.0, %v900
  %v902 = vrcp.pop %v880
  %v903 = vmul.f32 %v880, %v902
  %v904 = vsub.f32 1.0, %v903
  %v905 = vmul.f32 %v902, %v904
  %v906 = vadd.f32 %v902, %v905
  %vm907 = vweird.f32 %v880
  %vm908 = vweird.f32 %v902
  %vm909 = vmor %vm907, %vm908
  %v910 = vsel %vm909, %v902, %v906
  %v911 = vand.u32 2147483647, %v880
  %vm912 = vcmp.eq.f32.partialorder %v911, 8.507059e+37
  %v913 = vand.u32 %v880, 2147483648
  %v914 = vor.u32 1.1754944e-38, %v913
  %v915 = vsel %vm912, %v914, %v910
  %v916 = vmul.f32 1.0, %v915
  %v917 = vrcp.pop %v881
  %v918 = vmul.f32 %v881, %v917
  %v919 = vsub.f32 1.0, %v918
  %v920 = vmul.f32 %v917, %v919
  %v921 = vadd.f32 %v917, %v920
  %vm922 = vweird.f32 %v881
  %vm923 = vweird.f32 %v917
  %vm924 = vmor %vm922, %vm923
  %v925 = vsel %vm924, %v917, %v921
  %v926 = vand.u32 2147483647, %v881
  %vm927 = vcmp.eq.f32.partialorder %v926, 8.507059e+37
  %v928 = vand.u32 %v881, 2147483648
  %v929 = vor.u32 1.1754944e-38, %v928
  %v930 = vsel %vm927, %v929, %v925
  %v931 = vmul.f32 1.0, %v930
  %v932 = vrcp.pop %v882
  %v933 = vmul.f32 %v882, %v932
  %v934 = vsub.f32 1.0, %v933
  %v935 = vmul.f32 %v932, %v934
  %v936 = vadd.f32 %v932, %v935
  %vm937 = vweird.f32 %v882
  %vm938 = vweird.f32 %v932
  %vm939 = vmor %vm937, %vm938
  %v940 = vsel %vm939, %v932, %v936
  %v941 = vand.u32 2147483647, %v882
  %vm942 = vcmp.eq.f32.partialorder %v941, 8.507059e+37
  %v943 = vand.u32 %v882, 2147483648
  %v944 = vor.u32 1.1754944e-38, %v943
  %v945 = vsel %vm942, %v944, %v940
  %v946 = vmul.f32 1.0, %v945
  %v947 = vrcp.pop %v883
  %v948 = vmul.f32 %v883, %v947
  %v949 = vsub.f32 1.0, %v948
  %v950 = vmul.f32 %v947, %v949
  %v951 = vadd.f32 %v947, %v950
  %vm952 = vweird.f32 %v883
  %vm953 = vweird.f32 %v947
  %vm954 = vmor %vm952, %vm953
  %v955 = vsel %vm954, %v947, %v951
  %v956 = vand.u32 2147483647, %v883
  %vm957 = vcmp.eq.f32.partialorder %v956, 8.507059e+37
  %v958 = vand.u32 %v883, 2147483648
  %v959 = vor.u32 1.1754944e-38, %v958
  %v960 = vsel %vm957, %v959, %v955
  %v961 = vmul.f32 1.0, %v960
  %v962 = vrcp.pop %v884
  %v963 = vmul.f32 %v884, %v962
  %v964 = vsub.f32 1.0, %v963
  %v965 = vmul.f32 %v962, %v964
  %v966 = vadd.f32 %v962, %v965
  %vm967 = vweird.f32 %v884
  %vm968 = vweird.f32 %v962
  %vm969 = vmor %vm967, %vm968
  %v970 = vsel %vm969, %v962, %v966
  %v971 = vand.u32 2147483647, %v884
  %vm972 = vcmp.eq.f32.partialorder %v971, 8.507059e+37
  %v973 = vand.u32 %v884, 2147483648
  %v974 = vor.u32 1.1754944e-38, %v973
  %v975 = vsel %vm972, %v974, %v970
  %v976 = vmul.f32 1.0, %v975
  %v977 = vrcp.pop %v885
  %v978 = vmul.f32 %v885, %v977
  %v979 = vsub.f32 1.0, %v978
  %v980 = vmul.f32 %v977, %v979
  %v981 = vadd.f32 %v977, %v980
  %vm982 = vweird.f32 %v885
  %vm983 = vweird.f32 %v977
  %vm984 = vmor %vm982, %vm983
  %v985 = vsel %vm984, %v977, %v981
  %v986 = vand.u32 2147483647, %v885
  %vm987 = vcmp.eq.f32.partialorder %v986, 8.507059e+37
  %v988 = vand.u32 %v885, 2147483648
  %v989 = vor.u32 1.1754944e-38, %v988
  %v990 = vsel %vm987, %v989, %v985
  %v991 = vmul.f32 1.0, %v990
  %v992 = vrcp.pop %v886
  %v993 = vmul.f32 %v886, %v992
  %v994 = vsub.f32 1.0, %v993
  %v995 = vmul.f32 %v992, %v994
  %v996 = vadd.f32 %v992, %v995
  %vm997 = vweird.f32 %v886
  %vm998 = vweird.f32 %v992
  %vm999 = vmor %vm997, %vm998
  %v1000 = vsel %vm999, %v992, %v996
  %v1001 = vand.u32 2147483647, %v886
  %vm1002 = vcmp.eq.f32.partialorder %v1001, 8.507059e+37
  %v1003 = vand.u32 %v886, 2147483648
  %v1004 = vor.u32 1.1754944e-38, %v1003
  %v1005 = vsel %vm1002, %v1004, %v1000
  %v1006 = vmul.f32 1.0, %v1005
  %v1007 = vtanh.pop %v847
  %v1008 = vtanh.pop %v848
  %v1009 = vtanh.pop %v849
  %v1010 = vtanh.pop %v850
  %v1011 = vtanh.pop %v851
  %v1012 = vtanh.pop %v852
  %v1013 = vtanh.pop %v853
  %v1014 = vtanh.pop %v854
  %v1023 = vrot.slane %v916, 7
  %v1024 = vsel %vm352, %v1023, %v901
  %v1025 = vrot.slane %v931, 6
  %v1026 = vsel %vm355, %v1025, %v1024
  %v1027 = vrot.slane %v946, 5
  %v1028 = vsel %vm358, %v1027, %v1026
  %v1029 = vrot.slane %v961, 4
  %v1030 = vsel %vm361, %v1029, %v1028
  %v1031 = vrot.slane %v976, 3
  %v1032 = vsel %vm364, %v1031, %v1030
  %v1033 = vrot.slane %v991, 2
  %v1034 = vsel %vm367, %v1033, %v1032
  %v1035 = vrot.slane %v1006, 1
  %v1036 = vsel %vm370, %v1035, %v1034
  %v1038 = vmul.f32 %v772, %v1036
  %1047 = vrot.lane.b32.xlu0 %v1007, 64
  %v1048 = vpop.permute.xlu0 %1047
  %1049 = vrot.lane.b32.xlu0 %v1008, 64
  %v1050 = vpop.permute.xlu0 %1049
  %1051 = vrot.lane.b32.xlu0 %v1009, 64
  %v1052 = vpop.permute.xlu0 %1051
  %1053 = vrot.lane.b32.xlu0 %v1010, 64
  %v1054 = vpop.permute.xlu0 %1053
  %1055 = vrot.lane.b32.xlu0 %v1011, 64
  %v1056 = vpop.permute.xlu0 %1055
  %1057 = vrot.lane.b32.xlu0 %v1012, 64
  %v1058 = vpop.permute.xlu0 %1057
  %1059 = vrot.lane.b32.xlu0 %v1013, 64
  %v1060 = vpop.permute.xlu0 %1059
  %1061 = vrot.lane.b32.xlu0 %v1014, 64
  %v1062 = vpop.permute.xlu0 %1061
  %v1071 = vmul.f32 %v901, %v1048
  %v1072 = vmul.f32 %v916, %v1050
  %v1073 = vmul.f32 %v931, %v1052
  %v1074 = vmul.f32 %v946, %v1054
  %v1075 = vmul.f32 %v961, %v1056
  %v1076 = vmul.f32 %v976, %v1058
  %v1077 = vmul.f32 %v991, %v1060
  %v1078 = vmul.f32 %v1006, %v1062
  %v1087 = vrot.slane %v1072, 7
  %v1088 = vsel %vm352, %v1087, %v1071
  %v1089 = vrot.slane %v1073, 6
  %v1090 = vsel %vm355, %v1089, %v1088
  %v1091 = vrot.slane %v1074, 5
  %v1092 = vsel %vm358, %v1091, %v1090
  %v1093 = vrot.slane %v1075, 4
  %v1094 = vsel %vm361, %v1093, %v1092
  %v1095 = vrot.slane %v1076, 3
  %v1096 = vsel %vm364, %v1095, %v1094
  %v1097 = vrot.slane %v1077, 2
  %v1098 = vsel %vm367, %v1097, %v1096
  %v1099 = vrot.slane %v1078, 1
  %v1100 = vsel %vm370, %v1099, %v1098
  %1101 = vrot.lane.b32.xlu0 %v1100, 96
  %v1102 = vpop.permute.xlu0 %1101
  %v1104 = vadd.f32 %v1038, %v1102
  %v1105 = vtanh.pop %v1104
  %1106 = vrot.lane.b32.xlu0 %v1036, 64
  %v1107 = vpop.permute.xlu0 %1106
  %v1109 = vmul.f32 %v1105, %v1107
  %v1111 = vrot.slane %v1109, 1
  %v1112 = vrot.slane %v1109, 2
  %v1113 = vrot.slane %v1109, 3
  %v1114 = vrot.slane %v1109, 4
  %v1115 = vrot.slane %v1109, 5
  %v1116 = vrot.slane %v1109, 6
  %v1117 = vrot.slane %v1109, 7
  %1125 = vst.msk [vmem:[#allocation5 + $0x2] sm:$0x1] %vm460, %v1109
  %1126 = vst.msk [vmem:[#allocation5 + $0xa] sm:$0x1] %vm460, %v1111
  %1127 = vst.msk [vmem:[#allocation5 + $0x12] sm:$0x1] %vm460, %v1112
  %1128 = vst.msk [vmem:[#allocation5 + $0x1a] sm:$0x1] %vm460, %v1113
  %1129 = vst.msk [vmem:[#allocation5 + $0x22] sm:$0x1] %vm460, %v1114
  %1130 = vst.msk [vmem:[#allocation5 + $0x2a] sm:$0x1] %vm460, %v1115
  %1131 = vst.msk [vmem:[#allocation5 + $0x32] sm:$0x1] %vm460, %v1116
  %1132 = vst.msk [vmem:[#allocation5 + $0x3a] sm:$0x1] %vm460, %v1117
  %v1133 = vld [vmem:[#allocation4 + $0x3] sm:$0x1]
  %v1134 = vld [vmem:[#allocation4 + $0xb] sm:$0x1]
  %v1135 = vld [vmem:[#allocation4 + $0x13] sm:$0x1]
  %v1136 = vld [vmem:[#allocation4 + $0x1b] sm:$0x1]
  %v1137 = vld [vmem:[#allocation4 + $0x23] sm:$0x1]
  %v1138 = vld [vmem:[#allocation4 + $0x2b] sm:$0x1]
  %v1139 = vld [vmem:[#allocation4 + $0x33] sm:$0x1]
  %v1140 = vld [vmem:[#allocation4 + $0x3b] sm:$0x1]
  %v1141 = vsel %vm135, %v1109, 0
  %1143 = vmatpush.msra.mxu0 0.0
  %1144 = vmatpush.msra.mxu0 0.0
  %1145 = vmatpush.msra.mxu0 0.0
  %1146 = vmatpush.msra.mxu0 0.0
  %1147 = vmatpush.msra.mxu0 0.0
  %1148 = vmatpush.msra.mxu0 0.0
  %1149 = vmatpush.msra.mxu0 0.0
  %1150 = vmatpush.msra.mxu0 0.0
  %1151 = vmatpush.msra.mxu0 0.0
  %1152 = vmatpush.msra.mxu0 0.0
  %1153 = vmatpush.msra.mxu0 0.0
  %1154 = vmatpush.msra.mxu0 0.0
  %1155 = vmatpush.msra.mxu0 %v124
  %1156 = vmatpush.msra.mxu0 %v123
  %1157 = vmatpush.msra.mxu0 %v122
  %1158 = vmatpush.msra.mxu0 %v121
  %1159 = vmatmul.f32.gmra.mxu0 %v1141
  %v1160 = vpop.f32.mrf.mxu0
  %v1161 = vadd.f32 0.0, %v1160
  %1162 = vdwg.mxu0
  %v1164 = vrot.slane %v1161, 1
  %v1165 = vrot.slane %v1161, 2
  %v1166 = vrot.slane %v1161, 3
  %v1167 = vrot.slane %v1161, 4
  %v1168 = vrot.slane %v1161, 5
  %v1169 = vrot.slane %v1161, 6
  %v1170 = vrot.slane %v1161, 7
  %v1179 = vadd.f32 %v1133, %v1161
  %v1180 = vadd.f32 %v1134, %v1164
  %v1181 = vadd.f32 %v1135, %v1165
  %v1182 = vadd.f32 %v1136, %v1166
  %v1183 = vadd.f32 %v1137, %v1167
  %v1184 = vadd.f32 %v1138, %v1168
  %v1185 = vadd.f32 %v1139, %v1169
  %v1186 = vadd.f32 %v1140, %v1170
  %v1187 = vxor.u32 %v1179, 2147483648
  %v1188 = vxor.u32 %v1180, 2147483648
  %v1189 = vxor.u32 %v1181, 2147483648
  %v1190 = vxor.u32 %v1182, 2147483648
  %v1191 = vxor.u32 %v1183, 2147483648
  %v1192 = vxor.u32 %v1184, 2147483648
  %v1193 = vxor.u32 %v1185, 2147483648
  %v1194 = vxor.u32 %v1186, 2147483648
  %v1195 = vmul.f32 %v1187, 1.442695
  %v1196 = vpow.pop %v1195
  %v1197 = vmul.f32 %v1188, 1.442695
  %v1198 = vpow.pop %v1197
  %v1199 = vmul.f32 %v1189, 1.442695
  %v1200 = vpow.pop %v1199
  %v1201 = vmul.f32 %v1190, 1.442695
  %v1202 = vpow.pop %v1201
  %v1203 = vmul.f32 %v1191, 1.442695
  %v1204 = vpow.pop %v1203
  %v1205 = vmul.f32 %v1192, 1.442695
  %v1206 = vpow.pop %v1205
  %v1207 = vmul.f32 %v1193, 1.442695
  %v1208 = vpow.pop %v1207
  %v1209 = vmul.f32 %v1194, 1.442695
  %v1210 = vpow.pop %v1209
  %v1211 = vadd.f32 %v1196, 1.0
  %v1212 = vadd.f32 %v1198, 1.0
  %v1213 = vadd.f32 %v1200, 1.0
  %v1214 = vadd.f32 %v1202, 1.0
  %v1215 = vadd.f32 %v1204, 1.0
  %v1216 = vadd.f32 %v1206, 1.0
  %v1217 = vadd.f32 %v1208, 1.0
  %v1218 = vadd.f32 %v1210, 1.0
  %v1219 = vrcp.pop %v1211
  %v1220 = vmul.f32 %v1211, %v1219
  %v1221 = vsub.f32 1.0, %v1220
  %v1222 = vmul.f32 %v1219, %v1221
  %v1223 = vadd.f32 %v1219, %v1222
  %vm1224 = vweird.f32 %v1211
  %vm1225 = vweird.f32 %v1219
  %vm1226 = vmor %vm1224, %vm1225
  %v1227 = vsel %vm1226, %v1219, %v1223
  %v1228 = vand.u32 2147483647, %v1211
  %vm1229 = vcmp.eq.f32.partialorder %v1228, 8.507059e+37
  %v1230 = vand.u32 %v1211, 2147483648
  %v1231 = vor.u32 1.1754944e-38, %v1230
  %v1232 = vsel %vm1229, %v1231, %v1227
  %v1233 = vmul.f32 1.0, %v1232
  %v1234 = vrcp.pop %v1212
  %v1235 = vmul.f32 %v1212, %v1234
  %v1236 = vsub.f32 1.0, %v1235
  %v1237 = vmul.f32 %v1234, %v1236
  %v1238 = vadd.f32 %v1234, %v1237
  %vm1239 = vweird.f32 %v1212
  %vm1240 = vweird.f32 %v1234
  %vm1241 = vmor %vm1239, %vm1240
  %v1242 = vsel %vm1241, %v1234, %v1238
  %v1243 = vand.u32 2147483647, %v1212
  %vm1244 = vcmp.eq.f32.partialorder %v1243, 8.507059e+37
  %v1245 = vand.u32 %v1212, 2147483648
  %v1246 = vor.u32 1.1754944e-38, %v1245
  %v1247 = vsel %vm1244, %v1246, %v1242
  %v1248 = vmul.f32 1.0, %v1247
  %v1249 = vrcp.pop %v1213
  %v1250 = vmul.f32 %v1213, %v1249
  %v1251 = vsub.f32 1.0, %v1250
  %v1252 = vmul.f32 %v1249, %v1251
  %v1253 = vadd.f32 %v1249, %v1252
  %vm1254 = vweird.f32 %v1213
  %vm1255 = vweird.f32 %v1249
  %vm1256 = vmor %vm1254, %vm1255
  %v1257 = vsel %vm1256, %v1249, %v1253
  %v1258 = vand.u32 2147483647, %v1213
  %vm1259 = vcmp.eq.f32.partialorder %v1258, 8.507059e+37
  %v1260 = vand.u32 %v1213, 2147483648
  %v1261 = vor.u32 1.1754944e-38, %v1260
  %v1262 = vsel %vm1259, %v1261, %v1257
  %v1263 = vmul.f32 1.0, %v1262
  %v1264 = vrcp.pop %v1214
  %v1265 = vmul.f32 %v1214, %v1264
  %v1266 = vsub.f32 1.0, %v1265
  %v1267 = vmul.f32 %v1264, %v1266
  %v1268 = vadd.f32 %v1264, %v1267
  %vm1269 = vweird.f32 %v1214
  %vm1270 = vweird.f32 %v1264
  %vm1271 = vmor %vm1269, %vm1270
  %v1272 = vsel %vm1271, %v1264, %v1268
  %v1273 = vand.u32 2147483647, %v1214
  %vm1274 = vcmp.eq.f32.partialorder %v1273, 8.507059e+37
  %v1275 = vand.u32 %v1214, 2147483648
  %v1276 = vor.u32 1.1754944e-38, %v1275
  %v1277 = vsel %vm1274, %v1276, %v1272
  %v1278 = vmul.f32 1.0, %v1277
  %v1279 = vrcp.pop %v1215
  %v1280 = vmul.f32 %v1215, %v1279
  %v1281 = vsub.f32 1.0, %v1280
  %v1282 = vmul.f32 %v1279, %v1281
  %v1283 = vadd.f32 %v1279, %v1282
  %vm1284 = vweird.f32 %v1215
  %vm1285 = vweird.f32 %v1279
  %vm1286 = vmor %vm1284, %vm1285
  %v1287 = vsel %vm1286, %v1279, %v1283
  %v1288 = vand.u32 2147483647, %v1215
  %vm1289 = vcmp.eq.f32.partialorder %v1288, 8.507059e+37
  %v1290 = vand.u32 %v1215, 2147483648
  %v1291 = vor.u32 1.1754944e-38, %v1290
  %v1292 = vsel %vm1289, %v1291, %v1287
  %v1293 = vmul.f32 1.0, %v1292
  %v1294 = vrcp.pop %v1216
  %v1295 = vmul.f32 %v1216, %v1294
  %v1296 = vsub.f32 1.0, %v1295
  %v1297 = vmul.f32 %v1294, %v1296
  %v1298 = vadd.f32 %v1294, %v1297
  %vm1299 = vweird.f32 %v1216
  %vm1300 = vweird.f32 %v1294
  %vm1301 = vmor %vm1299, %vm1300
  %v1302 = vsel %vm1301, %v1294, %v1298
  %v1303 = vand.u32 2147483647, %v1216
  %vm1304 = vcmp.eq.f32.partialorder %v1303, 8.507059e+37
  %v1305 = vand.u32 %v1216, 2147483648
  %v1306 = vor.u32 1.1754944e-38, %v1305
  %v1307 = vsel %vm1304, %v1306, %v1302
  %v1308 = vmul.f32 1.0, %v1307
  %v1309 = vrcp.pop %v1217
  %v1310 = vmul.f32 %v1217, %v1309
  %v1311 = vsub.f32 1.0, %v1310
  %v1312 = vmul.f32 %v1309, %v1311
  %v1313 = vadd.f32 %v1309, %v1312
  %vm1314 = vweird.f32 %v1217
  %vm1315 = vweird.f32 %v1309
  %vm1316 = vmor %vm1314, %vm1315
  %v1317 = vsel %vm1316, %v1309, %v1313
  %v1318 = vand.u32 2147483647, %v1217
  %vm1319 = vcmp.eq.f32.partialorder %v1318, 8.507059e+37
  %v1320 = vand.u32 %v1217, 2147483648
  %v1321 = vor.u32 1.1754944e-38, %v1320
  %v1322 = vsel %vm1319, %v1321, %v1317
  %v1323 = vmul.f32 1.0, %v1322
  %v1324 = vrcp.pop %v1218
  %v1325 = vmul.f32 %v1218, %v1324
  %v1326 = vsub.f32 1.0, %v1325
  %v1327 = vmul.f32 %v1324, %v1326
  %v1328 = vadd.f32 %v1324, %v1327
  %vm1329 = vweird.f32 %v1218
  %vm1330 = vweird.f32 %v1324
  %vm1331 = vmor %vm1329, %vm1330
  %v1332 = vsel %vm1331, %v1324, %v1328
  %v1333 = vand.u32 2147483647, %v1218
  %vm1334 = vcmp.eq.f32.partialorder %v1333, 8.507059e+37
  %v1335 = vand.u32 %v1218, 2147483648
  %v1336 = vor.u32 1.1754944e-38, %v1335
  %v1337 = vsel %vm1334, %v1336, %v1332
  %v1338 = vmul.f32 1.0, %v1337
  %v1339 = vtanh.pop %v1179
  %v1340 = vtanh.pop %v1180
  %v1341 = vtanh.pop %v1181
  %v1342 = vtanh.pop %v1182
  %v1343 = vtanh.pop %v1183
  %v1344 = vtanh.pop %v1184
  %v1345 = vtanh.pop %v1185
  %v1346 = vtanh.pop %v1186
  %v1355 = vrot.slane %v1248, 7
  %v1356 = vsel %vm352, %v1355, %v1233
  %v1357 = vrot.slane %v1263, 6
  %v1358 = vsel %vm355, %v1357, %v1356
  %v1359 = vrot.slane %v1278, 5
  %v1360 = vsel %vm358, %v1359, %v1358
  %v1361 = vrot.slane %v1293, 4
  %v1362 = vsel %vm361, %v1361, %v1360
  %v1363 = vrot.slane %v1308, 3
  %v1364 = vsel %vm364, %v1363, %v1362
  %v1365 = vrot.slane %v1323, 2
  %v1366 = vsel %vm367, %v1365, %v1364
  %v1367 = vrot.slane %v1338, 1
  %v1368 = vsel %vm370, %v1367, %v1366
  %v1370 = vmul.f32 %v1104, %v1368
  %1379 = vrot.lane.b32.xlu0 %v1339, 64
  %v1380 = vpop.permute.xlu0 %1379
  %1381 = vrot.lane.b32.xlu0 %v1340, 64
  %v1382 = vpop.permute.xlu0 %1381
  %1383 = vrot.lane.b32.xlu0 %v1341, 64
  %v1384 = vpop.permute.xlu0 %1383
  %1385 = vrot.lane.b32.xlu0 %v1342, 64
  %v1386 = vpop.permute.xlu0 %1385
  %1387 = vrot.lane.b32.xlu0 %v1343, 64
  %v1388 = vpop.permute.xlu0 %1387
  %1389 = vrot.lane.b32.xlu0 %v1344, 64
  %v1390 = vpop.permute.xlu0 %1389
  %1391 = vrot.lane.b32.xlu0 %v1345, 64
  %v1392 = vpop.permute.xlu0 %1391
  %1393 = vrot.lane.b32.xlu0 %v1346, 64
  %v1394 = vpop.permute.xlu0 %1393
  %v1403 = vmul.f32 %v1233, %v1380
  %v1404 = vmul.f32 %v1248, %v1382
  %v1405 = vmul.f32 %v1263, %v1384
  %v1406 = vmul.f32 %v1278, %v1386
  %v1407 = vmul.f32 %v1293, %v1388
  %v1408 = vmul.f32 %v1308, %v1390
  %v1409 = vmul.f32 %v1323, %v1392
  %v1410 = vmul.f32 %v1338, %v1394
  %v1419 = vrot.slane %v1404, 7
  %v1420 = vsel %vm352, %v1419, %v1403
  %v1421 = vrot.slane %v1405, 6
  %v1422 = vsel %vm355, %v1421, %v1420
  %v1423 = vrot.slane %v1406, 5
  %v1424 = vsel %vm358, %v1423, %v1422
  %v1425 = vrot.slane %v1407, 4
  %v1426 = vsel %vm361, %v1425, %v1424
  %v1427 = vrot.slane %v1408, 3
  %v1428 = vsel %vm364, %v1427, %v1426
  %v1429 = vrot.slane %v1409, 2
  %v1430 = vsel %vm367, %v1429, %v1428
  %v1431 = vrot.slane %v1410, 1
  %v1432 = vsel %vm370, %v1431, %v1430
  %1433 = vrot.lane.b32.xlu0 %v1432, 96
  %v1434 = vpop.permute.xlu0 %1433
  %v1436 = vadd.f32 %v1370, %v1434
  %v1437 = vtanh.pop %v1436
  %1438 = vrot.lane.b32.xlu0 %v1368, 64
  %v1439 = vpop.permute.xlu0 %1438
  %v1441 = vmul.f32 %v1437, %v1439
  %v1443 = vrot.slane %v1441, 1
  %v1444 = vrot.slane %v1441, 2
  %v1445 = vrot.slane %v1441, 3
  %v1446 = vrot.slane %v1441, 4
  %v1447 = vrot.slane %v1441, 5
  %v1448 = vrot.slane %v1441, 6
  %v1449 = vrot.slane %v1441, 7
  %1457 = vst.msk [vmem:[#allocation5 + $0x3] sm:$0x1] %vm460, %v1441
  %1458 = vst.msk [vmem:[#allocation5 + $0xb] sm:$0x1] %vm460, %v1443
  %1459 = vst.msk [vmem:[#allocation5 + $0x13] sm:$0x1] %vm460, %v1444
  %1460 = vst.msk [vmem:[#allocation5 + $0x1b] sm:$0x1] %vm460, %v1445
  %1461 = vst.msk [vmem:[#allocation5 + $0x23] sm:$0x1] %vm460, %v1446
  %1462 = vst.msk [vmem:[#allocation5 + $0x2b] sm:$0x1] %vm460, %v1447
  %1463 = vst.msk [vmem:[#allocation5 + $0x33] sm:$0x1] %vm460, %v1448
  %1464 = vst.msk [vmem:[#allocation5 + $0x3b] sm:$0x1] %vm460, %v1449
  %v1465 = vld [vmem:[#allocation4 + $0x4] sm:$0x1]
  %v1466 = vld [vmem:[#allocation4 + $0xc] sm:$0x1]
  %v1467 = vld [vmem:[#allocation4 + $0x14] sm:$0x1]
  %v1468 = vld [vmem:[#allocation4 + $0x1c] sm:$0x1]
  %v1469 = vld [vmem:[#allocation4 + $0x24] sm:$0x1]
  %v1470 = vld [vmem:[#allocation4 + $0x2c] sm:$0x1]
  %v1471 = vld [vmem:[#allocation4 + $0x34] sm:$0x1]
  %v1472 = vld [vmem:[#allocation4 + $0x3c] sm:$0x1]
  %v1473 = vsel %vm135, %v1441, 0
  %1475 = vmatpush.msra.mxu0 0.0
  %1476 = vmatpush.msra.mxu0 0.0
  %1477 = vmatpush.msra.mxu0 0.0
  %1478 = vmatpush.msra.mxu0 0.0
  %1479 = vmatpush.msra.mxu0 0.0
  %1480 = vmatpush.msra.mxu0 0.0
  %1481 = vmatpush.msra.mxu0 0.0
  %1482 = vmatpush.msra.mxu0 0.0
  %1483 = vmatpush.msra.mxu0 0.0
  %1484 = vmatpush.msra.mxu0 0.0
  %1485 = vmatpush.msra.mxu0 0.0
  %1486 = vmatpush.msra.mxu0 0.0
  %1487 = vmatpush.msra.mxu0 %v124
  %1488 = vmatpush.msra.mxu0 %v123
  %1489 = vmatpush.msra.mxu0 %v122
  %1490 = vmatpush.msra.mxu0 %v121
  %1491 = vmatmul.f32.gmra.mxu0 %v1473
  %v1492 = vpop.f32.mrf.mxu0
  %v1493 = vadd.f32 0.0, %v1492
  %1494 = vdwg.mxu0
  %v1496 = vrot.slane %v1493, 1
  %v1497 = vrot.slane %v1493, 2
  %v1498 = vrot.slane %v1493, 3
  %v1499 = vrot.slane %v1493, 4
  %v1500 = vrot.slane %v1493, 5
  %v1501 = vrot.slane %v1493, 6
  %v1502 = vrot.slane %v1493, 7
  %v1511 = vadd.f32 %v1465, %v1493
  %v1512 = vadd.f32 %v1466, %v1496
  %v1513 = vadd.f32 %v1467, %v1497
  %v1514 = vadd.f32 %v1468, %v1498
  %v1515 = vadd.f32 %v1469, %v1499
  %v1516 = vadd.f32 %v1470, %v1500
  %v1517 = vadd.f32 %v1471, %v1501
  %v1518 = vadd.f32 %v1472, %v1502
  %v1519 = vxor.u32 %v1511, 2147483648
  %v1520 = vxor.u32 %v1512, 2147483648
  %v1521 = vxor.u32 %v1513, 2147483648
  %v1522 = vxor.u32 %v1514, 2147483648
  %v1523 = vxor.u32 %v1515, 2147483648
  %v1524 = vxor.u32 %v1516, 2147483648
  %v1525 = vxor.u32 %v1517, 2147483648
  %v1526 = vxor.u32 %v1518, 2147483648
  %v1527 = vmul.f32 %v1519, 1.442695
  %v1528 = vpow.pop %v1527
  %v1529 = vmul.f32 %v1520, 1.442695
  %v1530 = vpow.pop %v1529
  %v1531 = vmul.f32 %v1521, 1.442695
  %v1532 = vpow.pop %v1531
  %v1533 = vmul.f32 %v1522, 1.442695
  %v1534 = vpow.pop %v1533
  %v1535 = vmul.f32 %v1523, 1.442695
  %v1536 = vpow.pop %v1535
  %v1537 = vmul.f32 %v1524, 1.442695
  %v1538 = vpow.pop %v1537
  %v1539 = vmul.f32 %v1525, 1.442695
  %v1540 = vpow.pop %v1539
  %v1541 = vmul.f32 %v1526, 1.442695
  %v1542 = vpow.pop %v1541
  %v1543 = vadd.f32 %v1528, 1.0
  %v1544 = vadd.f32 %v1530, 1.0
  %v1545 = vadd.f32 %v1532, 1.0
  %v1546 = vadd.f32 %v1534, 1.0
  %v1547 = vadd.f32 %v1536, 1.0
  %v1548 = vadd.f32 %v1538, 1.0
  %v1549 = vadd.f32 %v1540, 1.0
  %v1550 = vadd.f32 %v1542, 1.0
  %v1551 = vrcp.pop %v1543
  %v1552 = vmul.f32 %v1543, %v1551
  %v1553 = vsub.f32 1.0, %v1552
  %v1554 = vmul.f32 %v1551, %v1553
  %v1555 = vadd.f32 %v1551, %v1554
  %vm1556 = vweird.f32 %v1543
  %vm1557 = vweird.f32 %v1551
  %vm1558 = vmor %vm1556, %vm1557
  %v1559 = vsel %vm1558, %v1551, %v1555
  %v1560 = vand.u32 2147483647, %v1543
  %vm1561 = vcmp.eq.f32.partialorder %v1560, 8.507059e+37
  %v1562 = vand.u32 %v1543, 2147483648
  %v1563 = vor.u32 1.1754944e-38, %v1562
  %v1564 = vsel %vm1561, %v1563, %v1559
  %v1565 = vmul.f32 1.0, %v1564
  %v1566 = vrcp.pop %v1544
  %v1567 = vmul.f32 %v1544, %v1566
  %v1568 = vsub.f32 1.0, %v1567
  %v1569 = vmul.f32 %v1566, %v1568
  %v1570 = vadd.f32 %v1566, %v1569
  %vm1571 = vweird.f32 %v1544
  %vm1572 = vweird.f32 %v1566
  %vm1573 = vmor %vm1571, %vm1572
  %v1574 = vsel %vm1573, %v1566, %v1570
  %v1575 = vand.u32 2147483647, %v1544
  %vm1576 = vcmp.eq.f32.partialorder %v1575, 8.507059e+37
  %v1577 = vand.u32 %v1544, 2147483648
  %v1578 = vor.u32 1.1754944e-38, %v1577
  %v1579 = vsel %vm1576, %v1578, %v1574
  %v1580 = vmul.f32 1.0, %v1579
  %v1581 = vrcp.pop %v1545
  %v1582 = vmul.f32 %v1545, %v1581
  %v1583 = vsub.f32 1.0, %v1582
  %v1584 = vmul.f32 %v1581, %v1583
  %v1585 = vadd.f32 %v1581, %v1584
  %vm1586 = vweird.f32 %v1545
  %vm1587 = vweird.f32 %v1581
  %vm1588 = vmor %vm1586, %vm1587
  %v1589 = vsel %vm1588, %v1581, %v1585
  %v1590 = vand.u32 2147483647, %v1545
  %vm1591 = vcmp.eq.f32.partialorder %v1590, 8.507059e+37
  %v1592 = vand.u32 %v1545, 2147483648
  %v1593 = vor.u32 1.1754944e-38, %v1592
  %v1594 = vsel %vm1591, %v1593, %v1589
  %v1595 = vmul.f32 1.0, %v1594
  %v1596 = vrcp.pop %v1546
  %v1597 = vmul.f32 %v1546, %v1596
  %v1598 = vsub.f32 1.0, %v1597
  %v1599 = vmul.f32 %v1596, %v1598
  %v1600 = vadd.f32 %v1596, %v1599
  %vm1601 = vweird.f32 %v1546
  %vm1602 = vweird.f32 %v1596
  %vm1603 = vmor %vm1601, %vm1602
  %v1604 = vsel %vm1603, %v1596, %v1600
  %v1605 = vand.u32 2147483647, %v1546
  %vm1606 = vcmp.eq.f32.partialorder %v1605, 8.507059e+37
  %v1607 = vand.u32 %v1546, 2147483648
  %v1608 = vor.u32 1.1754944e-38, %v1607
  %v1609 = vsel %vm1606, %v1608, %v1604
  %v1610 = vmul.f32 1.0, %v1609
  %v1611 = vrcp.pop %v1547
  %v1612 = vmul.f32 %v1547, %v1611
  %v1613 = vsub.f32 1.0, %v1612
  %v1614 = vmul.f32 %v1611, %v1613
  %v1615 = vadd.f32 %v1611, %v1614
  %vm1616 = vweird.f32 %v1547
  %vm1617 = vweird.f32 %v1611
  %vm1618 = vmor %vm1616, %vm1617
  %v1619 = vsel %vm1618, %v1611, %v1615
  %v1620 = vand.u32 2147483647, %v1547
  %vm1621 = vcmp.eq.f32.partialorder %v1620, 8.507059e+37
  %v1622 = vand.u32 %v1547, 2147483648
  %v1623 = vor.u32 1.1754944e-38, %v1622
  %v1624 = vsel %vm1621, %v1623, %v1619
  %v1625 = vmul.f32 1.0, %v1624
  %v1626 = vrcp.pop %v1548
  %v1627 = vmul.f32 %v1548, %v1626
  %v1628 = vsub.f32 1.0, %v1627
  %v1629 = vmul.f32 %v1626, %v1628
  %v1630 = vadd.f32 %v1626, %v1629
  %vm1631 = vweird.f32 %v1548
  %vm1632 = vweird.f32 %v1626
  %vm1633 = vmor %vm1631, %vm1632
  %v1634 = vsel %vm1633, %v1626, %v1630
  %v1635 = vand.u32 2147483647, %v1548
  %vm1636 = vcmp.eq.f32.partialorder %v1635, 8.507059e+37
  %v1637 = vand.u32 %v1548, 2147483648
  %v1638 = vor.u32 1.1754944e-38, %v1637
  %v1639 = vsel %vm1636, %v1638, %v1634
  %v1640 = vmul.f32 1.0, %v1639
  %v1641 = vrcp.pop %v1549
  %v1642 = vmul.f32 %v1549, %v1641
  %v1643 = vsub.f32 1.0, %v1642
  %v1644 = vmul.f32 %v1641, %v1643
  %v1645 = vadd.f32 %v1641, %v1644
  %vm1646 = vweird.f32 %v1549
  %vm1647 = vweird.f32 %v1641
  %vm1648 = vmor %vm1646, %vm1647
  %v1649 = vsel %vm1648, %v1641, %v1645
  %v1650 = vand.u32 2147483647, %v1549
  %vm1651 = vcmp.eq.f32.partialorder %v1650, 8.507059e+37
  %v1652 = vand.u32 %v1549, 2147483648
  %v1653 = vor.u32 1.1754944e-38, %v1652
  %v1654 = vsel %vm1651, %v1653, %v1649
  %v1655 = vmul.f32 1.0, %v1654
  %v1656 = vrcp.pop %v1550
  %v1657 = vmul.f32 %v1550, %v1656
  %v1658 = vsub.f32 1.0, %v1657
  %v1659 = vmul.f32 %v1656, %v1658
  %v1660 = vadd.f32 %v1656, %v1659
  %vm1661 = vweird.f32 %v1550
  %vm1662 = vweird.f32 %v1656
  %vm1663 = vmor %vm1661, %vm1662
  %v1664 = vsel %vm1663, %v1656, %v1660
  %v1665 = vand.u32 2147483647, %v1550
  %vm1666 = vcmp.eq.f32.partialorder %v1665, 8.507059e+37
  %v1667 = vand.u32 %v1550, 2147483648
  %v1668 = vor.u32 1.1754944e-38, %v1667
  %v1669 = vsel %vm1666, %v1668, %v1664
  %v1670 = vmul.f32 1.0, %v1669
  %v1671 = vtanh.pop %v1511
  %v1672 = vtanh.pop %v1512
  %v1673 = vtanh.pop %v1513
  %v1674 = vtanh.pop %v1514
  %v1675 = vtanh.pop %v1515
  %v1676 = vtanh.pop %v1516
  %v1677 = vtanh.pop %v1517
  %v1678 = vtanh.pop %v1518
  %v1687 = vrot.slane %v1580, 7
  %v1688 = vsel %vm352, %v1687, %v1565
  %v1689 = vrot.slane %v1595, 6
  %v1690 = vsel %vm355, %v1689, %v1688
  %v1691 = vrot.slane %v1610, 5
  %v1692 = vsel %vm358, %v1691, %v1690
  %v1693 = vrot.slane %v1625, 4
  %v1694 = vsel %vm361, %v1693, %v1692
  %v1695 = vrot.slane %v1640, 3
  %v1696 = vsel %vm364, %v1695, %v1694
  %v1697 = vrot.slane %v1655, 2
  %v1698 = vsel %vm367, %v1697, %v1696
  %v1699 = vrot.slane %v1670, 1
  %v1700 = vsel %vm370, %v1699, %v1698
  %v1702 = vmul.f32 %v1436, %v1700
  %1711 = vrot.lane.b32.xlu0 %v1671, 64
  %v1712 = vpop.permute.xlu0 %1711
  %1713 = vrot.lane.b32.xlu0 %v1672, 64
  %v1714 = vpop.permute.xlu0 %1713
  %1715 = vrot.lane.b32.xlu0 %v1673, 64
  %v1716 = vpop.permute.xlu0 %1715
  %1717 = vrot.lane.b32.xlu0 %v1674, 64
  %v1718 = vpop.permute.xlu0 %1717
  %1719 = vrot.lane.b32.xlu0 %v1675, 64
  %v1720 = vpop.permute.xlu0 %1719
  %1721 = vrot.lane.b32.xlu0 %v1676, 64
  %v1722 = vpop.permute.xlu0 %1721
  %1723 = vrot.lane.b32.xlu0 %v1677, 64
  %v1724 = vpop.permute.xlu0 %1723
  %1725 = vrot.lane.b32.xlu0 %v1678, 64
  %v1726 = vpop.permute.xlu0 %1725
  %v1735 = vmul.f32 %v1565, %v1712
  %v1736 = vmul.f32 %v1580, %v1714
  %v1737 = vmul.f32 %v1595, %v1716
  %v1738 = vmul.f32 %v1610, %v1718
  %v1739 = vmul.f32 %v1625, %v1720
  %v1740 = vmul.f32 %v1640, %v1722
  %v1741 = vmul.f32 %v1655, %v1724
  %v1742 = vmul.f32 %v1670, %v1726
  %v1751 = vrot.slane %v1736, 7
  %v1752 = vsel %vm352, %v1751, %v1735
  %v1753 = vrot.slane %v1737, 6
  %v1754 = vsel %vm355, %v1753, %v1752
  %v1755 = vrot.slane %v1738, 5
  %v1756 = vsel %vm358, %v1755, %v1754
  %v1757 = vrot.slane %v1739, 4
  %v1758 = vsel %vm361, %v1757, %v1756
  %v1759 = vrot.slane %v1740, 3
  %v1760 = vsel %vm364, %v1759, %v1758
  %v1761 = vrot.slane %v1741, 2
  %v1762 = vsel %vm367, %v1761, %v1760
  %v1763 = vrot.slane %v1742, 1
  %v1764 = vsel %vm370, %v1763, %v1762
  %1765 = vrot.lane.b32.xlu0 %v1764, 96
  %v1766 = vpop.permute.xlu0 %1765
  %v1768 = vadd.f32 %v1702, %v1766
  %v1769 = vtanh.pop %v1768
  %1770 = vrot.lane.b32.xlu0 %v1700, 64
  %v1771 = vpop.permute.xlu0 %1770
  %v1773 = vmul.f32 %v1769, %v1771
  %v1775 = vrot.slane %v1773, 1
  %v1776 = vrot.slane %v1773, 2
  %v1777 = vrot.slane %v1773, 3
  %v1778 = vrot.slane %v1773, 4
  %v1779 = vrot.slane %v1773, 5
  %v1780 = vrot.slane %v1773, 6
  %v1781 = vrot.slane %v1773, 7
  %1789 = vst.msk [vmem:[#allocation5 + $0x4] sm:$0x1] %vm460, %v1773
  %1790 = vst.msk [vmem:[#allocation5 + $0xc] sm:$0x1] %vm460, %v1775
  %1791 = vst.msk [vmem:[#allocation5 + $0x14] sm:$0x1] %vm460, %v1776
  %1792 = vst.msk [vmem:[#allocation5 + $0x1c] sm:$0x1] %vm460, %v1777
  %1793 = vst.msk [vmem:[#allocation5 + $0x24] sm:$0x1] %vm460, %v1778
  %1794 = vst.msk [vmem:[#allocation5 + $0x2c] sm:$0x1] %vm460, %v1779
  %1795 = vst.msk [vmem:[#allocation5 + $0x34] sm:$0x1] %vm460, %v1780
  %1796 = vst.msk [vmem:[#allocation5 + $0x3c] sm:$0x1] %vm460, %v1781
  %v1797 = vld [vmem:[#allocation4 + $0x5] sm:$0x1]
  %v1798 = vld [vmem:[#allocation4 + $0xd] sm:$0x1]
  %v1799 = vld [vmem:[#allocation4 + $0x15] sm:$0x1]
  %v1800 = vld [vmem:[#allocation4 + $0x1d] sm:$0x1]
  %v1801 = vld [vmem:[#allocation4 + $0x25] sm:$0x1]
  %v1802 = vld [vmem:[#allocation4 + $0x2d] sm:$0x1]
  %v1803 = vld [vmem:[#allocation4 + $0x35] sm:$0x1]
  %v1804 = vld [vmem:[#allocation4 + $0x3d] sm:$0x1]
  %v1805 = vsel %vm135, %v1773, 0
  %1807 = vmatpush.msra.mxu0 0.0
  %1808 = vmatpush.msra.mxu0 0.0
  %1809 = vmatpush.msra.mxu0 0.0
  %1810 = vmatpush.msra.mxu0 0.0
  %1811 = vmatpush.msra.mxu0 0.0
  %1812 = vmatpush.msra.mxu0 0.0
  %1813 = vmatpush.msra.mxu0 0.0
  %1814 = vmatpush.msra.mxu0 0.0
  %1815 = vmatpush.msra.mxu0 0.0
  %1816 = vmatpush.msra.mxu0 0.0
  %1817 = vmatpush.msra.mxu0 0.0
  %1818 = vmatpush.msra.mxu0 0.0
  %1819 = vmatpush.msra.mxu0 %v124
  %1820 = vmatpush.msra.mxu0 %v123
  %1821 = vmatpush.msra.mxu0 %v122
  %1822 = vmatpush.msra.mxu0 %v121
  %1823 = vmatmul.f32.gmra.mxu0 %v1805
  %v1824 = vpop.f32.mrf.mxu0
  %v1825 = vadd.f32 0.0, %v1824
  %1826 = vdwg.mxu0
  %v1828 = vrot.slane %v1825, 1
  %v1829 = vrot.slane %v1825, 2
  %v1830 = vrot.slane %v1825, 3
  %v1831 = vrot.slane %v1825, 4
  %v1832 = vrot.slane %v1825, 5
  %v1833 = vrot.slane %v1825, 6
  %v1834 = vrot.slane %v1825, 7
  %v1843 = vadd.f32 %v1797, %v1825
  %v1844 = vadd.f32 %v1798, %v1828
  %v1845 = vadd.f32 %v1799, %v1829
  %v1846 = vadd.f32 %v1800, %v1830
  %v1847 = vadd.f32 %v1801, %v1831
  %v1848 = vadd.f32 %v1802, %v1832
  %v1849 = vadd.f32 %v1803, %v1833
  %v1850 = vadd.f32 %v1804, %v1834
  %v1851 = vxor.u32 %v1843, 2147483648
  %v1852 = vxor.u32 %v1844, 2147483648
  %v1853 = vxor.u32 %v1845, 2147483648
  %v1854 = vxor.u32 %v1846, 2147483648
  %v1855 = vxor.u32 %v1847, 2147483648
  %v1856 = vxor.u32 %v1848, 2147483648
  %v1857 = vxor.u32 %v1849, 2147483648
  %v1858 = vxor.u32 %v1850, 2147483648
  %v1859 = vmul.f32 %v1851, 1.442695
  %v1860 = vpow.pop %v1859
  %v1861 = vmul.f32 %v1852, 1.442695
  %v1862 = vpow.pop %v1861
  %v1863 = vmul.f32 %v1853, 1.442695
  %v1864 = vpow.pop %v1863
  %v1865 = vmul.f32 %v1854, 1.442695
  %v1866 = vpow.pop %v1865
  %v1867 = vmul.f32 %v1855, 1.442695
  %v1868 = vpow.pop %v1867
  %v1869 = vmul.f32 %v1856, 1.442695
  %v1870 = vpow.pop %v1869
  %v1871 = vmul.f32 %v1857, 1.442695
  %v1872 = vpow.pop %v1871
  %v1873 = vmul.f32 %v1858, 1.442695
  %v1874 = vpow.pop %v1873
  %v1875 = vadd.f32 %v1860, 1.0
  %v1876 = vadd.f32 %v1862, 1.0
  %v1877 = vadd.f32 %v1864, 1.0
  %v1878 = vadd.f32 %v1866, 1.0
  %v1879 = vadd.f32 %v1868, 1.0
  %v1880 = vadd.f32 %v1870, 1.0
  %v1881 = vadd.f32 %v1872, 1.0
  %v1882 = vadd.f32 %v1874, 1.0
  %v1883 = vrcp.pop %v1875
  %v1884 = vmul.f32 %v1875, %v1883
  %v1885 = vsub.f32 1.0, %v1884
  %v1886 = vmul.f32 %v1883, %v1885
  %v1887 = vadd.f32 %v1883, %v1886
  %vm1888 = vweird.f32 %v1875
  %vm1889 = vweird.f32 %v1883
  %vm1890 = vmor %vm1888, %vm1889
  %v1891 = vsel %vm1890, %v1883, %v1887
  %v1892 = vand.u32 2147483647, %v1875
  %vm1893 = vcmp.eq.f32.partialorder %v1892, 8.507059e+37
  %v1894 = vand.u32 %v1875, 2147483648
  %v1895 = vor.u32 1.1754944e-38, %v1894
  %v1896 = vsel %vm1893, %v1895, %v1891
  %v1897 = vmul.f32 1.0, %v1896
  %v1898 = vrcp.pop %v1876
  %v1899 = vmul.f32 %v1876, %v1898
  %v1900 = vsub.f32 1.0, %v1899
  %v1901 = vmul.f32 %v1898, %v1900
  %v1902 = vadd.f32 %v1898, %v1901
  %vm1903 = vweird.f32 %v1876
  %vm1904 = vweird.f32 %v1898
  %vm1905 = vmor %vm1903, %vm1904
  %v1906 = vsel %vm1905, %v1898, %v1902
  %v1907 = vand.u32 2147483647, %v1876
  %vm1908 = vcmp.eq.f32.partialorder %v1907, 8.507059e+37
  %v1909 = vand.u32 %v1876, 2147483648
  %v1910 = vor.u32 1.1754944e-38, %v1909
  %v1911 = vsel %vm1908, %v1910, %v1906
  %v1912 = vmul.f32 1.0, %v1911
  %v1913 = vrcp.pop %v1877
  %v1914 = vmul.f32 %v1877, %v1913
  %v1915 = vsub.f32 1.0, %v1914
  %v1916 = vmul.f32 %v1913, %v1915
  %v1917 = vadd.f32 %v1913, %v1916
  %vm1918 = vweird.f32 %v1877
  %vm1919 = vweird.f32 %v1913
  %vm1920 = vmor %vm1918, %vm1919
  %v1921 = vsel %vm1920, %v1913, %v1917
  %v1922 = vand.u32 2147483647, %v1877
  %vm1923 = vcmp.eq.f32.partialorder %v1922, 8.507059e+37
  %v1924 = vand.u32 %v1877, 2147483648
  %v1925 = vor.u32 1.1754944e-38, %v1924
  %v1926 = vsel %vm1923, %v1925, %v1921
  %v1927 = vmul.f32 1.0, %v1926
  %v1928 = vrcp.pop %v1878
  %v1929 = vmul.f32 %v1878, %v1928
  %v1930 = vsub.f32 1.0, %v1929
  %v1931 = vmul.f32 %v1928, %v1930
  %v1932 = vadd.f32 %v1928, %v1931
  %vm1933 = vweird.f32 %v1878
  %vm1934 = vweird.f32 %v1928
  %vm1935 = vmor %vm1933, %vm1934
  %v1936 = vsel %vm1935, %v1928, %v1932
  %v1937 = vand.u32 2147483647, %v1878
  %vm1938 = vcmp.eq.f32.partialorder %v1937, 8.507059e+37
  %v1939 = vand.u32 %v1878, 2147483648
  %v1940 = vor.u32 1.1754944e-38, %v1939
  %v1941 = vsel %vm1938, %v1940, %v1936
  %v1942 = vmul.f32 1.0, %v1941
  %v1943 = vrcp.pop %v1879
  %v1944 = vmul.f32 %v1879, %v1943
  %v1945 = vsub.f32 1.0, %v1944
  %v1946 = vmul.f32 %v1943, %v1945
  %v1947 = vadd.f32 %v1943, %v1946
  %vm1948 = vweird.f32 %v1879
  %vm1949 = vweird.f32 %v1943
  %vm1950 = vmor %vm1948, %vm1949
  %v1951 = vsel %vm1950, %v1943, %v1947
  %v1952 = vand.u32 2147483647, %v1879
  %vm1953 = vcmp.eq.f32.partialorder %v1952, 8.507059e+37
  %v1954 = vand.u32 %v1879, 2147483648
  %v1955 = vor.u32 1.1754944e-38, %v1954
  %v1956 = vsel %vm1953, %v1955, %v1951
  %v1957 = vmul.f32 1.0, %v1956
  %v1958 = vrcp.pop %v1880
  %v1959 = vmul.f32 %v1880, %v1958
  %v1960 = vsub.f32 1.0, %v1959
  %v1961 = vmul.f32 %v1958, %v1960
  %v1962 = vadd.f32 %v1958, %v1961
  %vm1963 = vweird.f32 %v1880
  %vm1964 = vweird.f32 %v1958
  %vm1965 = vmor %vm1963, %vm1964
  %v1966 = vsel %vm1965, %v1958, %v1962
  %v1967 = vand.u32 2147483647, %v1880
  %vm1968 = vcmp.eq.f32.partialorder %v1967, 8.507059e+37
  %v1969 = vand.u32 %v1880, 2147483648
  %v1970 = vor.u32 1.1754944e-38, %v1969
  %v1971 = vsel %vm1968, %v1970, %v1966
  %v1972 = vmul.f32 1.0, %v1971
  %v1973 = vrcp.pop %v1881
  %v1974 = vmul.f32 %v1881, %v1973
  %v1975 = vsub.f32 1.0, %v1974
  %v1976 = vmul.f32 %v1973, %v1975
  %v1977 = vadd.f32 %v1973, %v1976
  %vm1978 = vweird.f32 %v1881
  %vm1979 = vweird.f32 %v1973
  %vm1980 = vmor %vm1978, %vm1979
  %v1981 = vsel %vm1980, %v1973, %v1977
  %v1982 = vand.u32 2147483647, %v1881
  %vm1983 = vcmp.eq.f32.partialorder %v1982, 8.507059e+37
  %v1984 = vand.u32 %v1881, 2147483648
  %v1985 = vor.u32 1.1754944e-38, %v1984
  %v1986 = vsel %vm1983, %v1985, %v1981
  %v1987 = vmul.f32 1.0, %v1986
  %v1988 = vrcp.pop %v1882
  %v1989 = vmul.f32 %v1882, %v1988
  %v1990 = vsub.f32 1.0, %v1989
  %v1991 = vmul.f32 %v1988, %v1990
  %v1992 = vadd.f32 %v1988, %v1991
  %vm1993 = vweird.f32 %v1882
  %vm1994 = vweird.f32 %v1988
  %vm1995 = vmor %vm1993, %vm1994
  %v1996 = vsel %vm1995, %v1988, %v1992
  %v1997 = vand.u32 2147483647, %v1882
  %vm1998 = vcmp.eq.f32.partialorder %v1997, 8.507059e+37
  %v1999 = vand.u32 %v1882, 2147483648
  %v2000 = vor.u32 1.1754944e-38, %v1999
  %v2001 = vsel %vm1998, %v2000, %v1996
  %v2002 = vmul.f32 1.0, %v2001
  %v2003 = vtanh.pop %v1843
  %v2004 = vtanh.pop %v1844
  %v2005 = vtanh.pop %v1845
  %v2006 = vtanh.pop %v1846
  %v2007 = vtanh.pop %v1847
  %v2008 = vtanh.pop %v1848
  %v2009 = vtanh.pop %v1849
  %v2010 = vtanh.pop %v1850
  %v2019 = vrot.slane %v1912, 7
  %v2020 = vsel %vm352, %v2019, %v1897
  %v2021 = vrot.slane %v1927, 6
  %v2022 = vsel %vm355, %v2021, %v2020
  %v2023 = vrot.slane %v1942, 5
  %v2024 = vsel %vm358, %v2023, %v2022
  %v2025 = vrot.slane %v1957, 4
  %v2026 = vsel %vm361, %v2025, %v2024
  %v2027 = vrot.slane %v1972, 3
  %v2028 = vsel %vm364, %v2027, %v2026
  %v2029 = vrot.slane %v1987, 2
  %v2030 = vsel %vm367, %v2029, %v2028
  %v2031 = vrot.slane %v2002, 1
  %v2032 = vsel %vm370, %v2031, %v2030
  %v2034 = vmul.f32 %v1768, %v2032
  %2043 = vrot.lane.b32.xlu0 %v2003, 64
  %v2044 = vpop.permute.xlu0 %2043
  %2045 = vrot.lane.b32.xlu0 %v2004, 64
  %v2046 = vpop.permute.xlu0 %2045
  %2047 = vrot.lane.b32.xlu0 %v2005, 64
  %v2048 = vpop.permute.xlu0 %2047
  %2049 = vrot.lane.b32.xlu0 %v2006, 64
  %v2050 = vpop.permute.xlu0 %2049
  %2051 = vrot.lane.b32.xlu0 %v2007, 64
  %v2052 = vpop.permute.xlu0 %2051
  %2053 = vrot.lane.b32.xlu0 %v2008, 64
  %v2054 = vpop.permute.xlu0 %2053
  %2055 = vrot.lane.b32.xlu0 %v2009, 64
  %v2056 = vpop.permute.xlu0 %2055
  %2057 = vrot.lane.b32.xlu0 %v2010, 64
  %v2058 = vpop.permute.xlu0 %2057
  %v2067 = vmul.f32 %v1897, %v2044
  %v2068 = vmul.f32 %v1912, %v2046
  %v2069 = vmul.f32 %v1927, %v2048
  %v2070 = vmul.f32 %v1942, %v2050
  %v2071 = vmul.f32 %v1957, %v2052
  %v2072 = vmul.f32 %v1972, %v2054
  %v2073 = vmul.f32 %v1987, %v2056
  %v2074 = vmul.f32 %v2002, %v2058
  %v2083 = vrot.slane %v2068, 7
  %v2084 = vsel %vm352, %v2083, %v2067
  %v2085 = vrot.slane %v2069, 6
  %v2086 = vsel %vm355, %v2085, %v2084
  %v2087 = vrot.slane %v2070, 5
  %v2088 = vsel %vm358, %v2087, %v2086
  %v2089 = vrot.slane %v2071, 4
  %v2090 = vsel %vm361, %v2089, %v2088
  %v2091 = vrot.slane %v2072, 3
  %v2092 = vsel %vm364, %v2091, %v2090
  %v2093 = vrot.slane %v2073, 2
  %v2094 = vsel %vm367, %v2093, %v2092
  %v2095 = vrot.slane %v2074, 1
  %v2096 = vsel %vm370, %v2095, %v2094
  %2097 = vrot.lane.b32.xlu0 %v2096, 96
  %v2098 = vpop.permute.xlu0 %2097
  %v2100 = vadd.f32 %v2034, %v2098
  %v2101 = vtanh.pop %v2100
  %2102 = vrot.lane.b32.xlu0 %v2032, 64
  %v2103 = vpop.permute.xlu0 %2102
  %v2105 = vmul.f32 %v2101, %v2103
  %v2107 = vrot.slane %v2105, 1
  %v2108 = vrot.slane %v2105, 2
  %v2109 = vrot.slane %v2105, 3
  %v2110 = vrot.slane %v2105, 4
  %v2111 = vrot.slane %v2105, 5
  %v2112 = vrot.slane %v2105, 6
  %v2113 = vrot.slane %v2105, 7
  %2121 = vst.msk [vmem:[#allocation5 + $0x5] sm:$0x1] %vm460, %v2105
  %2122 = vst.msk [vmem:[#allocation5 + $0xd] sm:$0x1] %vm460, %v2107
  %2123 = vst.msk [vmem:[#allocation5 + $0x15] sm:$0x1] %vm460, %v2108
  %2124 = vst.msk [vmem:[#allocation5 + $0x1d] sm:$0x1] %vm460, %v2109
  %2125 = vst.msk [vmem:[#allocation5 + $0x25] sm:$0x1] %vm460, %v2110
  %2126 = vst.msk [vmem:[#allocation5 + $0x2d] sm:$0x1] %vm460, %v2111
  %2127 = vst.msk [vmem:[#allocation5 + $0x35] sm:$0x1] %vm460, %v2112
  %2128 = vst.msk [vmem:[#allocation5 + $0x3d] sm:$0x1] %vm460, %v2113
  %v2129 = vld [vmem:[#allocation4 + $0x6] sm:$0x1]
  %v2130 = vld [vmem:[#allocation4 + $0xe] sm:$0x1]
  %v2131 = vld [vmem:[#allocation4 + $0x16] sm:$0x1]
  %v2132 = vld [vmem:[#allocation4 + $0x1e] sm:$0x1]
  %v2133 = vld [vmem:[#allocation4 + $0x26] sm:$0x1]
  %v2134 = vld [vmem:[#allocation4 + $0x2e] sm:$0x1]
  %v2135 = vld [vmem:[#allocation4 + $0x36] sm:$0x1]
  %v2136 = vld [vmem:[#allocation4 + $0x3e] sm:$0x1]
  %v2137 = vsel %vm135, %v2105, 0
  %2139 = vmatpush.msra.mxu0 0.0
  %2140 = vmatpush.msra.mxu0 0.0
  %2141 = vmatpush.msra.mxu0 0.0
  %2142 = vmatpush.msra.mxu0 0.0
  %2143 = vmatpush.msra.mxu0 0.0
  %2144 = vmatpush.msra.mxu0 0.0
  %2145 = vmatpush.msra.mxu0 0.0
  %2146 = vmatpush.msra.mxu0 0.0
  %2147 = vmatpush.msra.mxu0 0.0
  %2148 = vmatpush.msra.mxu0 0.0
  %2149 = vmatpush.msra.mxu0 0.0
  %2150 = vmatpush.msra.mxu0 0.0
  %2151 = vmatpush.msra.mxu0 %v124
  %2152 = vmatpush.msra.mxu0 %v123
  %2153 = vmatpush.msra.mxu0 %v122
  %2154 = vmatpush.msra.mxu0 %v121
  %2155 = vmatmul.f32.gmra.mxu0 %v2137
  %v2156 = vpop.f32.mrf.mxu0
  %v2157 = vadd.f32 0.0, %v2156
  %2158 = vdwg.mxu0
  %v2160 = vrot.slane %v2157, 1
  %v2161 = vrot.slane %v2157, 2
  %v2162 = vrot.slane %v2157, 3
  %v2163 = vrot.slane %v2157, 4
  %v2164 = vrot.slane %v2157, 5
  %v2165 = vrot.slane %v2157, 6
  %v2166 = vrot.slane %v2157, 7
  %v2175 = vadd.f32 %v2129, %v2157
  %v2176 = vadd.f32 %v2130, %v2160
  %v2177 = vadd.f32 %v2131, %v2161
  %v2178 = vadd.f32 %v2132, %v2162
  %v2179 = vadd.f32 %v2133, %v2163
  %v2180 = vadd.f32 %v2134, %v2164
  %v2181 = vadd.f32 %v2135, %v2165
  %v2182 = vadd.f32 %v2136, %v2166
  %v2183 = vxor.u32 %v2175, 2147483648
  %v2184 = vxor.u32 %v2176, 2147483648
  %v2185 = vxor.u32 %v2177, 2147483648
  %v2186 = vxor.u32 %v2178, 2147483648
  %v2187 = vxor.u32 %v2179, 2147483648
  %v2188 = vxor.u32 %v2180, 2147483648
  %v2189 = vxor.u32 %v2181, 2147483648
  %v2190 = vxor.u32 %v2182, 2147483648
  %v2191 = vmul.f32 %v2183, 1.442695
  %v2192 = vpow.pop %v2191
  %v2193 = vmul.f32 %v2184, 1.442695
  %v2194 = vpow.pop %v2193
  %v2195 = vmul.f32 %v2185, 1.442695
  %v2196 = vpow.pop %v2195
  %v2197 = vmul.f32 %v2186, 1.442695
  %v2198 = vpow.pop %v2197
  %v2199 = vmul.f32 %v2187, 1.442695
  %v2200 = vpow.pop %v2199
  %v2201 = vmul.f32 %v2188, 1.442695
  %v2202 = vpow.pop %v2201
  %v2203 = vmul.f32 %v2189, 1.442695
  %v2204 = vpow.pop %v2203
  %v2205 = vmul.f32 %v2190, 1.442695
  %v2206 = vpow.pop %v2205
  %v2207 = vadd.f32 %v2192, 1.0
  %v2208 = vadd.f32 %v2194, 1.0
  %v2209 = vadd.f32 %v2196, 1.0
  %v2210 = vadd.f32 %v2198, 1.0
  %v2211 = vadd.f32 %v2200, 1.0
  %v2212 = vadd.f32 %v2202, 1.0
  %v2213 = vadd.f32 %v2204, 1.0
  %v2214 = vadd.f32 %v2206, 1.0
  %v2215 = vrcp.pop %v2207
  %v2216 = vmul.f32 %v2207, %v2215
  %v2217 = vsub.f32 1.0, %v2216
  %v2218 = vmul.f32 %v2215, %v2217
  %v2219 = vadd.f32 %v2215, %v2218
  %vm2220 = vweird.f32 %v2207
  %vm2221 = vweird.f32 %v2215
  %vm2222 = vmor %vm2220, %vm2221
  %v2223 = vsel %vm2222, %v2215, %v2219
  %v2224 = vand.u32 2147483647, %v2207
  %vm2225 = vcmp.eq.f32.partialorder %v2224, 8.507059e+37
  %v2226 = vand.u32 %v2207, 2147483648
  %v2227 = vor.u32 1.1754944e-38, %v2226
  %v2228 = vsel %vm2225, %v2227, %v2223
  %v2229 = vmul.f32 1.0, %v2228
  %v2230 = vrcp.pop %v2208
  %v2231 = vmul.f32 %v2208, %v2230
  %v2232 = vsub.f32 1.0, %v2231
  %v2233 = vmul.f32 %v2230, %v2232
  %v2234 = vadd.f32 %v2230, %v2233
  %vm2235 = vweird.f32 %v2208
  %vm2236 = vweird.f32 %v2230
  %vm2237 = vmor %vm2235, %vm2236
  %v2238 = vsel %vm2237, %v2230, %v2234
  %v2239 = vand.u32 2147483647, %v2208
  %vm2240 = vcmp.eq.f32.partialorder %v2239, 8.507059e+37
  %v2241 = vand.u32 %v2208, 2147483648
  %v2242 = vor.u32 1.1754944e-38, %v2241
  %v2243 = vsel %vm2240, %v2242, %v2238
  %v2244 = vmul.f32 1.0, %v2243
  %v2245 = vrcp.pop %v2209
  %v2246 = vmul.f32 %v2209, %v2245
  %v2247 = vsub.f32 1.0, %v2246
  %v2248 = vmul.f32 %v2245, %v2247
  %v2249 = vadd.f32 %v2245, %v2248
  %vm2250 = vweird.f32 %v2209
  %vm2251 = vweird.f32 %v2245
  %vm2252 = vmor %vm2250, %vm2251
  %v2253 = vsel %vm2252, %v2245, %v2249
  %v2254 = vand.u32 2147483647, %v2209
  %vm2255 = vcmp.eq.f32.partialorder %v2254, 8.507059e+37
  %v2256 = vand.u32 %v2209, 2147483648
  %v2257 = vor.u32 1.1754944e-38, %v2256
  %v2258 = vsel %vm2255, %v2257, %v2253
  %v2259 = vmul.f32 1.0, %v2258
  %v2260 = vrcp.pop %v2210
  %v2261 = vmul.f32 %v2210, %v2260
  %v2262 = vsub.f32 1.0, %v2261
  %v2263 = vmul.f32 %v2260, %v2262
  %v2264 = vadd.f32 %v2260, %v2263
  %vm2265 = vweird.f32 %v2210
  %vm2266 = vweird.f32 %v2260
  %vm2267 = vmor %vm2265, %vm2266
  %v2268 = vsel %vm2267, %v2260, %v2264
  %v2269 = vand.u32 2147483647, %v2210
  %vm2270 = vcmp.eq.f32.partialorder %v2269, 8.507059e+37
  %v2271 = vand.u32 %v2210, 2147483648
  %v2272 = vor.u32 1.1754944e-38, %v2271
  %v2273 = vsel %vm2270, %v2272, %v2268
  %v2274 = vmul.f32 1.0, %v2273
  %v2275 = vrcp.pop %v2211
  %v2276 = vmul.f32 %v2211, %v2275
  %v2277 = vsub.f32 1.0, %v2276
  %v2278 = vmul.f32 %v2275, %v2277
  %v2279 = vadd.f32 %v2275, %v2278
  %vm2280 = vweird.f32 %v2211
  %vm2281 = vweird.f32 %v2275
  %vm2282 = vmor %vm2280, %vm2281
  %v2283 = vsel %vm2282, %v2275, %v2279
  %v2284 = vand.u32 2147483647, %v2211
  %vm2285 = vcmp.eq.f32.partialorder %v2284, 8.507059e+37
  %v2286 = vand.u32 %v2211, 2147483648
  %v2287 = vor.u32 1.1754944e-38, %v2286
  %v2288 = vsel %vm2285, %v2287, %v2283
  %v2289 = vmul.f32 1.0, %v2288
  %v2290 = vrcp.pop %v2212
  %v2291 = vmul.f32 %v2212, %v2290
  %v2292 = vsub.f32 1.0, %v2291
  %v2293 = vmul.f32 %v2290, %v2292
  %v2294 = vadd.f32 %v2290, %v2293
  %vm2295 = vweird.f32 %v2212
  %vm2296 = vweird.f32 %v2290
  %vm2297 = vmor %vm2295, %vm2296
  %v2298 = vsel %vm2297, %v2290, %v2294
  %v2299 = vand.u32 2147483647, %v2212
  %vm2300 = vcmp.eq.f32.partialorder %v2299, 8.507059e+37
  %v2301 = vand.u32 %v2212, 2147483648
  %v2302 = vor.u32 1.1754944e-38, %v2301
  %v2303 = vsel %vm2300, %v2302, %v2298
  %v2304 = vmul.f32 1.0, %v2303
  %v2305 = vrcp.pop %v2213
  %v2306 = vmul.f32 %v2213, %v2305
  %v2307 = vsub.f32 1.0, %v2306
  %v2308 = vmul.f32 %v2305, %v2307
  %v2309 = vadd.f32 %v2305, %v2308
  %vm2310 = vweird.f32 %v2213
  %vm2311 = vweird.f32 %v2305
  %vm2312 = vmor %vm2310, %vm2311
  %v2313 = vsel %vm2312, %v2305, %v2309
  %v2314 = vand.u32 2147483647, %v2213
  %vm2315 = vcmp.eq.f32.partialorder %v2314, 8.507059e+37
  %v2316 = vand.u32 %v2213, 2147483648
  %v2317 = vor.u32 1.1754944e-38, %v2316
  %v2318 = vsel %vm2315, %v2317, %v2313
  %v2319 = vmul.f32 1.0, %v2318
  %v2320 = vrcp.pop %v2214
  %v2321 = vmul.f32 %v2214, %v2320
  %v2322 = vsub.f32 1.0, %v2321
  %v2323 = vmul.f32 %v2320, %v2322
  %v2324 = vadd.f32 %v2320, %v2323
  %vm2325 = vweird.f32 %v2214
  %vm2326 = vweird.f32 %v2320
  %vm2327 = vmor %vm2325, %vm2326
  %v2328 = vsel %vm2327, %v2320, %v2324
  %v2329 = vand.u32 2147483647, %v2214
  %vm2330 = vcmp.eq.f32.partialorder %v2329, 8.507059e+37
  %v2331 = vand.u32 %v2214, 2147483648
  %v2332 = vor.u32 1.1754944e-38, %v2331
  %v2333 = vsel %vm2330, %v2332, %v2328
  %v2334 = vmul.f32 1.0, %v2333
  %v2335 = vtanh.pop %v2175
  %v2336 = vtanh.pop %v2176
  %v2337 = vtanh.pop %v2177
  %v2338 = vtanh.pop %v2178
  %v2339 = vtanh.pop %v2179
  %v2340 = vtanh.pop %v2180
  %v2341 = vtanh.pop %v2181
  %v2342 = vtanh.pop %v2182
  %v2351 = vrot.slane %v2244, 7
  %v2352 = vsel %vm352, %v2351, %v2229
  %v2353 = vrot.slane %v2259, 6
  %v2354 = vsel %vm355, %v2353, %v2352
  %v2355 = vrot.slane %v2274, 5
  %v2356 = vsel %vm358, %v2355, %v2354
  %v2357 = vrot.slane %v2289, 4
  %v2358 = vsel %vm361, %v2357, %v2356
  %v2359 = vrot.slane %v2304, 3
  %v2360 = vsel %vm364, %v2359, %v2358
  %v2361 = vrot.slane %v2319, 2
  %v2362 = vsel %vm367, %v2361, %v2360
  %v2363 = vrot.slane %v2334, 1
  %v2364 = vsel %vm370, %v2363, %v2362
  %v2366 = vmul.f32 %v2100, %v2364
  %2375 = vrot.lane.b32.xlu0 %v2335, 64
  %v2376 = vpop.permute.xlu0 %2375
  %2377 = vrot.lane.b32.xlu0 %v2336, 64
  %v2378 = vpop.permute.xlu0 %2377
  %2379 = vrot.lane.b32.xlu0 %v2337, 64
  %v2380 = vpop.permute.xlu0 %2379
  %2381 = vrot.lane.b32.xlu0 %v2338, 64
  %v2382 = vpop.permute.xlu0 %2381
  %2383 = vrot.lane.b32.xlu0 %v2339, 64
  %v2384 = vpop.permute.xlu0 %2383
  %2385 = vrot.lane.b32.xlu0 %v2340, 64
  %v2386 = vpop.permute.xlu0 %2385
  %2387 = vrot.lane.b32.xlu0 %v2341, 64
  %v2388 = vpop.permute.xlu0 %2387
  %2389 = vrot.lane.b32.xlu0 %v2342, 64
  %v2390 = vpop.permute.xlu0 %2389
  %v2399 = vmul.f32 %v2229, %v2376
  %v2400 = vmul.f32 %v2244, %v2378
  %v2401 = vmul.f32 %v2259, %v2380
  %v2402 = vmul.f32 %v2274, %v2382
  %v2403 = vmul.f32 %v2289, %v2384
  %v2404 = vmul.f32 %v2304, %v2386
  %v2405 = vmul.f32 %v2319, %v2388
  %v2406 = vmul.f32 %v2334, %v2390
  %v2415 = vrot.slane %v2400, 7
  %v2416 = vsel %vm352, %v2415, %v2399
  %v2417 = vrot.slane %v2401, 6
  %v2418 = vsel %vm355, %v2417, %v2416
  %v2419 = vrot.slane %v2402, 5
  %v2420 = vsel %vm358, %v2419, %v2418
  %v2421 = vrot.slane %v2403, 4
  %v2422 = vsel %vm361, %v2421, %v2420
  %v2423 = vrot.slane %v2404, 3
  %v2424 = vsel %vm364, %v2423, %v2422
  %v2425 = vrot.slane %v2405, 2
  %v2426 = vsel %vm367, %v2425, %v2424
  %v2427 = vrot.slane %v2406, 1
  %v2428 = vsel %vm370, %v2427, %v2426
  %2429 = vrot.lane.b32.xlu0 %v2428, 96
  %v2430 = vpop.permute.xlu0 %2429
  %v2432 = vadd.f32 %v2366, %v2430
  %v2433 = vtanh.pop %v2432
  %2434 = vrot.lane.b32.xlu0 %v2364, 64
  %v2435 = vpop.permute.xlu0 %2434
  %v2437 = vmul.f32 %v2433, %v2435
  %v2439 = vrot.slane %v2437, 1
  %v2440 = vrot.slane %v2437, 2
  %v2441 = vrot.slane %v2437, 3
  %v2442 = vrot.slane %v2437, 4
  %v2443 = vrot.slane %v2437, 5
  %v2444 = vrot.slane %v2437, 6
  %v2445 = vrot.slane %v2437, 7
  %2453 = vst.msk [vmem:[#allocation5 + $0x6] sm:$0x1] %vm460, %v2437
  %2454 = vst.msk [vmem:[#allocation5 + $0xe] sm:$0x1] %vm460, %v2439
  %2455 = vst.msk [vmem:[#allocation5 + $0x16] sm:$0x1] %vm460, %v2440
  %2456 = vst.msk [vmem:[#allocation5 + $0x1e] sm:$0x1] %vm460, %v2441
  %2457 = vst.msk [vmem:[#allocation5 + $0x26] sm:$0x1] %vm460, %v2442
  %2458 = vst.msk [vmem:[#allocation5 + $0x2e] sm:$0x1] %vm460, %v2443
  %2459 = vst.msk [vmem:[#allocation5 + $0x36] sm:$0x1] %vm460, %v2444
  %2460 = vst.msk [vmem:[#allocation5 + $0x3e] sm:$0x1] %vm460, %v2445
  %v2461 = vld [vmem:[#allocation4 + $0x7] sm:$0x1]
  %v2462 = vld [vmem:[#allocation4 + $0xf] sm:$0x1]
  %v2463 = vld [vmem:[#allocation4 + $0x17] sm:$0x1]
  %v2464 = vld [vmem:[#allocation4 + $0x1f] sm:$0x1]
  %v2465 = vld [vmem:[#allocation4 + $0x27] sm:$0x1]
  %v2466 = vld [vmem:[#allocation4 + $0x2f] sm:$0x1]
  %v2467 = vld [vmem:[#allocation4 + $0x37] sm:$0x1]
  %v2468 = vld [vmem:[#allocation4 + $0x3f] sm:$0x1]
  %v2469 = vsel %vm135, %v2437, 0
  %2471 = vmatpush.msra.mxu0 0.0
  %2472 = vmatpush.msra.mxu0 0.0
  %2473 = vmatpush.msra.mxu0 0.0
  %2474 = vmatpush.msra.mxu0 0.0
  %2475 = vmatpush.msra.mxu0 0.0
  %2476 = vmatpush.msra.mxu0 0.0
  %2477 = vmatpush.msra.mxu0 0.0
  %2478 = vmatpush.msra.mxu0 0.0
  %2479 = vmatpush.msra.mxu0 0.0
  %2480 = vmatpush.msra.mxu0 0.0
  %2481 = vmatpush.msra.mxu0 0.0
  %2482 = vmatpush.msra.mxu0 0.0
  %2483 = vmatpush.msra.mxu0 %v124
  %2484 = vmatpush.msra.mxu0 %v123
  %2485 = vmatpush.msra.mxu0 %v122
  %2486 = vmatpush.msra.mxu0 %v121
  %2487 = vmatmul.f32.gmra.mxu0 %v2469
  %v2488 = vpop.f32.mrf.mxu0
  %v2489 = vadd.f32 0.0, %v2488
  %2490 = vdwg.mxu0
  %v2492 = vrot.slane %v2489, 1
  %v2493 = vrot.slane %v2489, 2
  %v2494 = vrot.slane %v2489, 3
  %v2495 = vrot.slane %v2489, 4
  %v2496 = vrot.slane %v2489, 5
  %v2497 = vrot.slane %v2489, 6
  %v2498 = vrot.slane %v2489, 7
  %v2507 = vadd.f32 %v2461, %v2489
  %v2508 = vadd.f32 %v2462, %v2492
  %v2509 = vadd.f32 %v2463, %v2493
  %v2510 = vadd.f32 %v2464, %v2494
  %v2511 = vadd.f32 %v2465, %v2495
  %v2512 = vadd.f32 %v2466, %v2496
  %v2513 = vadd.f32 %v2467, %v2497
  %v2514 = vadd.f32 %v2468, %v2498
  %v2515 = vxor.u32 %v2507, 2147483648
  %v2516 = vxor.u32 %v2508, 2147483648
  %v2517 = vxor.u32 %v2509, 2147483648
  %v2518 = vxor.u32 %v2510, 2147483648
  %v2519 = vxor.u32 %v2511, 2147483648
  %v2520 = vxor.u32 %v2512, 2147483648
  %v2521 = vxor.u32 %v2513, 2147483648
  %v2522 = vxor.u32 %v2514, 2147483648
  %v2523 = vmul.f32 %v2515, 1.442695
  %v2524 = vpow.pop %v2523
  %v2525 = vmul.f32 %v2516, 1.442695
  %v2526 = vpow.pop %v2525
  %v2527 = vmul.f32 %v2517, 1.442695
  %v2528 = vpow.pop %v2527
  %v2529 = vmul.f32 %v2518, 1.442695
  %v2530 = vpow.pop %v2529
  %v2531 = vmul.f32 %v2519, 1.442695
  %v2532 = vpow.pop %v2531
  %v2533 = vmul.f32 %v2520, 1.442695
  %v2534 = vpow.pop %v2533
  %v2535 = vmul.f32 %v2521, 1.442695
  %v2536 = vpow.pop %v2535
  %v2537 = vmul.f32 %v2522, 1.442695
  %v2538 = vpow.pop %v2537
  %v2539 = vadd.f32 %v2524, 1.0
  %v2540 = vadd.f32 %v2526, 1.0
  %v2541 = vadd.f32 %v2528, 1.0
  %v2542 = vadd.f32 %v2530, 1.0
  %v2543 = vadd.f32 %v2532, 1.0
  %v2544 = vadd.f32 %v2534, 1.0
  %v2545 = vadd.f32 %v2536, 1.0
  %v2546 = vadd.f32 %v2538, 1.0
  %v2547 = vrcp.pop %v2539
  %v2548 = vmul.f32 %v2539, %v2547
  %v2549 = vsub.f32 1.0, %v2548
  %v2550 = vmul.f32 %v2547, %v2549
  %v2551 = vadd.f32 %v2547, %v2550
  %vm2552 = vweird.f32 %v2539
  %vm2553 = vweird.f32 %v2547
  %vm2554 = vmor %vm2552, %vm2553
  %v2555 = vsel %vm2554, %v2547, %v2551
  %v2556 = vand.u32 2147483647, %v2539
  %vm2557 = vcmp.eq.f32.partialorder %v2556, 8.507059e+37
  %v2558 = vand.u32 %v2539, 2147483648
  %v2559 = vor.u32 1.1754944e-38, %v2558
  %v2560 = vsel %vm2557, %v2559, %v2555
  %v2561 = vmul.f32 1.0, %v2560
  %v2562 = vrcp.pop %v2540
  %v2563 = vmul.f32 %v2540, %v2562
  %v2564 = vsub.f32 1.0, %v2563
  %v2565 = vmul.f32 %v2562, %v2564
  %v2566 = vadd.f32 %v2562, %v2565
  %vm2567 = vweird.f32 %v2540
  %vm2568 = vweird.f32 %v2562
  %vm2569 = vmor %vm2567, %vm2568
  %v2570 = vsel %vm2569, %v2562, %v2566
  %v2571 = vand.u32 2147483647, %v2540
  %vm2572 = vcmp.eq.f32.partialorder %v2571, 8.507059e+37
  %v2573 = vand.u32 %v2540, 2147483648
  %v2574 = vor.u32 1.1754944e-38, %v2573
  %v2575 = vsel %vm2572, %v2574, %v2570
  %v2576 = vmul.f32 1.0, %v2575
  %v2577 = vrcp.pop %v2541
  %v2578 = vmul.f32 %v2541, %v2577
  %v2579 = vsub.f32 1.0, %v2578
  %v2580 = vmul.f32 %v2577, %v2579
  %v2581 = vadd.f32 %v2577, %v2580
  %vm2582 = vweird.f32 %v2541
  %vm2583 = vweird.f32 %v2577
  %vm2584 = vmor %vm2582, %vm2583
  %v2585 = vsel %vm2584, %v2577, %v2581
  %v2586 = vand.u32 2147483647, %v2541
  %vm2587 = vcmp.eq.f32.partialorder %v2586, 8.507059e+37
  %v2588 = vand.u32 %v2541, 2147483648
  %v2589 = vor.u32 1.1754944e-38, %v2588
  %v2590 = vsel %vm2587, %v2589, %v2585
  %v2591 = vmul.f32 1.0, %v2590
  %v2592 = vrcp.pop %v2542
  %v2593 = vmul.f32 %v2542, %v2592
  %v2594 = vsub.f32 1.0, %v2593
  %v2595 = vmul.f32 %v2592, %v2594
  %v2596 = vadd.f32 %v2592, %v2595
  %vm2597 = vweird.f32 %v2542
  %vm2598 = vweird.f32 %v2592
  %vm2599 = vmor %vm2597, %vm2598
  %v2600 = vsel %vm2599, %v2592, %v2596
  %v2601 = vand.u32 2147483647, %v2542
  %vm2602 = vcmp.eq.f32.partialorder %v2601, 8.507059e+37
  %v2603 = vand.u32 %v2542, 2147483648
  %v2604 = vor.u32 1.1754944e-38, %v2603
  %v2605 = vsel %vm2602, %v2604, %v2600
  %v2606 = vmul.f32 1.0, %v2605
  %v2607 = vrcp.pop %v2543
  %v2608 = vmul.f32 %v2543, %v2607
  %v2609 = vsub.f32 1.0, %v2608
  %v2610 = vmul.f32 %v2607, %v2609
  %v2611 = vadd.f32 %v2607, %v2610
  %vm2612 = vweird.f32 %v2543
  %vm2613 = vweird.f32 %v2607
  %vm2614 = vmor %vm2612, %vm2613
  %v2615 = vsel %vm2614, %v2607, %v2611
  %v2616 = vand.u32 2147483647, %v2543
  %vm2617 = vcmp.eq.f32.partialorder %v2616, 8.507059e+37
  %v2618 = vand.u32 %v2543, 2147483648
  %v2619 = vor.u32 1.1754944e-38, %v2618
  %v2620 = vsel %vm2617, %v2619, %v2615
  %v2621 = vmul.f32 1.0, %v2620
  %v2622 = vrcp.pop %v2544
  %v2623 = vmul.f32 %v2544, %v2622
  %v2624 = vsub.f32 1.0, %v2623
  %v2625 = vmul.f32 %v2622, %v2624
  %v2626 = vadd.f32 %v2622, %v2625
  %vm2627 = vweird.f32 %v2544
  %vm2628 = vweird.f32 %v2622
  %vm2629 = vmor %vm2627, %vm2628
  %v2630 = vsel %vm2629, %v2622, %v2626
  %v2631 = vand.u32 2147483647, %v2544
  %vm2632 = vcmp.eq.f32.partialorder %v2631, 8.507059e+37
  %v2633 = vand.u32 %v2544, 2147483648
  %v2634 = vor.u32 1.1754944e-38, %v2633
  %v2635 = vsel %vm2632, %v2634, %v2630
  %v2636 = vmul.f32 1.0, %v2635
  %v2637 = vrcp.pop %v2545
  %v2638 = vmul.f32 %v2545, %v2637
  %v2639 = vsub.f32 1.0, %v2638
  %v2640 = vmul.f32 %v2637, %v2639
  %v2641 = vadd.f32 %v2637, %v2640
  %vm2642 = vweird.f32 %v2545
  %vm2643 = vweird.f32 %v2637
  %vm2644 = vmor %vm2642, %vm2643
  %v2645 = vsel %vm2644, %v2637, %v2641
  %v2646 = vand.u32 2147483647, %v2545
  %vm2647 = vcmp.eq.f32.partialorder %v2646, 8.507059e+37
  %v2648 = vand.u32 %v2545, 2147483648
  %v2649 = vor.u32 1.1754944e-38, %v2648
  %v2650 = vsel %vm2647, %v2649, %v2645
  %v2651 = vmul.f32 1.0, %v2650
  %v2652 = vrcp.pop %v2546
  %v2653 = vmul.f32 %v2546, %v2652
  %v2654 = vsub.f32 1.0, %v2653
  %v2655 = vmul.f32 %v2652, %v2654
  %v2656 = vadd.f32 %v2652, %v2655
  %vm2657 = vweird.f32 %v2546
  %vm2658 = vweird.f32 %v2652
  %vm2659 = vmor %vm2657, %vm2658
  %v2660 = vsel %vm2659, %v2652, %v2656
  %v2661 = vand.u32 2147483647, %v2546
  %vm2662 = vcmp.eq.f32.partialorder %v2661, 8.507059e+37
  %v2663 = vand.u32 %v2546, 2147483648
  %v2664 = vor.u32 1.1754944e-38, %v2663
  %v2665 = vsel %vm2662, %v2664, %v2660
  %v2666 = vmul.f32 1.0, %v2665
  %v2667 = vtanh.pop %v2507
  %v2668 = vtanh.pop %v2508
  %v2669 = vtanh.pop %v2509
  %v2670 = vtanh.pop %v2510
  %v2671 = vtanh.pop %v2511
  %v2672 = vtanh.pop %v2512
  %v2673 = vtanh.pop %v2513
  %v2674 = vtanh.pop %v2514
  %v2683 = vrot.slane %v2576, 7
  %v2684 = vsel %vm352, %v2683, %v2561
  %v2685 = vrot.slane %v2591, 6
  %v2686 = vsel %vm355, %v2685, %v2684
  %v2687 = vrot.slane %v2606, 5
  %v2688 = vsel %vm358, %v2687, %v2686
  %v2689 = vrot.slane %v2621, 4
  %v2690 = vsel %vm361, %v2689, %v2688
  %v2691 = vrot.slane %v2636, 3
  %v2692 = vsel %vm364, %v2691, %v2690
  %v2693 = vrot.slane %v2651, 2
  %v2694 = vsel %vm367, %v2693, %v2692
  %v2695 = vrot.slane %v2666, 1
  %v2696 = vsel %vm370, %v2695, %v2694
  %v2698 = vmul.f32 %v2432, %v2696
  %2707 = vrot.lane.b32.xlu0 %v2667, 64
  %v2708 = vpop.permute.xlu0 %2707
  %2709 = vrot.lane.b32.xlu0 %v2668, 64
  %v2710 = vpop.permute.xlu0 %2709
  %2711 = vrot.lane.b32.xlu0 %v2669, 64
  %v2712 = vpop.permute.xlu0 %2711
  %2713 = vrot.lane.b32.xlu0 %v2670, 64
  %v2714 = vpop.permute.xlu0 %2713
  %2715 = vrot.lane.b32.xlu0 %v2671, 64
  %v2716 = vpop.permute.xlu0 %2715
  %2717 = vrot.lane.b32.xlu0 %v2672, 64
  %v2718 = vpop.permute.xlu0 %2717
  %2719 = vrot.lane.b32.xlu0 %v2673, 64
  %v2720 = vpop.permute.xlu0 %2719
  %2721 = vrot.lane.b32.xlu0 %v2674, 64
  %v2722 = vpop.permute.xlu0 %2721
  %v2731 = vmul.f32 %v2561, %v2708
  %v2732 = vmul.f32 %v2576, %v2710
  %v2733 = vmul.f32 %v2591, %v2712
  %v2734 = vmul.f32 %v2606, %v2714
  %v2735 = vmul.f32 %v2621, %v2716
  %v2736 = vmul.f32 %v2636, %v2718
  %v2737 = vmul.f32 %v2651, %v2720
  %v2738 = vmul.f32 %v2666, %v2722
  %v2747 = vrot.slane %v2732, 7
  %v2748 = vsel %vm352, %v2747, %v2731
  %v2749 = vrot.slane %v2733, 6
  %v2750 = vsel %vm355, %v2749, %v2748
  %v2751 = vrot.slane %v2734, 5
  %v2752 = vsel %vm358, %v2751, %v2750
  %v2753 = vrot.slane %v2735, 4
  %v2754 = vsel %vm361, %v2753, %v2752
  %v2755 = vrot.slane %v2736, 3
  %v2756 = vsel %vm364, %v2755, %v2754
  %v2757 = vrot.slane %v2737, 2
  %v2758 = vsel %vm367, %v2757, %v2756
  %v2759 = vrot.slane %v2738, 1
  %v2760 = vsel %vm370, %v2759, %v2758
  %2761 = vrot.lane.b32.xlu0 %v2760, 96
  %v2762 = vpop.permute.xlu0 %2761
  %v2764 = vadd.f32 %v2698, %v2762
  %v2765 = vtanh.pop %v2764
  %2766 = vrot.lane.b32.xlu0 %v2696, 64
  %v2767 = vpop.permute.xlu0 %2766
  %v2769 = vmul.f32 %v2765, %v2767
  %v2771 = vrot.slane %v2769, 1
  %v2772 = vrot.slane %v2769, 2
  %v2773 = vrot.slane %v2769, 3
  %v2774 = vrot.slane %v2769, 4
  %v2775 = vrot.slane %v2769, 5
  %v2776 = vrot.slane %v2769, 6
  %v2777 = vrot.slane %v2769, 7
  %2785 = vst.msk [vmem:[#allocation5 + $0x7] sm:$0x1] %vm460, %v2769
  %2786 = vst.msk [vmem:[#allocation5 + $0xf] sm:$0x1] %vm460, %v2771
  %2787 = vst.msk [vmem:[#allocation5 + $0x17] sm:$0x1] %vm460, %v2772
  %2788 = vst.msk [vmem:[#allocation5 + $0x1f] sm:$0x1] %vm460, %v2773
  %2789 = vst.msk [vmem:[#allocation5 + $0x27] sm:$0x1] %vm460, %v2774
  %2790 = vst.msk [vmem:[#allocation5 + $0x2f] sm:$0x1] %vm460, %v2775
  %2791 = vst.msk [vmem:[#allocation5 + $0x37] sm:$0x1] %vm460, %v2776
  %2792 = vst.msk [vmem:[#allocation5 + $0x3f] sm:$0x1] %vm460, %v2777
  %2793 = vst.msk [vmem:[#allocation2] sm:$0xff] %vm135, %v2769
  %2794 = vst.msk [vmem:[#allocation3] sm:$0xff] %vm135, %v2764
  %v2795 = vld [vmem:[%s0] sm:$0xff]
  %v2796 = vld [vmem:[%s0 + $0x8] sm:$0xff]
  %v2797 = vld [vmem:[%s0 + $0x10] sm:$0xff]
  %v2798 = vld [vmem:[%s0 + $0x18] sm:$0xff]
  %v2799 = vld [vmem:[%s0 + $0x20] sm:$0xff]
  %v2800 = vld [vmem:[%s0 + $0x28] sm:$0xff]
  %v2801 = vld [vmem:[%s0 + $0x30] sm:$0xff]
  %v2802 = vld [vmem:[%s0 + $0x38] sm:$0xff]
  %v2803 = vld [vmem:[#allocation5] sm:$0xff]
  %v2804 = vld [vmem:[#allocation5 + $0x8] sm:$0xff]
  %v2805 = vld [vmem:[#allocation5 + $0x10] sm:$0xff]
  %v2806 = vld [vmem:[#allocation5 + $0x18] sm:$0xff]
  %v2807 = vld [vmem:[#allocation5 + $0x20] sm:$0xff]
  %v2808 = vld [vmem:[#allocation5 + $0x28] sm:$0xff]
  %v2809 = vld [vmem:[#allocation5 + $0x30] sm:$0xff]
  %v2810 = vld [vmem:[#allocation5 + $0x38] sm:$0xff]
  %v2811 = vld [vmem:[%s4] sm:$0xff]
  %v2812 = vld [vmem:[%s4 + $0x8] sm:$0xff]
  %v2813 = vld [vmem:[%s5] sm:$0xff]
  %v2814 = vld [vmem:[%s5 + $0x8] sm:$0xff]
  %v2815 = vld [vmem:[%s5 + $0x10] sm:$0xff]
  %v2816 = vld [vmem:[%s5 + $0x18] sm:$0xff]
  %v2818 = vsel %vm135, %v2803, 0
  %v2821 = vsel %vm135, %v2804, 0
  %v2824 = vsel %vm135, %v2805, 0
  %v2827 = vsel %vm135, %v2806, 0
  %v2830 = vsel %vm135, %v2807, 0
  %v2833 = vsel %vm135, %v2808, 0
  %v2836 = vsel %vm135, %v2809, 0
  %v2839 = vsel %vm135, %v2810, 0
  %2841 = vmatpush.msra.mxu0 0.0
  %2842 = vmatpush.msra.mxu0 0.0
  %2843 = vmatpush.msra.mxu0 0.0
  %2844 = vmatpush.msra.mxu0 0.0
  %2845 = vmatpush.msra.mxu0 0.0
  %2846 = vmatpush.msra.mxu0 0.0
  %2847 = vmatpush.msra.mxu0 0.0
  %2848 = vmatpush.msra.mxu0 0.0
  %2849 = vmatpush.msra.mxu0 0.0
  %2850 = vmatpush.msra.mxu0 0.0
  %2851 = vmatpush.msra.mxu0 0.0
  %2852 = vmatpush.msra.mxu0 0.0
  %2853 = vmatpush.msra.mxu0 %v2816
  %2854 = vmatpush.msra.mxu0 %v2815
  %2855 = vmatpush.msra.mxu0 %v2814
  %2856 = vmatpush.msra.mxu0 %v2813
  %2857 = vmatmul.f32.gmra.mxu0 %v2818
  %v2858 = vpop.f32.mrf.mxu0
  %v2859 = vadd.f32 0.0, %v2858
  %2860 = vmatmul.f32.gmra.mxu0 %v2821
  %v2861 = vpop.f32.mrf.mxu0
  %v2862 = vadd.f32 0.0, %v2861
  %2863 = vmatmul.f32.gmra.mxu0 %v2824
  %v2864 = vpop.f32.mrf.mxu0
  %v2865 = vadd.f32 0.0, %v2864
  %2866 = vmatmul.f32.gmra.mxu0 %v2827
  %v2867 = vpop.f32.mrf.mxu0
  %v2868 = vadd.f32 0.0, %v2867
  %2869 = vmatmul.f32.gmra.mxu0 %v2830
  %v2870 = vpop.f32.mrf.mxu0
  %v2871 = vadd.f32 0.0, %v2870
  %2872 = vmatmul.f32.gmra.mxu0 %v2833
  %v2873 = vpop.f32.mrf.mxu0
  %v2874 = vadd.f32 0.0, %v2873
  %2875 = vmatmul.f32.gmra.mxu0 %v2836
  %v2876 = vpop.f32.mrf.mxu0
  %v2877 = vadd.f32 0.0, %v2876
  %2878 = vmatmul.f32.gmra.mxu0 %v2839
  %v2879 = vpop.f32.mrf.mxu0
  %v2880 = vadd.f32 0.0, %v2879
  %2881 = vdwg.mxu0
  %v2883 = vsel %vm47, %v2795, 0
  %v2886 = vsel %vm47, %v2796, 0
  %v2889 = vsel %vm47, %v2797, 0
  %v2892 = vsel %vm47, %v2798, 0
  %v2895 = vsel %vm47, %v2799, 0
  %v2898 = vsel %vm47, %v2800, 0
  %v2901 = vsel %vm47, %v2801, 0
  %v2904 = vsel %vm47, %v2802, 0
  %2906 = vmatpush.msra.mxu0 0.0
  %2907 = vmatpush.msra.mxu0 0.0
  %2908 = vmatpush.msra.mxu0 0.0
  %2909 = vmatpush.msra.mxu0 0.0
  %2910 = vmatpush.msra.mxu0 0.0
  %2911 = vmatpush.msra.mxu0 0.0
  %2912 = vmatpush.msra.mxu0 0.0
  %2913 = vmatpush.msra.mxu0 0.0
  %2914 = vmatpush.msra.mxu0 0.0
  %2915 = vmatpush.msra.mxu0 0.0
  %2916 = vmatpush.msra.mxu0 0.0
  %2917 = vmatpush.msra.mxu0 0.0
  %2918 = vmatpush.msra.mxu0 0.0
  %2919 = vmatpush.msra.mxu0 0.0
  %2920 = vmatpush.msra.mxu0 %v2812
  %2921 = vmatpush.msra.mxu0 %v2811
  %2922 = vmatmul.f32.gmra.mxu0 %v2883
  %v2923 = vpop.f32.mrf.mxu0
  %v2924 = vadd.f32 %v2859, %v2923
  %2925 = vmatmul.f32.gmra.mxu0 %v2886
  %v2926 = vpop.f32.mrf.mxu0
  %v2927 = vadd.f32 %v2862, %v2926
  %2928 = vmatmul.f32.gmra.mxu0 %v2889
  %v2929 = vpop.f32.mrf.mxu0
  %v2930 = vadd.f32 %v2865, %v2929
  %2931 = vmatmul.f32.gmra.mxu0 %v2892
  %v2932 = vpop.f32.mrf.mxu0
  %v2933 = vadd.f32 %v2868, %v2932
  %2934 = vmatmul.f32.gmra.mxu0 %v2895
  %v2935 = vpop.f32.mrf.mxu0
  %v2936 = vadd.f32 %v2871, %v2935
  %2937 = vmatmul.f32.gmra.mxu0 %v2898
  %v2938 = vpop.f32.mrf.mxu0
  %v2939 = vadd.f32 %v2874, %v2938
  %2940 = vmatmul.f32.gmra.mxu0 %v2901
  %v2941 = vpop.f32.mrf.mxu0
  %v2942 = vadd.f32 %v2877, %v2941
  %2943 = vmatmul.f32.gmra.mxu0 %v2904
  %v2944 = vpop.f32.mrf.mxu0
  %v2945 = vadd.f32 %v2880, %v2944
  %2946 = vdwg.mxu0
  %v2947 = vld [vmem:[%s6] sm:$0x1]
  %v2949 = vperm.slane %v2947, 0
  %v2951 = vadd.f32 %v2924, %v2949
  %v2952 = vadd.f32 %v2927, %v2949
  %v2953 = vadd.f32 %v2930, %v2949
  %v2954 = vadd.f32 %v2933, %v2949
  %v2955 = vadd.f32 %v2936, %v2949
  %v2956 = vadd.f32 %v2939, %v2949
  %v2957 = vadd.f32 %v2942, %v2949
  %v2958 = vadd.f32 %v2945, %v2949
  %2959 = vmax.xlane.f32.xlu0 %v2951
  %v2960 = vpop.xlane.xlu0 %2959
  %2961 = vmax.xlane.f32.xlu0 %v2952
  %v2962 = vpop.xlane.xlu0 %2961
  %2963 = vmax.xlane.f32.xlu0 %v2953
  %v2964 = vpop.xlane.xlu0 %2963
  %2965 = vmax.xlane.f32.xlu0 %v2954
  %v2966 = vpop.xlane.xlu0 %2965
  %2967 = vmax.xlane.f32.xlu0 %v2955
  %v2968 = vpop.xlane.xlu0 %2967
  %2969 = vmax.xlane.f32.xlu0 %v2956
  %v2970 = vpop.xlane.xlu0 %2969
  %2971 = vmax.xlane.f32.xlu0 %v2957
  %v2972 = vpop.xlane.xlu0 %2971
  %2973 = vmax.xlane.f32.xlu0 %v2958
  %v2974 = vpop.xlane.xlu0 %2973
  %v2975 = vsub.f32 %v2951, %v2960
  %v2976 = vsub.f32 %v2952, %v2962
  %v2977 = vsub.f32 %v2953, %v2964
  %v2978 = vsub.f32 %v2954, %v2966
  %v2979 = vsub.f32 %v2955, %v2968
  %v2980 = vsub.f32 %v2956, %v2970
  %v2981 = vsub.f32 %v2957, %v2972
  %v2982 = vsub.f32 %v2958, %v2974
  %v2983 = vmul.f32 %v2975, 1.442695
  %v2984 = vpow.pop %v2983
  %v2985 = vmul.f32 %v2976, 1.442695
  %v2986 = vpow.pop %v2985
  %v2987 = vmul.f32 %v2977, 1.442695
  %v2988 = vpow.pop %v2987
  %v2989 = vmul.f32 %v2978, 1.442695
  %v2990 = vpow.pop %v2989
  %v2991 = vmul.f32 %v2979, 1.442695
  %v2992 = vpow.pop %v2991
  %v2993 = vmul.f32 %v2980, 1.442695
  %v2994 = vpow.pop %v2993
  %v2995 = vmul.f32 %v2981, 1.442695
  %v2996 = vpow.pop %v2995
  %v2997 = vmul.f32 %v2982, 1.442695
  %v2998 = vpow.pop %v2997
  %2999 = vadd.xlane.f32.xlu0 %v2984
  %v3000 = vpop.xlane.xlu0 %2999
  %3001 = vadd.xlane.f32.xlu0 %v2986
  %v3002 = vpop.xlane.xlu0 %3001
  %3003 = vadd.xlane.f32.xlu0 %v2988
  %v3004 = vpop.xlane.xlu0 %3003
  %3005 = vadd.xlane.f32.xlu0 %v2990
  %v3006 = vpop.xlane.xlu0 %3005
  %3007 = vadd.xlane.f32.xlu0 %v2992
  %v3008 = vpop.xlane.xlu0 %3007
  %3009 = vadd.xlane.f32.xlu0 %v2994
  %v3010 = vpop.xlane.xlu0 %3009
  %3011 = vadd.xlane.f32.xlu0 %v2996
  %v3012 = vpop.xlane.xlu0 %3011
  %3013 = vadd.xlane.f32.xlu0 %v2998
  %v3014 = vpop.xlane.xlu0 %3013
  %v3015 = vlog2.pop %v3000
  %v3016 = vmul.f32 %v3015, 0.6931472
  %v3017 = vlog2.pop %v3002
  %v3018 = vmul.f32 %v3017, 0.6931472
  %v3019 = vlog2.pop %v3004
  %v3020 = vmul.f32 %v3019, 0.6931472
  %v3021 = vlog2.pop %v3006
  %v3022 = vmul.f32 %v3021, 0.6931472
  %v3023 = vlog2.pop %v3008
  %v3024 = vmul.f32 %v3023, 0.6931472
  %v3025 = vlog2.pop %v3010
  %v3026 = vmul.f32 %v3025, 0.6931472
  %v3027 = vlog2.pop %v3012
  %v3028 = vmul.f32 %v3027, 0.6931472
  %v3029 = vlog2.pop %v3014
  %v3030 = vmul.f32 %v3029, 0.6931472
  %v3031 = vsub.f32 %v2975, %v3016
  %v3032 = vsub.f32 %v2976, %v3018
  %v3033 = vsub.f32 %v2977, %v3020
  %v3034 = vsub.f32 %v2978, %v3022
  %v3035 = vsub.f32 %v2979, %v3024
  %v3036 = vsub.f32 %v2980, %v3026
  %v3037 = vsub.f32 %v2981, %v3028
  %v3038 = vsub.f32 %v2982, %v3030
  %3039 = vst [vmem:[%s7] sm:$0xff] %v3031
  %3040 = vst [vmem:[%s7 + $0x8] sm:$0xff] %v3032
  %3041 = vst [vmem:[%s7 + $0x10] sm:$0xff] %v3033
  %3042 = vst [vmem:[%s7 + $0x18] sm:$0xff] %v3034
  %3043 = vst [vmem:[%s7 + $0x20] sm:$0xff] %v3035
  %3044 = vst [vmem:[%s7 + $0x28] sm:$0xff] %v3036
  %3045 = vst [vmem:[%s7 + $0x30] sm:$0xff] %v3037
  %3046 = vst [vmem:[%s7 + $0x38] sm:$0xff] %v3038
  // Predicated region
  $region34: #{lstm_forward.1} parent=0 // pred_check
    _
  $region35: #{lstm_forward.1} parent=0 // pred_check_branch
    %3048 = sbr.rel (0) target = $region37
  $region36: #{lstm_forward.1} parent=0 // pred_region
    _
  $region37: #{lstm_forward.1} parent=0 // pred_fallthru
    _
  // Predicated region
  $region38: #{lstm_forward.1} parent=0 // pred_check
    _
  $region39: #{lstm_forward.1} parent=0 // pred_check_branch
    %3050 = sbr.rel (0) target = $region41
  $region40: #{lstm_forward.1} parent=0 // pred_region
    _
  $region41: #{lstm_forward.1} parent=0 // pred_fallthru
    _

</llo_original>
